<compile_context>
chip_gen: v7x
topology: tpu7x:2x2x1
jax: 0.10.0
libtpu: 0.0.40
codegen_flags: <defaults>
</compile_context>

<pallas_src>
import functools

import numpy as np

import jax
import jax.numpy as jnp
from jax.experimental import pallas as pl
from jax.experimental.pallas import tpu as pltpu


# ---------------------------------------------------------------------------
# constant selection matrices for conv2's in-register im2col
# ---------------------------------------------------------------------------

def _make_sel2():
    """sel[t, oy2*4+ox2, oy*8+ox] = 1 where conv2 tap t=(ky,kx) reads a1[oy,ox]."""
    sel = np.zeros((9, 16, 64), np.float32)
    for ky in range(3):
        for kx in range(3):
            t = ky * 3 + kx
            for oy2 in range(4):
                for ox2 in range(4):
                    iy = 2 * oy2 + ky - 1
                    ix = 2 * ox2 + kx - 1
                    if 0 <= iy < 8 and 0 <= ix < 8:
                        sel[t, oy2 * 4 + ox2, iy * 8 + ix] = 1.0
    return sel


_SEL2 = _make_sel2()


def _make_w1p(w1):
    """PyTorch conv1 weight (64,128,3,3) -> 2x2-window weights (2,2,512,64)
    matching the space-to-depth (2x2 spatial block -> channel) input layout."""
    co, ci = w1.shape[0], w1.shape[1]
    rows = []
    for ty in range(2):
        cols = []
        for tx in range(2):
            blocks = []
            for i in range(2):
                for j in range(2):
                    ky = 2 * ty + i - 1
                    kx = 2 * tx + j - 1
                    if 0 <= ky <= 2 and 0 <= kx <= 2:
                        blocks.append(jnp.transpose(w1[:, :, ky, kx]))   # (ci, co)
                    else:
                        blocks.append(jnp.zeros((ci, co), w1.dtype))
            cols.append(jnp.concatenate(blocks, axis=0))                 # (4*ci, co)
        rows.append(jnp.stack(cols))
    return jnp.stack(rows)                                               # (2,2,4ci,co)


# ---------------------------------------------------------------------------
# fused Pallas kernel: one image (of the B*S) per grid step
# ---------------------------------------------------------------------------

def _fused_kernel(x_ref, w1p_ref, sel2_ref, w2k_ref, w3t_ref,
                  b1_ref, b2_ref, b3_ref, l_ref, o_ref, *, map_size):
    f32 = jnp.float32

    # ---- conv1: 3x3 stride-2 pad-1  ==  4 unit-stride window taps (K = 512)
    # over the space-to-depth input held in VMEM.
    acc1 = jnp.zeros((64, 64), f32)
    for ty in range(2):
        for tx in range(2):
            patch = x_ref[0, ty:ty + 8, tx:tx + 8, :]            # (8, 8, 512)
            acc1 = acc1 + jnp.dot(patch.reshape(64, 512), w1p_ref[ty, tx],
                                  preferred_element_type=f32)
    a1 = jnp.maximum(acc1 + b1_ref[...], 0.0)                    # (64 px, 64 ch)

    # ---- conv2: 3x3 stride-2 pad-1 via per-tap selection matmuls
    # (im2col stays in registers/VMEM; nothing goes back to HBM).
    acc2 = jnp.zeros((16, 32), f32)
    for t in range(9):
        gathered = jnp.dot(sel2_ref[t], a1, preferred_element_type=f32)   # (16, 64)
        acc2 = acc2 + jnp.dot(gathered, w2k_ref[t], preferred_element_type=f32)
    a2 = jnp.maximum(acc2 + b2_ref[...], 0.0)                    # (16 px, 32 ch)

    # ---- conv3 (1x1), computed transposed: (16 ch, 16 px) so the torch
    # (C, H, W) flatten order is the natural row-major order of the output.
    a3t = jax.lax.dot_general(w3t_ref[...], a2,
                              (((1,), (1,)), ((), ())),
                              preferred_element_type=f32)        # (16 ch, 16 px)
    a3t = jnp.maximum(a3t + b3_ref[...], 0.0)

    # ---- normalized box-indicator probability map for this image's location
    lv = l_ref[0]                                                # (1, 4): x,y,w,h
    fm = jnp.float32(map_size)
    bx = lv[:, 0:1] * fm
    by = lv[:, 1:2] * fm
    bw = lv[:, 2:3] * fm
    bh = lv[:, 3:4] * fm
    row = jax.lax.broadcasted_iota(jnp.int32, (map_size, map_size), 0).astype(f32)
    col = jax.lax.broadcasted_iota(jnp.int32, (map_size, map_size), 1).astype(f32)
    inside = (col >= bx) & (col < bx + bw) & (row >= by) & (row < by + bh)
    m = inside.astype(f32)
    cnt = jnp.sum(jnp.sum(m, axis=1, keepdims=True), axis=0, keepdims=True)
    lm = m * pl.reciprocal(jnp.maximum(cnt, 1.0), approx=True)   # (16, 16)

    # ---- fused writeback: rows [0:16) = features (torch CHW order),
    #                       rows [16:32) = loc map.  Final reshape is free.
    o_ref[0, 0:16, :] = a3t
    o_ref[0, 16:32, :] = lm


# ---------------------------------------------------------------------------
# forward wrapper
# ---------------------------------------------------------------------------

def yimgnet_pm_forward(params, x, l, *, loc_map_size):
    b, s, c, h, w = x.shape
    assert c == 128, "conv1 expects 128 input channels"
    assert h == 16 and w == 16 and loc_map_size == 16, (
        "fused output layout assumes 16x16 inputs and LocMapSize == 16")
    n = b * s

    # NCHW -> NHWC, then space-to-depth (2x2 spatial -> channels) + top/left
    # zero pad: stride-2 3x3 conv becomes a unit-stride 2x2 window in-kernel.
    xi = jnp.transpose(x.reshape(n, c, h, w), (0, 2, 3, 1))
    xs = xi.reshape(n, h // 2, 2, w // 2, 2, c)
    xs = jnp.transpose(xs, (0, 1, 3, 2, 4, 5)).reshape(n, h // 2, w // 2, 4 * c)
    xs = jnp.pad(xs, ((0, 0), (1, 0), (1, 0), (0, 0)))           # (n, 9, 9, 512)

    w1p = _make_w1p(params["w1"])                                # (2, 2, 512, 64)
    w2k = jnp.transpose(params["w2"], (2, 3, 1, 0)).reshape(9, 64, 32)
    w3t = params["w3"].reshape(16, 32)
    sel2 = jnp.asarray(_SEL2)                                    # (9, 16, 64)
    lr = l.reshape(n, 1, 4).astype(jnp.float32)

    out = pl.pallas_call(
        functools.partial(_fused_kernel, map_size=loc_map_size),
        out_shape=jax.ShapeDtypeStruct((n, 32, 16), jnp.float32),
        grid_spec=pltpu.PrefetchScalarGridSpec(
            num_scalar_prefetch=0,
            grid=(n,),
            in_specs=[
                pl.BlockSpec((1, 9, 9, 4 * c), lambda i: (i, 0, 0, 0)),
                pl.BlockSpec((2, 2, 4 * c, 64), lambda i: (0, 0, 0, 0)),
                pl.BlockSpec((9, 16, 64), lambda i: (0, 0, 0)),
                pl.BlockSpec((9, 64, 32), lambda i: (0, 0, 0)),
                pl.BlockSpec((16, 32), lambda i: (0, 0)),
                pl.BlockSpec((1, 64), lambda i: (0, 0)),
                pl.BlockSpec((1, 32), lambda i: (0, 0)),
                pl.BlockSpec((16, 1), lambda i: (0, 0)),
                pl.BlockSpec((1, 1, 4), lambda i: (i, 0, 0)),
            ],
            out_specs=pl.BlockSpec((1, 32, 16), lambda i: (i, 0, 0)),
        ),
        compiler_params=pltpu.CompilerParams(
            dimension_semantics=("parallel",)),
    )(xs, w1p, sel2, w2k, w3t,
      params["b1"].reshape(1, 64), params["b2"].reshape(1, 32),
      params["b3"].reshape(16, 1), lr)

    # rows 0..15 = 16 conv3 channels x 16 pixels (torch (C,H,W) order),
    # rows 16..31 = 16x16 loc map  ->  free reshape to the concatenated vector.
    return out.reshape(b, s, 32 * 16)


# ---------------------------------------------------------------------------
# pure-JAX reference (for numerical validation of the Pallas kernel)
# ---------------------------------------------------------------------------

def _reference_forward(params, x, l, loc_map_size):
    b, s, c, h, w = x.shape
    n = b * s
    xi = x.reshape(n, c, h, w)

    def conv(inp, w_, b_, stride, pad):
        out = jax.lax.conv_general_dilated(
            inp, w_, window_strides=(stride, stride),
            padding=[(pad, pad), (pad, pad)],
            dimension_numbers=("NCHW", "OIHW", "NCHW"))
        return jax.nn.relu(out + b_[None, :, None, None])

    a1 = conv(xi, params["w1"], params["b1"], 2, 1)
    a2 = conv(a1, params["w2"], params["b2"], 2, 1)
    a3 = conv(a2, params["w3"], params["b3"], 1, 0)
    feat = a3.reshape(b, s, -1)

    # TODO(synk): coord_utils.locations_to_probability_maps is external to the
    # module; reproduced as a normalized box-indicator map (same stand-in as
    # the kernel) for (x, y, w, h) boxes in [0, 1] coordinates.
    locs = l.reshape(n, 4).astype(jnp.float32)
    ms = loc_map_size
    row = jnp.arange(ms, dtype=jnp.float32)[None, :, None]
    col = jnp.arange(ms, dtype=jnp.float32)[None, None, :]
    bx = locs[:, 0, None, None] * ms
    by = locs[:, 1, None, None] * ms
    bw = locs[:, 2, None, None] * ms
    bh = locs[:, 3, None, None] * ms
    inside = (col >= bx) & (col < bx + bw) & (row >= by) & (row < by + bh)
    m = inside.astype(jnp.float32)
    cnt = jnp.maximum(jnp.sum(m, axis=(1, 2), keepdims=True), 1.0)
    lm = (m / cnt).reshape(b, s, ms * ms)

    return jnp.concatenate([feat, lm], axis=2)


def init_params(key):
    k1, k2, k3 = jax.random.split(key, 3)
    return {
        "w1": 0.05 * jax.random.normal(k1, (64, 128, 3, 3), jnp.float32),
        "b1": jnp.linspace(-0.1, 0.1, 64, dtype=jnp.float32),
        "w2": 0.05 * jax.random.normal(k2, (32, 64, 3, 3), jnp.float32),
        "b2": jnp.linspace(-0.1, 0.1, 32, dtype=jnp.float32),
        "w3": 0.05 * jax.random.normal(k3, (16, 32, 1, 1), jnp.float32),
        "b3": jnp.linspace(-0.1, 0.1, 16, dtype=jnp.float32),
    }


if __name__ == "__main__":
    LOC_MAP_SIZE = 16
    B, S, C, H, W = 2, 4, 128, 16, 16          # C fixed at 128 by conv1

    key = jax.random.PRNGKey(0)
    kx, kl, kw, kp = jax.random.split(key, 4)
    x = jax.random.normal(kx, (B, S, C, H, W), jnp.float32)
    # boxes (x, y, w, h) in normalized [0, 1] coordinates
    xy = jax.random.uniform(kl, (B, S, 2), minval=0.0, maxval=0.6)
    wh = jax.random.uniform(kw, (B, S, 2), minval=0.1, maxval=0.4)
    l = jnp.concatenate([xy, wh], axis=-1)

    params = init_params(kp)

    fwd = jax.jit(functools.partial(yimgnet_pm_forward,
                                    loc_map_size=LOC_MAP_SIZE))
    out = jax.block_until_ready(fwd(params, x, l))

    expected_feat = 16 * (H // 4) * (W // 4)
    assert out.shape == (B, S, expected_feat + LOC_MAP_SIZE * LOC_MAP_SIZE), out.shape
    assert bool(jnp.all(jnp.isfinite(out)))

    ref = jax.block_until_ready(
        jax.jit(functools.partial(_reference_forward,
                                  loc_map_size=LOC_MAP_SIZE))(params, x, l))
    max_err = float(jnp.max(jnp.abs(out - ref)))
    assert bool(jnp.allclose(out, ref, atol=1e-2, rtol=1e-2)), max_err

    print("KERNEL_OK")
</pallas_src>

<mosaic_0001>
module attributes {stable_mosaic.version = 11 : i64} {
  func.func @_fused_kernel(%arg0: i32, %arg1: memref<1x9x9x512xf32, #tpu.memory_space<vmem>>, %arg2: memref<2x2x512x64xf32, #tpu.memory_space<vmem>>, %arg3: memref<9x16x64xf32, #tpu.memory_space<vmem>>, %arg4: memref<9x64x32xf32, #tpu.memory_space<vmem>>, %arg5: memref<16x32xf32, #tpu.memory_space<vmem>>, %arg6: memref<1x64xf32, #tpu.memory_space<vmem>>, %arg7: memref<1x32xf32, #tpu.memory_space<vmem>>, %arg8: memref<16x1xf32, #tpu.memory_space<vmem>>, %arg9: memref<1x1x4xf32, #tpu.memory_space<vmem>>, %arg10: memref<1x32x16xf32, #tpu.memory_space<vmem>>) attributes {dimension_semantics = [#tpu.dimension_semantics<parallel>], iteration_bounds = array<i64: 8>, scalar_prefetch = 0 : i64, scratch_operands = 0 : i64, tpu.core_type = #tpu.core_type<tc>, window_params = [{transform_indices = @transform_0, window_bounds = array<i64: 1, 9, 9, 512>}, {pipeline_mode = #tpu.pipeline_mode<synchronous>, transform_indices = @transform_1, window_bounds = array<i64: 2, 2, 512, 64>}, {pipeline_mode = #tpu.pipeline_mode<synchronous>, transform_indices = @transform_2, window_bounds = array<i64: 9, 16, 64>}, {pipeline_mode = #tpu.pipeline_mode<synchronous>, transform_indices = @transform_3, window_bounds = array<i64: 9, 64, 32>}, {pipeline_mode = #tpu.pipeline_mode<synchronous>, transform_indices = @transform_4, window_bounds = array<i64: 16, 32>}, {pipeline_mode = #tpu.pipeline_mode<synchronous>, transform_indices = @transform_5, window_bounds = array<i64: 1, 64>}, {pipeline_mode = #tpu.pipeline_mode<synchronous>, transform_indices = @transform_6, window_bounds = array<i64: 1, 32>}, {pipeline_mode = #tpu.pipeline_mode<synchronous>, transform_indices = @transform_7, window_bounds = array<i64: 16, 1>}, {transform_indices = @transform_8, window_bounds = array<i64: 1, 1, 4>}, {transform_indices = @transform_9, window_bounds = array<i64: 1, 32, 16>}]} {
    %cst = arith.constant 0.000000e+00 : f32
    %0 = vector.broadcast %cst : f32 to vector<64x64xf32>
    %c0 = arith.constant 0 : index
    %c0_0 = arith.constant 0 : index
    %c0_1 = arith.constant 0 : index
    %c0_2 = arith.constant 0 : index
    %1 = vector.load %arg1[%c0, %c0_0, %c0_1, %c0_2] : memref<1x9x9x512xf32, #tpu.memory_space<vmem>>, vector<1x8x8x512xf32>
    %2 = vector.shape_cast %1 : vector<1x8x8x512xf32> to vector<8x8x512xf32>
    %3 = vector.shape_cast %2 : vector<8x8x512xf32> to vector<64x512xf32>
    %c0_3 = arith.constant 0 : index
    %c0_4 = arith.constant 0 : index
    %c0_5 = arith.constant 0 : index
    %c0_6 = arith.constant 0 : index
    %4 = vector.load %arg2[%c0_3, %c0_4, %c0_5, %c0_6] : memref<2x2x512x64xf32, #tpu.memory_space<vmem>>, vector<1x1x512x64xf32>
    %5 = vector.shape_cast %4 : vector<1x1x512x64xf32> to vector<512x64xf32>
    %cst_7 = arith.constant dense<0.000000e+00> : vector<64x64xf32>
    %6 = tpu.matmul %3, %5, %cst_7 {dimension_numbers = #tpu.dot_dimension_numbers<[1], [0], [0], [1], [0, 0, 1, 1], [], []>} : vector<64x512xf32>, vector<512x64xf32>, vector<64x64xf32> -> vector<64x64xf32>
    %7 = arith.addf %0, %6 : vector<64x64xf32>
    %c0_8 = arith.constant 0 : index
    %c0_9 = arith.constant 0 : index
    %c1 = arith.constant 1 : index
    %c0_10 = arith.constant 0 : index
    %8 = vector.load %arg1[%c0_8, %c0_9, %c1, %c0_10] : memref<1x9x9x512xf32, #tpu.memory_space<vmem>>, vector<1x8x8x512xf32>
    %9 = vector.shape_cast %8 : vector<1x8x8x512xf32> to vector<8x8x512xf32>
    %10 = vector.shape_cast %9 : vector<8x8x512xf32> to vector<64x512xf32>
    %c0_11 = arith.constant 0 : index
    %c1_12 = arith.constant 1 : index
    %c0_13 = arith.constant 0 : index
    %c0_14 = arith.constant 0 : index
    %11 = vector.load %arg2[%c0_11, %c1_12, %c0_13, %c0_14] : memref<2x2x512x64xf32, #tpu.memory_space<vmem>>, vector<1x1x512x64xf32>
    %12 = vector.shape_cast %11 : vector<1x1x512x64xf32> to vector<512x64xf32>
    %cst_15 = arith.constant dense<0.000000e+00> : vector<64x64xf32>
    %13 = tpu.matmul %10, %12, %cst_15 {dimension_numbers = #tpu.dot_dimension_numbers<[1], [0], [0], [1], [0, 0, 1, 1], [], []>} : vector<64x512xf32>, vector<512x64xf32>, vector<64x64xf32> -> vector<64x64xf32>
    %14 = arith.addf %7, %13 : vector<64x64xf32>
    %c0_16 = arith.constant 0 : index
    %c1_17 = arith.constant 1 : index
    %c0_18 = arith.constant 0 : index
    %c0_19 = arith.constant 0 : index
    %15 = vector.load %arg1[%c0_16, %c1_17, %c0_18, %c0_19] : memref<1x9x9x512xf32, #tpu.memory_space<vmem>>, vector<1x8x8x512xf32>
    %16 = vector.shape_cast %15 : vector<1x8x8x512xf32> to vector<8x8x512xf32>
    %17 = vector.shape_cast %16 : vector<8x8x512xf32> to vector<64x512xf32>
    %c1_20 = arith.constant 1 : index
    %c0_21 = arith.constant 0 : index
    %c0_22 = arith.constant 0 : index
    %c0_23 = arith.constant 0 : index
    %18 = vector.load %arg2[%c1_20, %c0_21, %c0_22, %c0_23] : memref<2x2x512x64xf32, #tpu.memory_space<vmem>>, vector<1x1x512x64xf32>
    %19 = vector.shape_cast %18 : vector<1x1x512x64xf32> to vector<512x64xf32>
    %cst_24 = arith.constant dense<0.000000e+00> : vector<64x64xf32>
    %20 = tpu.matmul %17, %19, %cst_24 {dimension_numbers = #tpu.dot_dimension_numbers<[1], [0], [0], [1], [0, 0, 1, 1], [], []>} : vector<64x512xf32>, vector<512x64xf32>, vector<64x64xf32> -> vector<64x64xf32>
    %21 = arith.addf %14, %20 : vector<64x64xf32>
    %c0_25 = arith.constant 0 : index
    %c1_26 = arith.constant 1 : index
    %c1_27 = arith.constant 1 : index
    %c0_28 = arith.constant 0 : index
    %22 = vector.load %arg1[%c0_25, %c1_26, %c1_27, %c0_28] : memref<1x9x9x512xf32, #tpu.memory_space<vmem>>, vector<1x8x8x512xf32>
    %23 = vector.shape_cast %22 : vector<1x8x8x512xf32> to vector<8x8x512xf32>
    %24 = vector.shape_cast %23 : vector<8x8x512xf32> to vector<64x512xf32>
    %c1_29 = arith.constant 1 : index
    %c1_30 = arith.constant 1 : index
    %c0_31 = arith.constant 0 : index
    %c0_32 = arith.constant 0 : index
    %25 = vector.load %arg2[%c1_29, %c1_30, %c0_31, %c0_32] : memref<2x2x512x64xf32, #tpu.memory_space<vmem>>, vector<1x1x512x64xf32>
    %26 = vector.shape_cast %25 : vector<1x1x512x64xf32> to vector<512x64xf32>
    %cst_33 = arith.constant dense<0.000000e+00> : vector<64x64xf32>
    %27 = tpu.matmul %24, %26, %cst_33 {dimension_numbers = #tpu.dot_dimension_numbers<[1], [0], [0], [1], [0, 0, 1, 1], [], []>} : vector<64x512xf32>, vector<512x64xf32>, vector<64x64xf32> -> vector<64x64xf32>
    %28 = arith.addf %21, %27 : vector<64x64xf32>
    %c0_34 = arith.constant 0 : index
    %c0_35 = arith.constant 0 : index
    %29 = vector.load %arg6[%c0_34, %c0_35] : memref<1x64xf32, #tpu.memory_space<vmem>>, vector<1x64xf32>
    %30 = vector.broadcast %29 : vector<1x64xf32> to vector<64x64xf32>
    %31 = arith.addf %28, %30 : vector<64x64xf32>
    %cst_36 = arith.constant 0.000000e+00 : f32
    %32 = vector.broadcast %cst_36 : f32 to vector<64x64xf32>
    %33 = arith.maximumf %31, %32 : vector<64x64xf32>
    %cst_37 = arith.constant 0.000000e+00 : f32
    %34 = vector.broadcast %cst_37 : f32 to vector<16x32xf32>
    %c0_38 = arith.constant 0 : index
    %c0_39 = arith.constant 0 : index
    %c0_40 = arith.constant 0 : index
    %35 = vector.load %arg3[%c0_38, %c0_39, %c0_40] : memref<9x16x64xf32, #tpu.memory_space<vmem>>, vector<1x16x64xf32>
    %36 = vector.shape_cast %35 : vector<1x16x64xf32> to vector<16x64xf32>
    %cst_41 = arith.constant dense<0.000000e+00> : vector<16x64xf32>
    %37 = tpu.matmul %36, %33, %cst_41 {dimension_numbers = #tpu.dot_dimension_numbers<[1], [0], [0], [1], [0, 0, 1, 1], [], []>} : vector<16x64xf32>, vector<64x64xf32>, vector<16x64xf32> -> vector<16x64xf32>
    %c0_42 = arith.constant 0 : index
    %c0_43 = arith.constant 0 : index
    %c0_44 = arith.constant 0 : index
    %38 = vector.load %arg4[%c0_42, %c0_43, %c0_44] : memref<9x64x32xf32, #tpu.memory_space<vmem>>, vector<1x64x32xf32>
    %39 = vector.shape_cast %38 : vector<1x64x32xf32> to vector<64x32xf32>
    %cst_45 = arith.constant dense<0.000000e+00> : vector<16x32xf32>
    %40 = tpu.matmul %37, %39, %cst_45 {dimension_numbers = #tpu.dot_dimension_numbers<[1], [0], [0], [1], [0, 0, 1, 1], [], []>} : vector<16x64xf32>, vector<64x32xf32>, vector<16x32xf32> -> vector<16x32xf32>
    %41 = arith.addf %34, %40 : vector<16x32xf32>
    %c1_46 = arith.constant 1 : index
    %c0_47 = arith.constant 0 : index
    %c0_48 = arith.constant 0 : index
    %42 = vector.load %arg3[%c1_46, %c0_47, %c0_48] : memref<9x16x64xf32, #tpu.memory_space<vmem>>, vector<1x16x64xf32>
    %43 = vector.shape_cast %42 : vector<1x16x64xf32> to vector<16x64xf32>
    %cst_49 = arith.constant dense<0.000000e+00> : vector<16x64xf32>
    %44 = tpu.matmul %43, %33, %cst_49 {dimension_numbers = #tpu.dot_dimension_numbers<[1], [0], [0], [1], [0, 0, 1, 1], [], []>} : vector<16x64xf32>, vector<64x64xf32>, vector<16x64xf32> -> vector<16x64xf32>
    %c1_50 = arith.constant 1 : index
    %c0_51 = arith.constant 0 : index
    %c0_52 = arith.constant 0 : index
    %45 = vector.load %arg4[%c1_50, %c0_51, %c0_52] : memref<9x64x32xf32, #tpu.memory_space<vmem>>, vector<1x64x32xf32>
    %46 = vector.shape_cast %45 : vector<1x64x32xf32> to vector<64x32xf32>
    %cst_53 = arith.constant dense<0.000000e+00> : vector<16x32xf32>
    %47 = tpu.matmul %44, %46, %cst_53 {dimension_numbers = #tpu.dot_dimension_numbers<[1], [0], [0], [1], [0, 0, 1, 1], [], []>} : vector<16x64xf32>, vector<64x32xf32>, vector<16x32xf32> -> vector<16x32xf32>
    %48 = arith.addf %41, %47 : vector<16x32xf32>
    %c2 = arith.constant 2 : index
    %c0_54 = arith.constant 0 : index
    %c0_55 = arith.constant 0 : index
    %49 = vector.load %arg3[%c2, %c0_54, %c0_55] : memref<9x16x64xf32, #tpu.memory_space<vmem>>, vector<1x16x64xf32>
    %50 = vector.shape_cast %49 : vector<1x16x64xf32> to vector<16x64xf32>
    %cst_56 = arith.constant dense<0.000000e+00> : vector<16x64xf32>
    %51 = tpu.matmul %50, %33, %cst_56 {dimension_numbers = #tpu.dot_dimension_numbers<[1], [0], [0], [1], [0, 0, 1, 1], [], []>} : vector<16x64xf32>, vector<64x64xf32>, vector<16x64xf32> -> vector<16x64xf32>
    %c2_57 = arith.constant 2 : index
    %c0_58 = arith.constant 0 : index
    %c0_59 = arith.constant 0 : index
    %52 = vector.load %arg4[%c2_57, %c0_58, %c0_59] : memref<9x64x32xf32, #tpu.memory_space<vmem>>, vector<1x64x32xf32>
    %53 = vector.shape_cast %52 : vector<1x64x32xf32> to vector<64x32xf32>
    %cst_60 = arith.constant dense<0.000000e+00> : vector<16x32xf32>
    %54 = tpu.matmul %51, %53, %cst_60 {dimension_numbers = #tpu.dot_dimension_numbers<[1], [0], [0], [1], [0, 0, 1, 1], [], []>} : vector<16x64xf32>, vector<64x32xf32>, vector<16x32xf32> -> vector<16x32xf32>
    %55 = arith.addf %48, %54 : vector<16x32xf32>
    %c3 = arith.constant 3 : index
    %c0_61 = arith.constant 0 : index
    %c0_62 = arith.constant 0 : index
    %56 = vector.load %arg3[%c3, %c0_61, %c0_62] : memref<9x16x64xf32, #tpu.memory_space<vmem>>, vector<1x16x64xf32>
    %57 = vector.shape_cast %56 : vector<1x16x64xf32> to vector<16x64xf32>
    %cst_63 = arith.constant dense<0.000000e+00> : vector<16x64xf32>
    %58 = tpu.matmul %57, %33, %cst_63 {dimension_numbers = #tpu.dot_dimension_numbers<[1], [0], [0], [1], [0, 0, 1, 1], [], []>} : vector<16x64xf32>, vector<64x64xf32>, vector<16x64xf32> -> vector<16x64xf32>
    %c3_64 = arith.constant 3 : index
    %c0_65 = arith.constant 0 : index
    %c0_66 = arith.constant 0 : index
    %59 = vector.load %arg4[%c3_64, %c0_65, %c0_66] : memref<9x64x32xf32, #tpu.memory_space<vmem>>, vector<1x64x32xf32>
    %60 = vector.shape_cast %59 : vector<1x64x32xf32> to vector<64x32xf32>
    %cst_67 = arith.constant dense<0.000000e+00> : vector<16x32xf32>
    %61 = tpu.matmul %58, %60, %cst_67 {dimension_numbers = #tpu.dot_dimension_numbers<[1], [0], [0], [1], [0, 0, 1, 1], [], []>} : vector<16x64xf32>, vector<64x32xf32>, vector<16x32xf32> -> vector<16x32xf32>
    %62 = arith.addf %55, %61 : vector<16x32xf32>
    %c4 = arith.constant 4 : index
    %c0_68 = arith.constant 0 : index
    %c0_69 = arith.constant 0 : index
    %63 = vector.load %arg3[%c4, %c0_68, %c0_69] : memref<9x16x64xf32, #tpu.memory_space<vmem>>, vector<1x16x64xf32>
    %64 = vector.shape_cast %63 : vector<1x16x64xf32> to vector<16x64xf32>
    %cst_70 = arith.constant dense<0.000000e+00> : vector<16x64xf32>
    %65 = tpu.matmul %64, %33, %cst_70 {dimension_numbers = #tpu.dot_dimension_numbers<[1], [0], [0], [1], [0, 0, 1, 1], [], []>} : vector<16x64xf32>, vector<64x64xf32>, vector<16x64xf32> -> vector<16x64xf32>
    %c4_71 = arith.constant 4 : index
    %c0_72 = arith.constant 0 : index
    %c0_73 = arith.constant 0 : index
    %66 = vector.load %arg4[%c4_71, %c0_72, %c0_73] : memref<9x64x32xf32, #tpu.memory_space<vmem>>, vector<1x64x32xf32>
    %67 = vector.shape_cast %66 : vector<1x64x32xf32> to vector<64x32xf32>
    %cst_74 = arith.constant dense<0.000000e+00> : vector<16x32xf32>
    %68 = tpu.matmul %65, %67, %cst_74 {dimension_numbers = #tpu.dot_dimension_numbers<[1], [0], [0], [1], [0, 0, 1, 1], [], []>} : vector<16x64xf32>, vector<64x32xf32>, vector<16x32xf32> -> vector<16x32xf32>
    %69 = arith.addf %62, %68 : vector<16x32xf32>
    %c5 = arith.constant 5 : index
    %c0_75 = arith.constant 0 : index
    %c0_76 = arith.constant 0 : index
    %70 = vector.load %arg3[%c5, %c0_75, %c0_76] : memref<9x16x64xf32, #tpu.memory_space<vmem>>, vector<1x16x64xf32>
    %71 = vector.shape_cast %70 : vector<1x16x64xf32> to vector<16x64xf32>
    %cst_77 = arith.constant dense<0.000000e+00> : vector<16x64xf32>
    %72 = tpu.matmul %71, %33, %cst_77 {dimension_numbers = #tpu.dot_dimension_numbers<[1], [0], [0], [1], [0, 0, 1, 1], [], []>} : vector<16x64xf32>, vector<64x64xf32>, vector<16x64xf32> -> vector<16x64xf32>
    %c5_78 = arith.constant 5 : index
    %c0_79 = arith.constant 0 : index
    %c0_80 = arith.constant 0 : index
    %73 = vector.load %arg4[%c5_78, %c0_79, %c0_80] : memref<9x64x32xf32, #tpu.memory_space<vmem>>, vector<1x64x32xf32>
    %74 = vector.shape_cast %73 : vector<1x64x32xf32> to vector<64x32xf32>
    %cst_81 = arith.constant dense<0.000000e+00> : vector<16x32xf32>
    %75 = tpu.matmul %72, %74, %cst_81 {dimension_numbers = #tpu.dot_dimension_numbers<[1], [0], [0], [1], [0, 0, 1, 1], [], []>} : vector<16x64xf32>, vector<64x32xf32>, vector<16x32xf32> -> vector<16x32xf32>
    %76 = arith.addf %69, %75 : vector<16x32xf32>
    %c6 = arith.constant 6 : index
    %c0_82 = arith.constant 0 : index
    %c0_83 = arith.constant 0 : index
    %77 = vector.load %arg3[%c6, %c0_82, %c0_83] : memref<9x16x64xf32, #tpu.memory_space<vmem>>, vector<1x16x64xf32>
    %78 = vector.shape_cast %77 : vector<1x16x64xf32> to vector<16x64xf32>
    %cst_84 = arith.constant dense<0.000000e+00> : vector<16x64xf32>
    %79 = tpu.matmul %78, %33, %cst_84 {dimension_numbers = #tpu.dot_dimension_numbers<[1], [0], [0], [1], [0, 0, 1, 1], [], []>} : vector<16x64xf32>, vector<64x64xf32>, vector<16x64xf32> -> vector<16x64xf32>
    %c6_85 = arith.constant 6 : index
    %c0_86 = arith.constant 0 : index
    %c0_87 = arith.constant 0 : index
    %80 = vector.load %arg4[%c6_85, %c0_86, %c0_87] : memref<9x64x32xf32, #tpu.memory_space<vmem>>, vector<1x64x32xf32>
    %81 = vector.shape_cast %80 : vector<1x64x32xf32> to vector<64x32xf32>
    %cst_88 = arith.constant dense<0.000000e+00> : vector<16x32xf32>
    %82 = tpu.matmul %79, %81, %cst_88 {dimension_numbers = #tpu.dot_dimension_numbers<[1], [0], [0], [1], [0, 0, 1, 1], [], []>} : vector<16x64xf32>, vector<64x32xf32>, vector<16x32xf32> -> vector<16x32xf32>
    %83 = arith.addf %76, %82 : vector<16x32xf32>
    %c7 = arith.constant 7 : index
    %c0_89 = arith.constant 0 : index
    %c0_90 = arith.constant 0 : index
    %84 = vector.load %arg3[%c7, %c0_89, %c0_90] : memref<9x16x64xf32, #tpu.memory_space<vmem>>, vector<1x16x64xf32>
    %85 = vector.shape_cast %84 : vector<1x16x64xf32> to vector<16x64xf32>
    %cst_91 = arith.constant dense<0.000000e+00> : vector<16x64xf32>
    %86 = tpu.matmul %85, %33, %cst_91 {dimension_numbers = #tpu.dot_dimension_numbers<[1], [0], [0], [1], [0, 0, 1, 1], [], []>} : vector<16x64xf32>, vector<64x64xf32>, vector<16x64xf32> -> vector<16x64xf32>
    %c7_92 = arith.constant 7 : index
    %c0_93 = arith.constant 0 : index
    %c0_94 = arith.constant 0 : index
    %87 = vector.load %arg4[%c7_92, %c0_93, %c0_94] : memref<9x64x32xf32, #tpu.memory_space<vmem>>, vector<1x64x32xf32>
    %88 = vector.shape_cast %87 : vector<1x64x32xf32> to vector<64x32xf32>
    %cst_95 = arith.constant dense<0.000000e+00> : vector<16x32xf32>
    %89 = tpu.matmul %86, %88, %cst_95 {dimension_numbers = #tpu.dot_dimension_numbers<[1], [0], [0], [1], [0, 0, 1, 1], [], []>} : vector<16x64xf32>, vector<64x32xf32>, vector<16x32xf32> -> vector<16x32xf32>
    %90 = arith.addf %83, %89 : vector<16x32xf32>
    %c8 = arith.constant 8 : index
    %c0_96 = arith.constant 0 : index
    %c0_97 = arith.constant 0 : index
    %91 = vector.load %arg3[%c8, %c0_96, %c0_97] : memref<9x16x64xf32, #tpu.memory_space<vmem>>, vector<1x16x64xf32>
    %92 = vector.shape_cast %91 : vector<1x16x64xf32> to vector<16x64xf32>
    %cst_98 = arith.constant dense<0.000000e+00> : vector<16x64xf32>
    %93 = tpu.matmul %92, %33, %cst_98 {dimension_numbers = #tpu.dot_dimension_numbers<[1], [0], [0], [1], [0, 0, 1, 1], [], []>} : vector<16x64xf32>, vector<64x64xf32>, vector<16x64xf32> -> vector<16x64xf32>
    %c8_99 = arith.constant 8 : index
    %c0_100 = arith.constant 0 : index
    %c0_101 = arith.constant 0 : index
    %94 = vector.load %arg4[%c8_99, %c0_100, %c0_101] : memref<9x64x32xf32, #tpu.memory_space<vmem>>, vector<1x64x32xf32>
    %95 = vector.shape_cast %94 : vector<1x64x32xf32> to vector<64x32xf32>
    %cst_102 = arith.constant dense<0.000000e+00> : vector<16x32xf32>
    %96 = tpu.matmul %93, %95, %cst_102 {dimension_numbers = #tpu.dot_dimension_numbers<[1], [0], [0], [1], [0, 0, 1, 1], [], []>} : vector<16x64xf32>, vector<64x32xf32>, vector<16x32xf32> -> vector<16x32xf32>
    %97 = arith.addf %90, %96 : vector<16x32xf32>
    %c0_103 = arith.constant 0 : index
    %c0_104 = arith.constant 0 : index
    %98 = vector.load %arg7[%c0_103, %c0_104] : memref<1x32xf32, #tpu.memory_space<vmem>>, vector<1x32xf32>
    %99 = vector.broadcast %98 : vector<1x32xf32> to vector<16x32xf32>
    %100 = arith.addf %97, %99 : vector<16x32xf32>
    %cst_105 = arith.constant 0.000000e+00 : f32
    %101 = vector.broadcast %cst_105 : f32 to vector<16x32xf32>
    %102 = arith.maximumf %100, %101 : vector<16x32xf32>
    %c0_106 = arith.constant 0 : index
    %c0_107 = arith.constant 0 : index
    %103 = vector.load %arg5[%c0_106, %c0_107] : memref<16x32xf32, #tpu.memory_space<vmem>>, vector<16x32xf32>
    %cst_108 = arith.constant dense<0.000000e+00> : vector<16x16xf32>
    %104 = tpu.matmul %103, %102, %cst_108 {dimension_numbers = #tpu.dot_dimension_numbers<[1], [1], [0], [0], [0, 0, 1, 0], [], []>} : vector<16x32xf32>, vector<16x32xf32>, vector<16x16xf32> -> vector<16x16xf32>
    %c0_109 = arith.constant 0 : index
    %c0_110 = arith.constant 0 : index
    %105 = vector.load %arg8[%c0_109, %c0_110] : memref<16x1xf32, #tpu.memory_space<vmem>>, vector<16x1xf32>
    %106 = vector.broadcast %105 : vector<16x1xf32> to vector<16x16xf32>
    %107 = arith.addf %104, %106 : vector<16x16xf32>
    %cst_111 = arith.constant 0.000000e+00 : f32
    %108 = vector.broadcast %cst_111 : f32 to vector<16x16xf32>
    %109 = arith.maximumf %107, %108 : vector<16x16xf32>
    %c0_112 = arith.constant 0 : index
    %c0_113 = arith.constant 0 : index
    %c0_114 = arith.constant 0 : index
    %110 = vector.load %arg9[%c0_112, %c0_113, %c0_114] : memref<1x1x4xf32, #tpu.memory_space<vmem>>, vector<1x1x4xf32>
    %111 = vector.shape_cast %110 : vector<1x1x4xf32> to vector<1x4xf32>
    %112 = vector.extract_strided_slice %111 {offsets = [0, 0], sizes = [1, 1], strides = [1, 1]} : vector<1x4xf32> to vector<1x1xf32>
    %cst_115 = arith.constant 1.600000e+01 : f32
    %113 = vector.broadcast %cst_115 : f32 to vector<1x1xf32>
    %114 = arith.mulf %112, %113 : vector<1x1xf32>
    %115 = vector.extract_strided_slice %111 {offsets = [0, 1], sizes = [1, 1], strides = [1, 1]} : vector<1x4xf32> to vector<1x1xf32>
    %cst_116 = arith.constant 1.600000e+01 : f32
    %116 = vector.broadcast %cst_116 : f32 to vector<1x1xf32>
    %117 = arith.mulf %115, %116 : vector<1x1xf32>
    %118 = vector.extract_strided_slice %111 {offsets = [0, 2], sizes = [1, 1], strides = [1, 1]} : vector<1x4xf32> to vector<1x1xf32>
    %cst_117 = arith.constant 1.600000e+01 : f32
    %119 = vector.broadcast %cst_117 : f32 to vector<1x1xf32>
    %120 = arith.mulf %118, %119 : vector<1x1xf32>
    %121 = vector.extract_strided_slice %111 {offsets = [0, 3], sizes = [1, 1], strides = [1, 1]} : vector<1x4xf32> to vector<1x1xf32>
    %cst_118 = arith.constant 1.600000e+01 : f32
    %122 = vector.broadcast %cst_118 : f32 to vector<1x1xf32>
    %123 = arith.mulf %121, %122 : vector<1x1xf32>
    %124 = tpu.iota {dimensions = array<i32: 0>} : vector<16x16xi32>
    %125 = arith.sitofp %124 : vector<16x16xi32> to vector<16x16xf32>
    %126 = tpu.iota {dimensions = array<i32: 1>} : vector<16x16xi32>
    %127 = arith.sitofp %126 : vector<16x16xi32> to vector<16x16xf32>
    %128 = vector.broadcast %114 : vector<1x1xf32> to vector<16x16xf32>
    %129 = arith.cmpf oge, %127, %128 : vector<16x16xf32>
    %130 = arith.addf %114, %120 : vector<1x1xf32>
    %131 = vector.broadcast %130 : vector<1x1xf32> to vector<16x16xf32>
    %132 = arith.cmpf olt, %127, %131 : vector<16x16xf32>
    %133 = arith.andi %129, %132 : vector<16x16xi1>
    %134 = vector.broadcast %117 : vector<1x1xf32> to vector<16x16xf32>
    %135 = arith.cmpf oge, %125, %134 : vector<16x16xf32>
    %136 = arith.andi %133, %135 : vector<16x16xi1>
    %137 = arith.addf %117, %123 : vector<1x1xf32>
    %138 = vector.broadcast %137 : vector<1x1xf32> to vector<16x16xf32>
    %139 = arith.cmpf olt, %125, %138 : vector<16x16xf32>
    %140 = arith.andi %136, %139 : vector<16x16xi1>
    %141 = arith.extui %140 : vector<16x16xi1> to vector<16x16xi32>
    %142 = arith.sitofp %141 : vector<16x16xi32> to vector<16x16xf32>
    %cst_119 = arith.constant dense<0.000000e+00> : vector<16xf32>
    %143 = vector.multi_reduction <add>, %142, %cst_119 [1] : vector<16x16xf32> to vector<16xf32>
    %144 = vector.shape_cast %143 : vector<16xf32> to vector<16x1xf32>
    %cst_120 = arith.constant dense<0.000000e+00> : vector<1xf32>
    %145 = vector.multi_reduction <add>, %144, %cst_120 [0] : vector<16x1xf32> to vector<1xf32>
    %146 = vector.shape_cast %145 : vector<1xf32> to vector<1x1xf32>
    %cst_121 = arith.constant 1.000000e+00 : f32
    %147 = vector.broadcast %cst_121 : f32 to vector<1x1xf32>
    %148 = arith.maximumf %146, %147 : vector<1x1xf32>
    %149 = tpu.reciprocal %148 {approx = true} : vector<1x1xf32> -> vector<1x1xf32>
    %150 = vector.broadcast %149 : vector<1x1xf32> to vector<16x16xf32>
    %151 = arith.mulf %142, %150 : vector<16x16xf32>
    %c0_122 = arith.constant 0 : index
    %c0_123 = arith.constant 0 : index
    %c0_124 = arith.constant 0 : index
    %152 = vector.load %arg10[%c0_122, %c0_123, %c0_124] : memref<1x32x16xf32, #tpu.memory_space<vmem>>, vector<1x16x16xf32>
    %153 = vector.shape_cast %152 : vector<1x16x16xf32> to vector<16x16xf32>
    %154 = vector.shape_cast %109 : vector<16x16xf32> to vector<1x16x16xf32>
    tpu.vector_store %arg10[%c0_122, %c0_123, %c0_124], %154 {strides = array<i32>} : memref<1x32x16xf32, #tpu.memory_space<vmem>>, vector<1x16x16xf32>,
    %c0_125 = arith.constant 0 : index
    %c16 = arith.constant 16 : index
    %c0_126 = arith.constant 0 : index
    %155 = vector.load %arg10[%c0_125, %c16, %c0_126] : memref<1x32x16xf32, #tpu.memory_space<vmem>>, vector<1x16x16xf32>
    %156 = vector.shape_cast %155 : vector<1x16x16xf32> to vector<16x16xf32>
    %157 = vector.shape_cast %151 : vector<16x16xf32> to vector<1x16x16xf32>
    tpu.vector_store %arg10[%c0_125, %c16, %c0_126], %157 {strides = array<i32>} : memref<1x32x16xf32, #tpu.memory_space<vmem>>, vector<1x16x16xf32>,
    return
  }
  func.func @transform_0(%arg0: i32) -> (i32, i32, i32, i32) {
    %c0_i32 = arith.constant 0 : i32
    %c0_i32_0 = arith.constant 0 : i32
    %c0_i32_1 = arith.constant 0 : i32
    %c0_i32_2 = arith.constant 0 : i32
    return %arg0, %c0_i32, %c0_i32_0, %c0_i32_1 : i32, i32, i32, i32
  }
  func.func @transform_1(%arg0: i32) -> (i32, i32, i32, i32) {
    %c0_i32 = arith.constant 0 : i32
    %c0_i32_0 = arith.constant 0 : i32
    %c0_i32_1 = arith.constant 0 : i32
    %c0_i32_2 = arith.constant 0 : i32
    %c0_i32_3 = arith.constant 0 : i32
    return %c0_i32, %c0_i32_0, %c0_i32_1, %c0_i32_2 : i32, i32, i32, i32
  }
  func.func @transform_2(%arg0: i32) -> (i32, i32, i32) {
    %c0_i32 = arith.constant 0 : i32
    %c0_i32_0 = arith.constant 0 : i32
    %c0_i32_1 = arith.constant 0 : i32
    %c0_i32_2 = arith.constant 0 : i32
    return %c0_i32, %c0_i32_0, %c0_i32_1 : i32, i32, i32
  }
  func.func @transform_3(%arg0: i32) -> (i32, i32, i32) {
    %c0_i32 = arith.constant 0 : i32
    %c0_i32_0 = arith.constant 0 : i32
    %c0_i32_1 = arith.constant 0 : i32
    %c0_i32_2 = arith.constant 0 : i32
    return %c0_i32, %c0_i32_0, %c0_i32_1 : i32, i32, i32
  }
  func.func @transform_4(%arg0: i32) -> (i32, i32) {
    %c0_i32 = arith.constant 0 : i32
    %c0_i32_0 = arith.constant 0 : i32
    %c0_i32_1 = arith.constant 0 : i32
    return %c0_i32, %c0_i32_0 : i32, i32
  }
  func.func @transform_5(%arg0: i32) -> (i32, i32) {
    %c0_i32 = arith.constant 0 : i32
    %c0_i32_0 = arith.constant 0 : i32
    %c0_i32_1 = arith.constant 0 : i32
    return %c0_i32, %c0_i32_0 : i32, i32
  }
  func.func @transform_6(%arg0: i32) -> (i32, i32) {
    %c0_i32 = arith.constant 0 : i32
    %c0_i32_0 = arith.constant 0 : i32
    %c0_i32_1 = arith.constant 0 : i32
    return %c0_i32, %c0_i32_0 : i32, i32
  }
  func.func @transform_7(%arg0: i32) -> (i32, i32) {
    %c0_i32 = arith.constant 0 : i32
    %c0_i32_0 = arith.constant 0 : i32
    %c0_i32_1 = arith.constant 0 : i32
    return %c0_i32, %c0_i32_0 : i32, i32
  }
  func.func @transform_8(%arg0: i32) -> (i32, i32, i32) {
    %c0_i32 = arith.constant 0 : i32
    %c0_i32_0 = arith.constant 0 : i32
    %c0_i32_1 = arith.constant 0 : i32
    return %arg0, %c0_i32, %c0_i32_0 : i32, i32, i32
  }
  func.func @transform_9(%arg0: i32) -> (i32, i32, i32) {
    %c0_i32 = arith.constant 0 : i32
    %c0_i32_0 = arith.constant 0 : i32
    %c0_i32_1 = arith.constant 0 : i32
    return %arg0, %c0_i32, %c0_i32_0 : i32, i32, i32
  }
}

</mosaic_0001>

<llo_original>
// kernel: yimgnet_pm_forward.1
$region0: #{yimgnet_pm_forward.1}
  #allocation0 [shape = 'u32[]', space=smem, size = 0x4, offset = 0x4, fixed_abs, tag = 'smem constant byte address 0x4 - core index']
  #allocation1 [shape = 'u32[144,128]{1,0:T(1,128)}', space=vmem, size = 0x12000, scoped, tag = 'internal scratch']
  %s0 = inlined_call_operand.vmem [shape: f32[8,9,9,512], index: 0, kind: input, shape index: {}]
  %s1 = inlined_call_operand.vmem [shape: f32[2,2,512,64], index: 1, kind: input, shape index: {}]
  %s2 = inlined_call_operand.vmem [shape: f32[9,16,64], index: 2, kind: input, shape index: {}]
  %s3 = inlined_call_operand.vmem [shape: f32[9,64,32], index: 3, kind: input, shape index: {}]
  %s4 = inlined_call_operand.vmem [shape: f32[16,32], index: 4, kind: input, shape index: {}]
  %s5 = inlined_call_operand.vmem [shape: f32[1,64], index: 5, kind: input, shape index: {}]
  %s6 = inlined_call_operand.vmem [shape: f32[1,32], index: 6, kind: input, shape index: {}]
  %s7 = inlined_call_operand.vmem [shape: f32[16,1], index: 7, kind: input, shape index: {}]
  %s8 = inlined_call_operand.vmem [shape: f32[8,1,4], index: 8, kind: input, shape index: {}]
  %s9 = inlined_call_operand.vmem [shape: f32[8,32,16], index: 9, kind: output, shape index: {}]
  %s10 = sld [smem:[#allocation0]]
  $region69: #{yimgnet_pm_forward.1} parent=0
    _
  %s12 = ssub.s32 1, %s10
  %s13 = scalar_select 0, %s12, %s10
  loop: start=0, step=1, limit=10
  $region2: #{yimgnet_pm_forward.1} parent=0 // loop_pre_header
    _
  $region3: #{yimgnet_pm_forward.1} parent=0 // loop_header
    %s15 = sphi 0, %s19
    %p16 = scmp.ge.s32.totalorder %s15, 10
    %s25 = sphi 0, %s27
    %s28 = sphi 0, %s25
    %s29 = sphi 0, %s28
    %s45 = sphi 0, %s29
    %s49 = sphi 0, %s49
    %s51 = sphi 0, %s49
    %s52 = sphi 0, %s51
    %s66 = sphi 0, %s52
    %s70 = sphi 0, %s70
    %s72 = sphi 0, %s70
    %s73 = sphi 0, %s72
    %s87 = sphi 0, %s73
    %s91 = sphi 0, %s91
    %s93 = sphi 0, %s91
    %s94 = sphi 0, %s93
    %s108 = sphi 0, %s94
    %s112 = sphi 0, %s112
    %s114 = sphi 0, %s112
    %s115 = sphi 0, %s114
    %s129 = sphi 0, %s115
    %s133 = sphi 0, %s133
    %s135 = sphi 0, %s133
    %s136 = sphi 0, %s135
    %s150 = sphi 0, %s136
    %s154 = sphi 0, %s154
    %s156 = sphi 0, %s154
    %s157 = sphi 0, %s156
    %s171 = sphi 0, %s157
    %s175 = sphi 0, %s175
    %s177 = sphi 0, %s175
    %s178 = sphi 0, %s177
    %s192 = sphi 0, %s178
    %s198 = sphi 0, %s200
    %s201 = sphi 0, %s198
    %s202 = sphi 0, %s201
    %s218 = sphi 0, %s202
    %s224 = sphi 0, %s226
    %s227 = sphi 0, %s224
    %s228 = sphi 0, %s227
    %s244 = sphi 0, %s228
  $region4: #{yimgnet_pm_forward.1} parent=0 // loop_header_branch
    %18 = sbr.rel (%p16) target = $region8
  $region5: #{yimgnet_pm_forward.1} parent=0 // loop_body
    %s20 = ssub.s32 %s15, 1
    %s21 = ssub.s32 %s15, 2
    %s22 = sadd.s32 %s15, 1
    %s23 = ssub.s32 %s15, %s22
    %p24 = scmp.eq.s32.totalorder %s23, 0
    %s26 = sadd.s32 %s25, 1
    %s27 = scalar_select %p24, %s25, %s26
    %p30 = pneg %p24
    %p31 = scmp.eq.s32.totalorder %s15, 7
    %p32 = por %p30, %p31
    %p33 = scmp.ne.s32.totalorder %s25, %s28
    %p34 = scmp.eq.s32.totalorder %s15, 0
    %p35 = por %p33, %p34
    %p36 = scmp.ne.s32.totalorder %s25, %s28
    %p37 = scmp.eq.s32.totalorder %s20, 7
    %p38 = por %p36, %p37
    %p39 = scmp.ne.s32.totalorder %s28, %s29
    %p40 = scmp.eq.s32.totalorder %s20, 0
    %p41 = por %p39, %p40
    %p42 = scmp.ne.s32.totalorder %s28, %s29
    %p43 = scmp.eq.s32.totalorder %s21, 7
    %p44 = por %p42, %p43
    %p46 = scmp.ne.s32.totalorder %s29, %s45
    %p47 = scmp.eq.s32.totalorder %s21, 0
    %p48 = por %p46, %p47
    %s50 = sadd.s32 %s49, 1
    %p53 = scmp.eq.s32.totalorder %s15, 7
    %p54 = scmp.ne.s32.totalorder %s49, %s51
    %p55 = scmp.eq.s32.totalorder %s15, 0
    %p56 = por %p54, %p55
    %p57 = scmp.ne.s32.totalorder %s49, %s51
    %p58 = scmp.eq.s32.totalorder %s20, 7
    %p59 = por %p57, %p58
    %p60 = scmp.ne.s32.totalorder %s51, %s52
    %p61 = scmp.eq.s32.totalorder %s20, 0
    %p62 = por %p60, %p61
    %p63 = scmp.ne.s32.totalorder %s51, %s52
    %p64 = scmp.eq.s32.totalorder %s21, 7
    %p65 = por %p63, %p64
    %p67 = scmp.ne.s32.totalorder %s52, %s66
    %p68 = scmp.eq.s32.totalorder %s21, 0
    %p69 = por %p67, %p68
    %s71 = sadd.s32 %s70, 1
    %p74 = scmp.eq.s32.totalorder %s15, 7
    %p75 = scmp.ne.s32.totalorder %s70, %s72
    %p76 = scmp.eq.s32.totalorder %s15, 0
    %p77 = por %p75, %p76
    %p78 = scmp.ne.s32.totalorder %s70, %s72
    %p79 = scmp.eq.s32.totalorder %s20, 7
    %p80 = por %p78, %p79
    %p81 = scmp.ne.s32.totalorder %s72, %s73
    %p82 = scmp.eq.s32.totalorder %s20, 0
    %p83 = por %p81, %p82
    %p84 = scmp.ne.s32.totalorder %s72, %s73
    %p85 = scmp.eq.s32.totalorder %s21, 7
    %p86 = por %p84, %p85
    %p88 = scmp.ne.s32.totalorder %s73, %s87
    %p89 = scmp.eq.s32.totalorder %s21, 0
    %p90 = por %p88, %p89
    %s92 = sadd.s32 %s91, 1
    %p95 = scmp.eq.s32.totalorder %s15, 7
    %p96 = scmp.ne.s32.totalorder %s91, %s93
    %p97 = scmp.eq.s32.totalorder %s15, 0
    %p98 = por %p96, %p97
    %p99 = scmp.ne.s32.totalorder %s91, %s93
    %p100 = scmp.eq.s32.totalorder %s20, 7
    %p101 = por %p99, %p100
    %p102 = scmp.ne.s32.totalorder %s93, %s94
    %p103 = scmp.eq.s32.totalorder %s20, 0
    %p104 = por %p102, %p103
    %p105 = scmp.ne.s32.totalorder %s93, %s94
    %p106 = scmp.eq.s32.totalorder %s21, 7
    %p107 = por %p105, %p106
    %p109 = scmp.ne.s32.totalorder %s94, %s108
    %p110 = scmp.eq.s32.totalorder %s21, 0
    %p111 = por %p109, %p110
    %s113 = sadd.s32 %s112, 1
    %p116 = scmp.eq.s32.totalorder %s15, 7
    %p117 = scmp.ne.s32.totalorder %s112, %s114
    %p118 = scmp.eq.s32.totalorder %s15, 0
    %p119 = por %p117, %p118
    %p120 = scmp.ne.s32.totalorder %s112, %s114
    %p121 = scmp.eq.s32.totalorder %s20, 7
    %p122 = por %p120, %p121
    %p123 = scmp.ne.s32.totalorder %s114, %s115
    %p124 = scmp.eq.s32.totalorder %s20, 0
    %p125 = por %p123, %p124
    %p126 = scmp.ne.s32.totalorder %s114, %s115
    %p127 = scmp.eq.s32.totalorder %s21, 7
    %p128 = por %p126, %p127
    %p130 = scmp.ne.s32.totalorder %s115, %s129
    %p131 = scmp.eq.s32.totalorder %s21, 0
    %p132 = por %p130, %p131
    %s134 = sadd.s32 %s133, 1
    %p137 = scmp.eq.s32.totalorder %s15, 7
    %p138 = scmp.ne.s32.totalorder %s133, %s135
    %p139 = scmp.eq.s32.totalorder %s15, 0
    %p140 = por %p138, %p139
    %p141 = scmp.ne.s32.totalorder %s133, %s135
    %p142 = scmp.eq.s32.totalorder %s20, 7
    %p143 = por %p141, %p142
    %p144 = scmp.ne.s32.totalorder %s135, %s136
    %p145 = scmp.eq.s32.totalorder %s20, 0
    %p146 = por %p144, %p145
    %p147 = scmp.ne.s32.totalorder %s135, %s136
    %p148 = scmp.eq.s32.totalorder %s21, 7
    %p149 = por %p147, %p148
    %p151 = scmp.ne.s32.totalorder %s136, %s150
    %p152 = scmp.eq.s32.totalorder %s21, 0
    %p153 = por %p151, %p152
    %s155 = sadd.s32 %s154, 1
    %p158 = scmp.eq.s32.totalorder %s15, 7
    %p159 = scmp.ne.s32.totalorder %s154, %s156
    %p160 = scmp.eq.s32.totalorder %s15, 0
    %p161 = por %p159, %p160
    %p162 = scmp.ne.s32.totalorder %s154, %s156
    %p163 = scmp.eq.s32.totalorder %s20, 7
    %p164 = por %p162, %p163
    %p165 = scmp.ne.s32.totalorder %s156, %s157
    %p166 = scmp.eq.s32.totalorder %s20, 0
    %p167 = por %p165, %p166
    %p168 = scmp.ne.s32.totalorder %s156, %s157
    %p169 = scmp.eq.s32.totalorder %s21, 7
    %p170 = por %p168, %p169
    %p172 = scmp.ne.s32.totalorder %s157, %s171
    %p173 = scmp.eq.s32.totalorder %s21, 0
    %p174 = por %p172, %p173
    %s176 = sadd.s32 %s175, 1
    %p179 = scmp.eq.s32.totalorder %s15, 7
    %p180 = scmp.ne.s32.totalorder %s175, %s177
    %p181 = scmp.eq.s32.totalorder %s15, 0
    %p182 = por %p180, %p181
    %p183 = scmp.ne.s32.totalorder %s175, %s177
    %p184 = scmp.eq.s32.totalorder %s20, 7
    %p185 = por %p183, %p184
    %p186 = scmp.ne.s32.totalorder %s177, %s178
    %p187 = scmp.eq.s32.totalorder %s20, 0
    %p188 = por %p186, %p187
    %p189 = scmp.ne.s32.totalorder %s177, %s178
    %p190 = scmp.eq.s32.totalorder %s21, 7
    %p191 = por %p189, %p190
    %p193 = scmp.ne.s32.totalorder %s178, %s192
    %p194 = scmp.eq.s32.totalorder %s21, 0
    %p195 = por %p193, %p194
    %s196 = ssub.s32 %s15, %s22
    %p197 = scmp.eq.s32.totalorder %s196, 0
    %s199 = sadd.s32 %s198, 1
    %s200 = scalar_select %p197, %s198, %s199
    %p203 = pneg %p197
    %p204 = scmp.eq.s32.totalorder %s15, 7
    %p205 = por %p203, %p204
    %p206 = scmp.ne.s32.totalorder %s198, %s201
    %p207 = scmp.eq.s32.totalorder %s15, 0
    %p208 = por %p206, %p207
    %p209 = scmp.ne.s32.totalorder %s198, %s201
    %p210 = scmp.eq.s32.totalorder %s20, 7
    %p211 = por %p209, %p210
    %p212 = scmp.ne.s32.totalorder %s201, %s202
    %p213 = scmp.eq.s32.totalorder %s20, 0
    %p214 = por %p212, %p213
    %p215 = scmp.ne.s32.totalorder %s201, %s202
    %p216 = scmp.eq.s32.totalorder %s21, 7
    %p217 = por %p215, %p216
    %p219 = scmp.ne.s32.totalorder %s202, %s218
    %p220 = scmp.eq.s32.totalorder %s21, 0
    %p221 = por %p219, %p220
    %s222 = ssub.s32 %s15, %s22
    %p223 = scmp.eq.s32.totalorder %s222, 0
    %s225 = sadd.s32 %s224, 1
    %s226 = scalar_select %p223, %s224, %s225
    %p229 = pneg %p223
    %p230 = scmp.eq.s32.totalorder %s15, 7
    %p231 = por %p229, %p230
    %p232 = scmp.ne.s32.totalorder %s224, %s227
    %p233 = scmp.eq.s32.totalorder %s15, 0
    %p234 = por %p232, %p233
    %p235 = scmp.ne.s32.totalorder %s224, %s227
    %p236 = scmp.eq.s32.totalorder %s20, 7
    %p237 = por %p235, %p236
    %p238 = scmp.ne.s32.totalorder %s227, %s228
    %p239 = scmp.eq.s32.totalorder %s20, 0
    %p240 = por %p238, %p239
    %p241 = scmp.ne.s32.totalorder %s227, %s228
    %p242 = scmp.eq.s32.totalorder %s21, 7
    %p243 = por %p241, %p242
    %p245 = scmp.ne.s32.totalorder %s228, %s244
    %p246 = scmp.eq.s32.totalorder %s21, 0
    %p247 = por %p245, %p246
    %p248 = scmp.le.s32.totalorder 1, %s15
    %p249 = scmp.lt.s32.totalorder %s15, 9
    %p250 = pnand %p248, %p249
    %p251 = pneg %p250
    // Predicated region
    $region9: #{yimgnet_pm_forward.1} parent=5 // pred_check
      _
    $region10: #{yimgnet_pm_forward.1} parent=5 // pred_check_branch
      %253 = sbr.rel (%p250) target = $region12
    $region11: #{yimgnet_pm_forward.1} parent=5 // pred_region
      %s254 = ssub.s32 %s15, 1
      // Predicated region
      $region13: #{yimgnet_pm_forward.1} parent=11 // pred_check
        %p255 = pneg %p62
      $region14: #{yimgnet_pm_forward.1} parent=11 // pred_check_branch
        %257 = sbr.rel (%p255) target = $region16
      $region15: #{yimgnet_pm_forward.1} parent=11 // pred_region
        _
      $region16: #{yimgnet_pm_forward.1} parent=11 // pred_fallthru
        _
      // Predicated region
      $region17: #{yimgnet_pm_forward.1} parent=11 // pred_check
        %p258 = pneg %p83
      $region18: #{yimgnet_pm_forward.1} parent=11 // pred_check_branch
        %260 = sbr.rel (%p258) target = $region20
      $region19: #{yimgnet_pm_forward.1} parent=11 // pred_region
        _
      $region20: #{yimgnet_pm_forward.1} parent=11 // pred_fallthru
        _
      // Predicated region
      $region21: #{yimgnet_pm_forward.1} parent=11 // pred_check
        %p261 = pneg %p104
      $region22: #{yimgnet_pm_forward.1} parent=11 // pred_check_branch
        %263 = sbr.rel (%p261) target = $region24
      $region23: #{yimgnet_pm_forward.1} parent=11 // pred_region
        _
      $region24: #{yimgnet_pm_forward.1} parent=11 // pred_fallthru
        _
      // Predicated region
      $region25: #{yimgnet_pm_forward.1} parent=11 // pred_check
        %p264 = pneg %p125
      $region26: #{yimgnet_pm_forward.1} parent=11 // pred_check_branch
        %266 = sbr.rel (%p264) target = $region28
      $region27: #{yimgnet_pm_forward.1} parent=11 // pred_region
        _
      $region28: #{yimgnet_pm_forward.1} parent=11 // pred_fallthru
        _
      // Predicated region
      $region29: #{yimgnet_pm_forward.1} parent=11 // pred_check
        %p267 = pneg %p146
      $region30: #{yimgnet_pm_forward.1} parent=11 // pred_check_branch
        %269 = sbr.rel (%p267) target = $region32
      $region31: #{yimgnet_pm_forward.1} parent=11 // pred_region
        _
      $region32: #{yimgnet_pm_forward.1} parent=11 // pred_fallthru
        _
      // Predicated region
      $region33: #{yimgnet_pm_forward.1} parent=11 // pred_check
        %p270 = pneg %p167
      $region34: #{yimgnet_pm_forward.1} parent=11 // pred_check_branch
        %272 = sbr.rel (%p270) target = $region36
      $region35: #{yimgnet_pm_forward.1} parent=11 // pred_region
        _
      $region36: #{yimgnet_pm_forward.1} parent=11 // pred_fallthru
        _
      // Predicated region
      $region37: #{yimgnet_pm_forward.1} parent=11 // pred_check
        %p273 = pneg %p188
      $region38: #{yimgnet_pm_forward.1} parent=11 // pred_check_branch
        %275 = sbr.rel (%p273) target = $region40
      $region39: #{yimgnet_pm_forward.1} parent=11 // pred_region
        _
      $region40: #{yimgnet_pm_forward.1} parent=11 // pred_fallthru
        _
    $region12: #{yimgnet_pm_forward.1} parent=5 // pred_fallthru
      _
    %p276 = scmp.lt.s32.totalorder %s15, 8
    // Predicated region
    $region41: #{yimgnet_pm_forward.1} parent=5 // pred_check
      %p277 = pneg %p276
    $region42: #{yimgnet_pm_forward.1} parent=5 // pred_check_branch
      %279 = sbr.rel (%p277) target = $region44
    $region43: #{yimgnet_pm_forward.1} parent=5 // pred_region
      // Predicated region
      $region45: #{yimgnet_pm_forward.1} parent=43 // pred_check
        %p280 = pneg %p35
      $region46: #{yimgnet_pm_forward.1} parent=43 // pred_check_branch
        %282 = sbr.rel (%p280) target = $region48
      $region47: #{yimgnet_pm_forward.1} parent=43 // pred_region
        %p283 = scmp.lt.s32.totalorder %s15, 7
        %s284 = scalar_select %p283, %s15, 7
        %s285 = smul.addr %s284, 72
        %s286 = smul.addr %s285, 8
        %s287 = scalar_lea.vmem %s0, %s286
      $region48: #{yimgnet_pm_forward.1} parent=43 // pred_fallthru
        _
      // Predicated region
      $region49: #{yimgnet_pm_forward.1} parent=43 // pred_check
        %p288 = pneg %p208
      $region50: #{yimgnet_pm_forward.1} parent=43 // pred_check_branch
        %290 = sbr.rel (%p288) target = $region52
      $region51: #{yimgnet_pm_forward.1} parent=43 // pred_region
        %p291 = scmp.lt.s32.totalorder %s15, 7
        %s292 = scalar_select %p291, %s15, 7
        %s293 = scalar_lea.vmem %s8, %s292
      $region52: #{yimgnet_pm_forward.1} parent=43 // pred_fallthru
        _
    $region44: #{yimgnet_pm_forward.1} parent=5 // pred_fallthru
      _
    %p294 = scmp.le.s32.totalorder 1, %s15
    %p295 = scmp.lt.s32.totalorder %s15, 9
    %p296 = pnand %p294, %p295
    %p297 = pneg %p296
    // Predicated region
    $region53: #{yimgnet_pm_forward.1} parent=5 // pred_check
      _
    $region54: #{yimgnet_pm_forward.1} parent=5 // pred_check_branch
      %299 = sbr.rel (%p296) target = $region56
    $region55: #{yimgnet_pm_forward.1} parent=5 // pred_region
      %s300 = ssub.s32 %s15, 1
      %p301 = scmp.lt.s32.totalorder %s20, 7
      %s302 = scalar_select %p301, %s20, 7
      %s303 = smul.addr %s302, 72
      %s304 = smul.addr %s303, 8
      %s305 = scalar_lea.vmem %s0, %s304
      %p306 = pneg %p41
      %p307 = pneg %p38
      %p308 = pneg %p62
      %p309 = pneg %p59
      %p310 = pneg %p83
      %p311 = pneg %p80
      %p312 = pneg %p104
      %p313 = pneg %p101
      %p314 = pneg %p125
      %p315 = pneg %p122
      %p316 = pneg %p146
      %p317 = pneg %p143
      %p318 = pneg %p167
      %p319 = pneg %p164
      %p320 = pneg %p188
      %p321 = pneg %p185
      %p322 = scmp.lt.s32.totalorder %s20, 7
      %s323 = scalar_select %p322, %s20, 7
      %s324 = scalar_lea.vmem %s8, %s323
      %p325 = pneg %p214
      %p326 = pneg %p211
      %p327 = pneg %p240
      %p328 = pneg %p237
      %p329 = scmp.lt.s32.totalorder %s20, 7
      %s330 = scalar_select %p329, %s20, 7
      %s331 = smul.addr %s330, 4
      %s332 = smul.addr %s331, 8
      %s333 = scalar_lea.vmem %s9, %s332
      %p334 = scmp.lt.s32.totalorder %s20, 7
      %s335 = scalar_select %p334, %s20, 7
      %s336 = smul.addr %s335, 72
      %s337 = smul.addr %s336, 8
      %s338 = scalar_lea.vmem %s0, %s337
      %p339 = scmp.lt.s32.totalorder %s20, 7
      %s340 = scalar_select %p339, %s20, 7
      %s341 = scalar_lea.vmem %s8, %s340
      %p342 = scmp.lt.s32.totalorder %s20, 7
      %s343 = scalar_select %p342, %s20, 7
      %s344 = smul.addr %s343, 4
      %s345 = smul.addr %s344, 8
      %s346 = scalar_lea.vmem %s9, %s345
      %v347 = vld [vmem:[%s338] sm:$0xff]
      %v348 = vld [vmem:[%s338 + $0x8] sm:$0xff]
      %v349 = vld [vmem:[%s338 + $0x10] sm:$0xff]
      %v350 = vld [vmem:[%s338 + $0x18] sm:$0xff]
      %v351 = vld [vmem:[%s338 + $0x40] sm:$0xff]
      %v352 = vld [vmem:[%s338 + $0x48] sm:$0xff]
      %v353 = vld [vmem:[%s338 + $0x50] sm:$0xff]
      %v354 = vld [vmem:[%s338 + $0x58] sm:$0xff]
      %v355 = vld [vmem:[%s338 + $0x80] sm:$0xff]
      %v356 = vld [vmem:[%s338 + $0x88] sm:$0xff]
      %v357 = vld [vmem:[%s338 + $0x90] sm:$0xff]
      %v358 = vld [vmem:[%s338 + $0x98] sm:$0xff]
      %v359 = vld [vmem:[%s338 + $0xc0] sm:$0xff]
      %v360 = vld [vmem:[%s338 + $0xc8] sm:$0xff]
      %v361 = vld [vmem:[%s338 + $0xd0] sm:$0xff]
      %v362 = vld [vmem:[%s338 + $0xd8] sm:$0xff]
      %v363 = vld [vmem:[%s338 + $0x100] sm:$0xff]
      %v364 = vld [vmem:[%s338 + $0x108] sm:$0xff]
      %v365 = vld [vmem:[%s338 + $0x110] sm:$0xff]
      %v366 = vld [vmem:[%s338 + $0x118] sm:$0xff]
      %v367 = vld [vmem:[%s338 + $0x140] sm:$0xff]
      %v368 = vld [vmem:[%s338 + $0x148] sm:$0xff]
      %v369 = vld [vmem:[%s338 + $0x150] sm:$0xff]
      %v370 = vld [vmem:[%s338 + $0x158] sm:$0xff]
      %v371 = vld [vmem:[%s338 + $0x180] sm:$0xff]
      %v372 = vld [vmem:[%s338 + $0x188] sm:$0xff]
      %v373 = vld [vmem:[%s338 + $0x190] sm:$0xff]
      %v374 = vld [vmem:[%s338 + $0x198] sm:$0xff]
      %v375 = vld [vmem:[%s338 + $0x1c0] sm:$0xff]
      %v376 = vld [vmem:[%s338 + $0x1c8] sm:$0xff]
      %v377 = vld [vmem:[%s338 + $0x1d0] sm:$0xff]
      %v378 = vld [vmem:[%s338 + $0x1d8] sm:$0xff]
      %v379 = vld [vmem:[%s1] sm:$0xff]
      %v380 = vld [vmem:[%s1 + $0x8] sm:$0xff]
      %v381 = vld [vmem:[%s1 + $0x10] sm:$0xff]
      %v382 = vld [vmem:[%s1 + $0x18] sm:$0xff]
      %v383 = vld [vmem:[%s1 + $0x20] sm:$0xff]
      %v384 = vld [vmem:[%s1 + $0x28] sm:$0xff]
      %v385 = vld [vmem:[%s1 + $0x30] sm:$0xff]
      %v386 = vld [vmem:[%s1 + $0x38] sm:$0xff]
      %v387 = vld [vmem:[%s1 + $0x40] sm:$0xff]
      %v388 = vld [vmem:[%s1 + $0x48] sm:$0xff]
      %v389 = vld [vmem:[%s1 + $0x50] sm:$0xff]
      %v390 = vld [vmem:[%s1 + $0x58] sm:$0xff]
      %v391 = vld [vmem:[%s1 + $0x60] sm:$0xff]
      %v392 = vld [vmem:[%s1 + $0x68] sm:$0xff]
      %v393 = vld [vmem:[%s1 + $0x70] sm:$0xff]
      %v394 = vld [vmem:[%s1 + $0x78] sm:$0xff]
      %v395 = vld [vmem:[%s1 + $0x80] sm:$0xff]
      %v396 = vld [vmem:[%s1 + $0x88] sm:$0xff]
      %v397 = vld [vmem:[%s1 + $0x90] sm:$0xff]
      %v398 = vld [vmem:[%s1 + $0x98] sm:$0xff]
      %v399 = vld [vmem:[%s1 + $0xa0] sm:$0xff]
      %v400 = vld [vmem:[%s1 + $0xa8] sm:$0xff]
      %v401 = vld [vmem:[%s1 + $0xb0] sm:$0xff]
      %v402 = vld [vmem:[%s1 + $0xb8] sm:$0xff]
      %v403 = vld [vmem:[%s1 + $0xc0] sm:$0xff]
      %v404 = vld [vmem:[%s1 + $0xc8] sm:$0xff]
      %v405 = vld [vmem:[%s1 + $0xd0] sm:$0xff]
      %v406 = vld [vmem:[%s1 + $0xd8] sm:$0xff]
      %v407 = vld [vmem:[%s1 + $0xe0] sm:$0xff]
      %v408 = vld [vmem:[%s1 + $0xe8] sm:$0xff]
      %v409 = vld [vmem:[%s1 + $0xf0] sm:$0xff]
      %v410 = vld [vmem:[%s1 + $0xf8] sm:$0xff]
      %v411 = vld [vmem:[%s1 + $0x100] sm:$0xff]
      %v412 = vld [vmem:[%s1 + $0x108] sm:$0xff]
      %v413 = vld [vmem:[%s1 + $0x110] sm:$0xff]
      %v414 = vld [vmem:[%s1 + $0x118] sm:$0xff]
      %v415 = vld [vmem:[%s1 + $0x120] sm:$0xff]
      %v416 = vld [vmem:[%s1 + $0x128] sm:$0xff]
      %v417 = vld [vmem:[%s1 + $0x130] sm:$0xff]
      %v418 = vld [vmem:[%s1 + $0x138] sm:$0xff]
      %v419 = vld [vmem:[%s1 + $0x140] sm:$0xff]
      %v420 = vld [vmem:[%s1 + $0x148] sm:$0xff]
      %v421 = vld [vmem:[%s1 + $0x150] sm:$0xff]
      %v422 = vld [vmem:[%s1 + $0x158] sm:$0xff]
      %v423 = vld [vmem:[%s1 + $0x160] sm:$0xff]
      %v424 = vld [vmem:[%s1 + $0x168] sm:$0xff]
      %v425 = vld [vmem:[%s1 + $0x170] sm:$0xff]
      %v426 = vld [vmem:[%s1 + $0x178] sm:$0xff]
      %v427 = vld [vmem:[%s1 + $0x180] sm:$0xff]
      %v428 = vld [vmem:[%s1 + $0x188] sm:$0xff]
      %v429 = vld [vmem:[%s1 + $0x190] sm:$0xff]
      %v430 = vld [vmem:[%s1 + $0x198] sm:$0xff]
      %v431 = vld [vmem:[%s1 + $0x1a0] sm:$0xff]
      %v432 = vld [vmem:[%s1 + $0x1a8] sm:$0xff]
      %v433 = vld [vmem:[%s1 + $0x1b0] sm:$0xff]
      %v434 = vld [vmem:[%s1 + $0x1b8] sm:$0xff]
      %v435 = vld [vmem:[%s1 + $0x1c0] sm:$0xff]
      %v436 = vld [vmem:[%s1 + $0x1c8] sm:$0xff]
      %v437 = vld [vmem:[%s1 + $0x1d0] sm:$0xff]
      %v438 = vld [vmem:[%s1 + $0x1d8] sm:$0xff]
      %v439 = vld [vmem:[%s1 + $0x1e0] sm:$0xff]
      %v440 = vld [vmem:[%s1 + $0x1e8] sm:$0xff]
      %v441 = vld [vmem:[%s1 + $0x1f0] sm:$0xff]
      %v442 = vld [vmem:[%s1 + $0x1f8] sm:$0xff]
      %v443 = vld [vmem:[%s338] sm:$0xfe]
      %v444 = vld [vmem:[%s338 + $0x8] sm:$0xfe]
      %v445 = vld [vmem:[%s338 + $0x10] sm:$0xfe]
      %v446 = vld [vmem:[%s338 + $0x18] sm:$0xfe]
      %v447 = vld [vmem:[%s338 + $0x20] sm:$0x1]
      %v448 = vld [vmem:[%s338 + $0x28] sm:$0x1]
      %v449 = vld [vmem:[%s338 + $0x30] sm:$0x1]
      %v450 = vld [vmem:[%s338 + $0x38] sm:$0x1]
      %v451 = vld [vmem:[%s338 + $0x40] sm:$0xfe]
      %v452 = vld [vmem:[%s338 + $0x48] sm:$0xfe]
      %v453 = vld [vmem:[%s338 + $0x50] sm:$0xfe]
      %v454 = vld [vmem:[%s338 + $0x58] sm:$0xfe]
      %v455 = vld [vmem:[%s338 + $0x60] sm:$0x1]
      %v456 = vld [vmem:[%s338 + $0x68] sm:$0x1]
      %v457 = vld [vmem:[%s338 + $0x70] sm:$0x1]
      %v458 = vld [vmem:[%s338 + $0x78] sm:$0x1]
      %v459 = vld [vmem:[%s338 + $0x80] sm:$0xfe]
      %v460 = vld [vmem:[%s338 + $0x88] sm:$0xfe]
      %v461 = vld [vmem:[%s338 + $0x90] sm:$0xfe]
      %v462 = vld [vmem:[%s338 + $0x98] sm:$0xfe]
      %v463 = vld [vmem:[%s338 + $0xa0] sm:$0x1]
      %v464 = vld [vmem:[%s338 + $0xa8] sm:$0x1]
      %v465 = vld [vmem:[%s338 + $0xb0] sm:$0x1]
      %v466 = vld [vmem:[%s338 + $0xb8] sm:$0x1]
      %v467 = vld [vmem:[%s338 + $0xc0] sm:$0xfe]
      %v468 = vld [vmem:[%s338 + $0xc8] sm:$0xfe]
      %v469 = vld [vmem:[%s338 + $0xd0] sm:$0xfe]
      %v470 = vld [vmem:[%s338 + $0xd8] sm:$0xfe]
      %v471 = vld [vmem:[%s338 + $0xe0] sm:$0x1]
      %v472 = vld [vmem:[%s338 + $0xe8] sm:$0x1]
      %v473 = vld [vmem:[%s338 + $0xf0] sm:$0x1]
      %v474 = vld [vmem:[%s338 + $0xf8] sm:$0x1]
      %v475 = vld [vmem:[%s338 + $0x100] sm:$0xfe]
      %v476 = vld [vmem:[%s338 + $0x108] sm:$0xfe]
      %v477 = vld [vmem:[%s338 + $0x110] sm:$0xfe]
      %v478 = vld [vmem:[%s338 + $0x118] sm:$0xfe]
      %v479 = vld [vmem:[%s338 + $0x120] sm:$0x1]
      %v480 = vld [vmem:[%s338 + $0x128] sm:$0x1]
      %v481 = vld [vmem:[%s338 + $0x130] sm:$0x1]
      %v482 = vld [vmem:[%s338 + $0x138] sm:$0x1]
      %v483 = vld [vmem:[%s338 + $0x140] sm:$0xfe]
      %v484 = vld [vmem:[%s338 + $0x148] sm:$0xfe]
      %v485 = vld [vmem:[%s338 + $0x150] sm:$0xfe]
      %v486 = vld [vmem:[%s338 + $0x158] sm:$0xfe]
      %v487 = vld [vmem:[%s338 + $0x160] sm:$0x1]
      %v488 = vld [vmem:[%s338 + $0x168] sm:$0x1]
      %v489 = vld [vmem:[%s338 + $0x170] sm:$0x1]
      %v490 = vld [vmem:[%s338 + $0x178] sm:$0x1]
      %v491 = vld [vmem:[%s338 + $0x180] sm:$0xfe]
      %v492 = vld [vmem:[%s338 + $0x188] sm:$0xfe]
      %v493 = vld [vmem:[%s338 + $0x190] sm:$0xfe]
      %v494 = vld [vmem:[%s338 + $0x198] sm:$0xfe]
      %v495 = vld [vmem:[%s338 + $0x1a0] sm:$0x1]
      %v496 = vld [vmem:[%s338 + $0x1a8] sm:$0x1]
      %v497 = vld [vmem:[%s338 + $0x1b0] sm:$0x1]
      %v498 = vld [vmem:[%s338 + $0x1b8] sm:$0x1]
      %v499 = vld [vmem:[%s338 + $0x1c0] sm:$0xfe]
      %v500 = vld [vmem:[%s338 + $0x1c8] sm:$0xfe]
      %v501 = vld [vmem:[%s338 + $0x1d0] sm:$0xfe]
      %v502 = vld [vmem:[%s338 + $0x1d8] sm:$0xfe]
      %v503 = vld [vmem:[%s338 + $0x1e0] sm:$0x1]
      %v504 = vld [vmem:[%s338 + $0x1e8] sm:$0x1]
      %v505 = vld [vmem:[%s338 + $0x1f0] sm:$0x1]
      %v506 = vld [vmem:[%s338 + $0x1f8] sm:$0x1]
      %vm571 = vcmask 1046528
      %v572 = vrot.slane %v443, 1
      %v573 = vrot.slane %v447, 1
      %v574 = vsel %vm571, %v572, %v573
      %v575 = vrot.slane %v444, 1
      %v576 = vrot.slane %v448, 1
      %v577 = vsel %vm571, %v575, %v576
      %v578 = vrot.slane %v445, 1
      %v579 = vrot.slane %v449, 1
      %v580 = vsel %vm571, %v578, %v579
      %v581 = vrot.slane %v446, 1
      %v582 = vrot.slane %v450, 1
      %v583 = vsel %vm571, %v581, %v582
      %v584 = vrot.slane %v451, 1
      %v585 = vrot.slane %v455, 1
      %v586 = vsel %vm571, %v584, %v585
      %v587 = vrot.slane %v452, 1
      %v588 = vrot.slane %v456, 1
      %v589 = vsel %vm571, %v587, %v588
      %v590 = vrot.slane %v453, 1
      %v591 = vrot.slane %v457, 1
      %v592 = vsel %vm571, %v590, %v591
      %v593 = vrot.slane %v454, 1
      %v594 = vrot.slane %v458, 1
      %v595 = vsel %vm571, %v593, %v594
      %v596 = vrot.slane %v459, 1
      %v597 = vrot.slane %v463, 1
      %v598 = vsel %vm571, %v596, %v597
      %v599 = vrot.slane %v460, 1
      %v600 = vrot.slane %v464, 1
      %v601 = vsel %vm571, %v599, %v600
      %v602 = vrot.slane %v461, 1
      %v603 = vrot.slane %v465, 1
      %v604 = vsel %vm571, %v602, %v603
      %v605 = vrot.slane %v462, 1
      %v606 = vrot.slane %v466, 1
      %v607 = vsel %vm571, %v605, %v606
      %v608 = vrot.slane %v467, 1
      %v609 = vrot.slane %v471, 1
      %v610 = vsel %vm571, %v608, %v609
      %v611 = vrot.slane %v468, 1
      %v612 = vrot.slane %v472, 1
      %v613 = vsel %vm571, %v611, %v612
      %v614 = vrot.slane %v469, 1
      %v615 = vrot.slane %v473, 1
      %v616 = vsel %vm571, %v614, %v615
      %v617 = vrot.slane %v470, 1
      %v618 = vrot.slane %v474, 1
      %v619 = vsel %vm571, %v617, %v618
      %v620 = vrot.slane %v475, 1
      %v621 = vrot.slane %v479, 1
      %v622 = vsel %vm571, %v620, %v621
      %v623 = vrot.slane %v476, 1
      %v624 = vrot.slane %v480, 1
      %v625 = vsel %vm571, %v623, %v624
      %v626 = vrot.slane %v477, 1
      %v627 = vrot.slane %v481, 1
      %v628 = vsel %vm571, %v626, %v627
      %v629 = vrot.slane %v478, 1
      %v630 = vrot.slane %v482, 1
      %v631 = vsel %vm571, %v629, %v630
      %v632 = vrot.slane %v483, 1
      %v633 = vrot.slane %v487, 1
      %v634 = vsel %vm571, %v632, %v633
      %v635 = vrot.slane %v484, 1
      %v636 = vrot.slane %v488, 1
      %v637 = vsel %vm571, %v635, %v636
      %v638 = vrot.slane %v485, 1
      %v639 = vrot.slane %v489, 1
      %v640 = vsel %vm571, %v638, %v639
      %v641 = vrot.slane %v486, 1
      %v642 = vrot.slane %v490, 1
      %v643 = vsel %vm571, %v641, %v642
      %v644 = vrot.slane %v491, 1
      %v645 = vrot.slane %v495, 1
      %v646 = vsel %vm571, %v644, %v645
      %v647 = vrot.slane %v492, 1
      %v648 = vrot.slane %v496, 1
      %v649 = vsel %vm571, %v647, %v648
      %v650 = vrot.slane %v493, 1
      %v651 = vrot.slane %v497, 1
      %v652 = vsel %vm571, %v650, %v651
      %v653 = vrot.slane %v494, 1
      %v654 = vrot.slane %v498, 1
      %v655 = vsel %vm571, %v653, %v654
      %v656 = vrot.slane %v499, 1
      %v657 = vrot.slane %v503, 1
      %v658 = vsel %vm571, %v656, %v657
      %v659 = vrot.slane %v500, 1
      %v660 = vrot.slane %v504, 1
      %v661 = vsel %vm571, %v659, %v660
      %v662 = vrot.slane %v501, 1
      %v663 = vrot.slane %v505, 1
      %v664 = vsel %vm571, %v662, %v663
      %v665 = vrot.slane %v502, 1
      %v666 = vrot.slane %v506, 1
      %v667 = vsel %vm571, %v665, %v666
      %s700 = scalar_lea.vmem %s1, 512
      %v701 = vld [vmem:[%s700] sm:$0xff]
      %v702 = vld [vmem:[%s700 + $0x8] sm:$0xff]
      %v703 = vld [vmem:[%s700 + $0x10] sm:$0xff]
      %v704 = vld [vmem:[%s700 + $0x18] sm:$0xff]
      %v705 = vld [vmem:[%s700 + $0x20] sm:$0xff]
      %v706 = vld [vmem:[%s700 + $0x28] sm:$0xff]
      %v707 = vld [vmem:[%s700 + $0x30] sm:$0xff]
      %v708 = vld [vmem:[%s700 + $0x38] sm:$0xff]
      %v709 = vld [vmem:[%s700 + $0x40] sm:$0xff]
      %v710 = vld [vmem:[%s700 + $0x48] sm:$0xff]
      %v711 = vld [vmem:[%s700 + $0x50] sm:$0xff]
      %v712 = vld [vmem:[%s700 + $0x58] sm:$0xff]
      %v713 = vld [vmem:[%s700 + $0x60] sm:$0xff]
      %v714 = vld [vmem:[%s700 + $0x68] sm:$0xff]
      %v715 = vld [vmem:[%s700 + $0x70] sm:$0xff]
      %v716 = vld [vmem:[%s700 + $0x78] sm:$0xff]
      %v717 = vld [vmem:[%s700 + $0x80] sm:$0xff]
      %v718 = vld [vmem:[%s700 + $0x88] sm:$0xff]
      %v719 = vld [vmem:[%s700 + $0x90] sm:$0xff]
      %v720 = vld [vmem:[%s700 + $0x98] sm:$0xff]
      %v721 = vld [vmem:[%s700 + $0xa0] sm:$0xff]
      %v722 = vld [vmem:[%s700 + $0xa8] sm:$0xff]
      %v723 = vld [vmem:[%s700 + $0xb0] sm:$0xff]
      %v724 = vld [vmem:[%s700 + $0xb8] sm:$0xff]
      %v725 = vld [vmem:[%s700 + $0xc0] sm:$0xff]
      %v726 = vld [vmem:[%s700 + $0xc8] sm:$0xff]
      %v727 = vld [vmem:[%s700 + $0xd0] sm:$0xff]
      %v728 = vld [vmem:[%s700 + $0xd8] sm:$0xff]
      %v729 = vld [vmem:[%s700 + $0xe0] sm:$0xff]
      %v730 = vld [vmem:[%s700 + $0xe8] sm:$0xff]
      %v731 = vld [vmem:[%s700 + $0xf0] sm:$0xff]
      %v732 = vld [vmem:[%s700 + $0xf8] sm:$0xff]
      %v733 = vld [vmem:[%s700 + $0x100] sm:$0xff]
      %v734 = vld [vmem:[%s700 + $0x108] sm:$0xff]
      %v735 = vld [vmem:[%s700 + $0x110] sm:$0xff]
      %v736 = vld [vmem:[%s700 + $0x118] sm:$0xff]
      %v737 = vld [vmem:[%s700 + $0x120] sm:$0xff]
      %v738 = vld [vmem:[%s700 + $0x128] sm:$0xff]
      %v739 = vld [vmem:[%s700 + $0x130] sm:$0xff]
      %v740 = vld [vmem:[%s700 + $0x138] sm:$0xff]
      %v741 = vld [vmem:[%s700 + $0x140] sm:$0xff]
      %v742 = vld [vmem:[%s700 + $0x148] sm:$0xff]
      %v743 = vld [vmem:[%s700 + $0x150] sm:$0xff]
      %v744 = vld [vmem:[%s700 + $0x158] sm:$0xff]
      %v745 = vld [vmem:[%s700 + $0x160] sm:$0xff]
      %v746 = vld [vmem:[%s700 + $0x168] sm:$0xff]
      %v747 = vld [vmem:[%s700 + $0x170] sm:$0xff]
      %v748 = vld [vmem:[%s700 + $0x178] sm:$0xff]
      %v749 = vld [vmem:[%s700 + $0x180] sm:$0xff]
      %v750 = vld [vmem:[%s700 + $0x188] sm:$0xff]
      %v751 = vld [vmem:[%s700 + $0x190] sm:$0xff]
      %v752 = vld [vmem:[%s700 + $0x198] sm:$0xff]
      %v753 = vld [vmem:[%s700 + $0x1a0] sm:$0xff]
      %v754 = vld [vmem:[%s700 + $0x1a8] sm:$0xff]
      %v755 = vld [vmem:[%s700 + $0x1b0] sm:$0xff]
      %v756 = vld [vmem:[%s700 + $0x1b8] sm:$0xff]
      %v757 = vld [vmem:[%s700 + $0x1c0] sm:$0xff]
      %v758 = vld [vmem:[%s700 + $0x1c8] sm:$0xff]
      %v759 = vld [vmem:[%s700 + $0x1d0] sm:$0xff]
      %v760 = vld [vmem:[%s700 + $0x1d8] sm:$0xff]
      %v761 = vld [vmem:[%s700 + $0x1e0] sm:$0xff]
      %v762 = vld [vmem:[%s700 + $0x1e8] sm:$0xff]
      %v763 = vld [vmem:[%s700 + $0x1f0] sm:$0xff]
      %v764 = vld [vmem:[%s700 + $0x1f8] sm:$0xff]
      %765 = vmatprep.subr.mxu0 0.0
      %766 = vmatpush1.msra.mxu0 %v701
      %767 = vmatprep.subr.mxu0 0.0
      %768 = vmatpush1.msra.mxu0 %v702
      %769 = vmatprep.subr.mxu0 0.0
      %770 = vmatpush1.msra.mxu0 %v703
      %771 = vmatprep.subr.mxu0 0.0
      %772 = vmatpush1.msra.mxu0 %v704
      %773 = vmatprep.subr.mxu0 0.0
      %774 = vmatpush1.msra.mxu0 %v705
      %775 = vmatprep.subr.mxu0 0.0
      %776 = vmatpush1.msra.mxu0 %v706
      %777 = vmatprep.subr.mxu0 0.0
      %778 = vmatpush1.msra.mxu0 %v707
      %779 = vmatprep.subr.mxu0 0.0
      %780 = vmatpush1.msra.mxu0 %v708
      %781 = vmatprep.subr.mxu0 0.0
      %782 = vmatpush1.msra.mxu0 %v709
      %783 = vmatprep.subr.mxu0 0.0
      %784 = vmatpush1.msra.mxu0 %v710
      %785 = vmatprep.subr.mxu0 0.0
      %786 = vmatpush1.msra.mxu0 %v711
      %787 = vmatprep.subr.mxu0 0.0
      %788 = vmatpush1.msra.mxu0 %v712
      %789 = vmatprep.subr.mxu0 0.0
      %790 = vmatpush1.msra.mxu0 %v713
      %791 = vmatprep.subr.mxu0 0.0
      %792 = vmatpush1.msra.mxu0 %v714
      %793 = vmatprep.subr.mxu0 0.0
      %794 = vmatpush1.msra.mxu0 %v715
      %795 = vmatprep.subr.mxu0 0.0
      %796 = vmatpush1.msra.mxu0 %v716
      %797 = vmatprep.subr.mxu0 0.0
      %798 = vmatpush1.msra.mxu0 %v717
      %799 = vmatprep.subr.mxu0 0.0
      %800 = vmatpush1.msra.mxu0 %v718
      %801 = vmatprep.subr.mxu0 0.0
      %802 = vmatpush1.msra.mxu0 %v719
      %803 = vmatprep.subr.mxu0 0.0
      %804 = vmatpush1.msra.mxu0 %v720
      %805 = vmatprep.subr.mxu0 0.0
      %806 = vmatpush1.msra.mxu0 %v721
      %807 = vmatprep.subr.mxu0 0.0
      %808 = vmatpush1.msra.mxu0 %v722
      %809 = vmatprep.subr.mxu0 0.0
      %810 = vmatpush1.msra.mxu0 %v723
      %811 = vmatprep.subr.mxu0 0.0
      %812 = vmatpush1.msra.mxu0 %v724
      %813 = vmatprep.subr.mxu0 0.0
      %814 = vmatpush1.msra.mxu0 %v725
      %815 = vmatprep.subr.mxu0 0.0
      %816 = vmatpush1.msra.mxu0 %v726
      %817 = vmatprep.subr.mxu0 0.0
      %818 = vmatpush1.msra.mxu0 %v727
      %819 = vmatprep.subr.mxu0 0.0
      %820 = vmatpush1.msra.mxu0 %v728
      %821 = vmatprep.subr.mxu0 0.0
      %822 = vmatpush1.msra.mxu0 %v729
      %823 = vmatprep.subr.mxu0 0.0
      %824 = vmatpush1.msra.mxu0 %v730
      %825 = vmatprep.subr.mxu0 0.0
      %826 = vmatpush1.msra.mxu0 %v731
      %827 = vmatprep.subr.mxu0 0.0
      %828 = vmatpush1.msra.mxu0 %v732
      %829 = vmatprep.mubr.f32.mxu0 %v577
      %830 = vmatmul.mubr.f32.gmra.mrb[0].mxu0 %v574
      %v831 = vpop.f32.mrb[0].mxu0
      %v832 = vadd.f32 0.0, %v831
      %v833 = vpop.f32.mrb[0].mxu0
      %834 = vmatprep.mubr.f32.mxu0 %v589
      %835 = vmatmul.mubr.f32.gmra.mrb[0].mxu0 %v586
      %v836 = vpop.f32.mrb[0].mxu0
      %v837 = vadd.f32 0.0, %v836
      %v838 = vpop.f32.mrb[0].mxu0
      %839 = vmatprep.mubr.f32.mxu0 %v601
      %840 = vmatmul.mubr.f32.gmra.mrb[0].mxu0 %v598
      %v841 = vpop.f32.mrb[0].mxu0
      %v842 = vadd.f32 0.0, %v841
      %v843 = vpop.f32.mrb[0].mxu0
      %844 = vmatprep.mubr.f32.mxu0 %v613
      %845 = vmatmul.mubr.f32.gmra.mrb[0].mxu0 %v610
      %v846 = vpop.f32.mrb[0].mxu0
      %v847 = vadd.f32 0.0, %v846
      %v848 = vpop.f32.mrb[0].mxu0
      %849 = vmatprep.mubr.f32.mxu0 %v625
      %850 = vmatmul.mubr.f32.gmra.mrb[0].mxu0 %v622
      %v851 = vpop.f32.mrb[0].mxu0
      %v852 = vadd.f32 0.0, %v851
      %v853 = vpop.f32.mrb[0].mxu0
      %854 = vmatprep.mubr.f32.mxu0 %v637
      %855 = vmatmul.mubr.f32.gmra.mrb[0].mxu0 %v634
      %v856 = vpop.f32.mrb[0].mxu0
      %v857 = vadd.f32 0.0, %v856
      %v858 = vpop.f32.mrb[0].mxu0
      %859 = vmatprep.mubr.f32.mxu0 %v649
      %860 = vmatmul.mubr.f32.gmra.mrb[0].mxu0 %v646
      %v861 = vpop.f32.mrb[0].mxu0
      %v862 = vadd.f32 0.0, %v861
      %v863 = vpop.f32.mrb[0].mxu0
      %864 = vmatprep.mubr.f32.mxu0 %v661
      %865 = vmatmul.mubr.f32.gmra.mrb[0].mxu0 %v658
      %v866 = vpop.f32.mrb[0].mxu0
      %v867 = vadd.f32 0.0, %v866
      %v868 = vpop.f32.mrb[0].mxu0
      %869 = vdwg.mxu0
      %870 = vmatprep.subr.mxu0 0.0
      %871 = vmatpush1.msra.mxu0 %v733
      %872 = vmatprep.subr.mxu0 0.0
      %873 = vmatpush1.msra.mxu0 %v734
      %874 = vmatprep.subr.mxu0 0.0
      %875 = vmatpush1.msra.mxu0 %v735
      %876 = vmatprep.subr.mxu0 0.0
      %877 = vmatpush1.msra.mxu0 %v736
      %878 = vmatprep.subr.mxu0 0.0
      %879 = vmatpush1.msra.mxu0 %v737
      %880 = vmatprep.subr.mxu0 0.0
      %881 = vmatpush1.msra.mxu0 %v738
      %882 = vmatprep.subr.mxu0 0.0
      %883 = vmatpush1.msra.mxu0 %v739
      %884 = vmatprep.subr.mxu0 0.0
      %885 = vmatpush1.msra.mxu0 %v740
      %886 = vmatprep.subr.mxu0 0.0
      %887 = vmatpush1.msra.mxu0 %v741
      %888 = vmatprep.subr.mxu0 0.0
      %889 = vmatpush1.msra.mxu0 %v742
      %890 = vmatprep.subr.mxu0 0.0
      %891 = vmatpush1.msra.mxu0 %v743
      %892 = vmatprep.subr.mxu0 0.0
      %893 = vmatpush1.msra.mxu0 %v744
      %894 = vmatprep.subr.mxu0 0.0
      %895 = vmatpush1.msra.mxu0 %v745
      %896 = vmatprep.subr.mxu0 0.0
      %897 = vmatpush1.msra.mxu0 %v746
      %898 = vmatprep.subr.mxu0 0.0
      %899 = vmatpush1.msra.mxu0 %v747
      %900 = vmatprep.subr.mxu0 0.0
      %901 = vmatpush1.msra.mxu0 %v748
      %902 = vmatprep.subr.mxu0 0.0
      %903 = vmatpush1.msra.mxu0 %v749
      %904 = vmatprep.subr.mxu0 0.0
      %905 = vmatpush1.msra.mxu0 %v750
      %906 = vmatprep.subr.mxu0 0.0
      %907 = vmatpush1.msra.mxu0 %v751
      %908 = vmatprep.subr.mxu0 0.0
      %909 = vmatpush1.msra.mxu0 %v752
      %910 = vmatprep.subr.mxu0 0.0
      %911 = vmatpush1.msra.mxu0 %v753
      %912 = vmatprep.subr.mxu0 0.0
      %913 = vmatpush1.msra.mxu0 %v754
      %914 = vmatprep.subr.mxu0 0.0
      %915 = vmatpush1.msra.mxu0 %v755
      %916 = vmatprep.subr.mxu0 0.0
      %917 = vmatpush1.msra.mxu0 %v756
      %918 = vmatprep.subr.mxu0 0.0
      %919 = vmatpush1.msra.mxu0 %v757
      %920 = vmatprep.subr.mxu0 0.0
      %921 = vmatpush1.msra.mxu0 %v758
      %922 = vmatprep.subr.mxu0 0.0
      %923 = vmatpush1.msra.mxu0 %v759
      %924 = vmatprep.subr.mxu0 0.0
      %925 = vmatpush1.msra.mxu0 %v760
      %926 = vmatprep.subr.mxu0 0.0
      %927 = vmatpush1.msra.mxu0 %v761
      %928 = vmatprep.subr.mxu0 0.0
      %929 = vmatpush1.msra.mxu0 %v762
      %930 = vmatprep.subr.mxu0 0.0
      %931 = vmatpush1.msra.mxu0 %v763
      %932 = vmatprep.subr.mxu0 0.0
      %933 = vmatpush1.msra.mxu0 %v764
      %934 = vmatprep.mubr.f32.mxu0 %v583
      %935 = vmatmul.mubr.f32.gmra.mrb[0].mxu0 %v580
      %v936 = vpop.f32.mrb[0].mxu0
      %v937 = vadd.f32 %v832, %v936
      %v938 = vpop.f32.mrb[0].mxu0
      %939 = vmatprep.mubr.f32.mxu0 %v595
      %940 = vmatmul.mubr.f32.gmra.mrb[0].mxu0 %v592
      %v941 = vpop.f32.mrb[0].mxu0
      %v942 = vadd.f32 %v837, %v941
      %v943 = vpop.f32.mrb[0].mxu0
      %944 = vmatprep.mubr.f32.mxu0 %v607
      %945 = vmatmul.mubr.f32.gmra.mrb[0].mxu0 %v604
      %v946 = vpop.f32.mrb[0].mxu0
      %v947 = vadd.f32 %v842, %v946
      %v948 = vpop.f32.mrb[0].mxu0
      %949 = vmatprep.mubr.f32.mxu0 %v619
      %950 = vmatmul.mubr.f32.gmra.mrb[0].mxu0 %v616
      %v951 = vpop.f32.mrb[0].mxu0
      %v952 = vadd.f32 %v847, %v951
      %v953 = vpop.f32.mrb[0].mxu0
      %954 = vmatprep.mubr.f32.mxu0 %v631
      %955 = vmatmul.mubr.f32.gmra.mrb[0].mxu0 %v628
      %v956 = vpop.f32.mrb[0].mxu0
      %v957 = vadd.f32 %v852, %v956
      %v958 = vpop.f32.mrb[0].mxu0
      %959 = vmatprep.mubr.f32.mxu0 %v643
      %960 = vmatmul.mubr.f32.gmra.mrb[0].mxu0 %v640
      %v961 = vpop.f32.mrb[0].mxu0
      %v962 = vadd.f32 %v857, %v961
      %v963 = vpop.f32.mrb[0].mxu0
      %964 = vmatprep.mubr.f32.mxu0 %v655
      %965 = vmatmul.mubr.f32.gmra.mrb[0].mxu0 %v652
      %v966 = vpop.f32.mrb[0].mxu0
      %v967 = vadd.f32 %v862, %v966
      %v968 = vpop.f32.mrb[0].mxu0
      %969 = vmatprep.mubr.f32.mxu0 %v667
      %970 = vmatmul.mubr.f32.gmra.mrb[0].mxu0 %v664
      %v971 = vpop.f32.mrb[0].mxu0
      %v972 = vadd.f32 %v867, %v971
      %v973 = vpop.f32.mrb[0].mxu0
      %974 = vdwg.mxu0
      %975 = vmatprep.subr.mxu0 0.0
      %976 = vmatpush1.msra.mxu0 %v379
      %977 = vmatprep.subr.mxu0 0.0
      %978 = vmatpush1.msra.mxu0 %v380
      %979 = vmatprep.subr.mxu0 0.0
      %980 = vmatpush1.msra.mxu0 %v381
      %981 = vmatprep.subr.mxu0 0.0
      %982 = vmatpush1.msra.mxu0 %v382
      %983 = vmatprep.subr.mxu0 0.0
      %984 = vmatpush1.msra.mxu0 %v383
      %985 = vmatprep.subr.mxu0 0.0
      %986 = vmatpush1.msra.mxu0 %v384
      %987 = vmatprep.subr.mxu0 0.0
      %988 = vmatpush1.msra.mxu0 %v385
      %989 = vmatprep.subr.mxu0 0.0
      %990 = vmatpush1.msra.mxu0 %v386
      %991 = vmatprep.subr.mxu0 0.0
      %992 = vmatpush1.msra.mxu0 %v387
      %993 = vmatprep.subr.mxu0 0.0
      %994 = vmatpush1.msra.mxu0 %v388
      %995 = vmatprep.subr.mxu0 0.0
      %996 = vmatpush1.msra.mxu0 %v389
      %997 = vmatprep.subr.mxu0 0.0
      %998 = vmatpush1.msra.mxu0 %v390
      %999 = vmatprep.subr.mxu0 0.0
      %1000 = vmatpush1.msra.mxu0 %v391
      %1001 = vmatprep.subr.mxu0 0.0
      %1002 = vmatpush1.msra.mxu0 %v392
      %1003 = vmatprep.subr.mxu0 0.0
      %1004 = vmatpush1.msra.mxu0 %v393
      %1005 = vmatprep.subr.mxu0 0.0
      %1006 = vmatpush1.msra.mxu0 %v394
      %1007 = vmatprep.subr.mxu0 0.0
      %1008 = vmatpush1.msra.mxu0 %v395
      %1009 = vmatprep.subr.mxu0 0.0
      %1010 = vmatpush1.msra.mxu0 %v396
      %1011 = vmatprep.subr.mxu0 0.0
      %1012 = vmatpush1.msra.mxu0 %v397
      %1013 = vmatprep.subr.mxu0 0.0
      %1014 = vmatpush1.msra.mxu0 %v398
      %1015 = vmatprep.subr.mxu0 0.0
      %1016 = vmatpush1.msra.mxu0 %v399
      %1017 = vmatprep.subr.mxu0 0.0
      %1018 = vmatpush1.msra.mxu0 %v400
      %1019 = vmatprep.subr.mxu0 0.0
      %1020 = vmatpush1.msra.mxu0 %v401
      %1021 = vmatprep.subr.mxu0 0.0
      %1022 = vmatpush1.msra.mxu0 %v402
      %1023 = vmatprep.subr.mxu0 0.0
      %1024 = vmatpush1.msra.mxu0 %v403
      %1025 = vmatprep.subr.mxu0 0.0
      %1026 = vmatpush1.msra.mxu0 %v404
      %1027 = vmatprep.subr.mxu0 0.0
      %1028 = vmatpush1.msra.mxu0 %v405
      %1029 = vmatprep.subr.mxu0 0.0
      %1030 = vmatpush1.msra.mxu0 %v406
      %1031 = vmatprep.subr.mxu0 0.0
      %1032 = vmatpush1.msra.mxu0 %v407
      %1033 = vmatprep.subr.mxu0 0.0
      %1034 = vmatpush1.msra.mxu0 %v408
      %1035 = vmatprep.subr.mxu0 0.0
      %1036 = vmatpush1.msra.mxu0 %v409
      %1037 = vmatprep.subr.mxu0 0.0
      %1038 = vmatpush1.msra.mxu0 %v410
      %1039 = vmatprep.mubr.f32.mxu0 %v348
      %1040 = vmatmul.mubr.f32.gmra.mrb[0].mxu0 %v347
      %v1041 = vpop.f32.mrb[0].mxu0
      %v1042 = vadd.f32 %v937, %v1041
      %v1043 = vpop.f32.mrb[0].mxu0
      %1044 = vmatprep.mubr.f32.mxu0 %v352
      %1045 = vmatmul.mubr.f32.gmra.mrb[0].mxu0 %v351
      %v1046 = vpop.f32.mrb[0].mxu0
      %v1047 = vadd.f32 %v942, %v1046
      %v1048 = vpop.f32.mrb[0].mxu0
      %1049 = vmatprep.mubr.f32.mxu0 %v356
      %1050 = vmatmul.mubr.f32.gmra.mrb[0].mxu0 %v355
      %v1051 = vpop.f32.mrb[0].mxu0
      %v1052 = vadd.f32 %v947, %v1051
      %v1053 = vpop.f32.mrb[0].mxu0
      %1054 = vmatprep.mubr.f32.mxu0 %v360
      %1055 = vmatmul.mubr.f32.gmra.mrb[0].mxu0 %v359
      %v1056 = vpop.f32.mrb[0].mxu0
      %v1057 = vadd.f32 %v952, %v1056
      %v1058 = vpop.f32.mrb[0].mxu0
      %1059 = vmatprep.mubr.f32.mxu0 %v364
      %1060 = vmatmul.mubr.f32.gmra.mrb[0].mxu0 %v363
      %v1061 = vpop.f32.mrb[0].mxu0
      %v1062 = vadd.f32 %v957, %v1061
      %v1063 = vpop.f32.mrb[0].mxu0
      %1064 = vmatprep.mubr.f32.mxu0 %v368
      %1065 = vmatmul.mubr.f32.gmra.mrb[0].mxu0 %v367
      %v1066 = vpop.f32.mrb[0].mxu0
      %v1067 = vadd.f32 %v962, %v1066
      %v1068 = vpop.f32.mrb[0].mxu0
      %1069 = vmatprep.mubr.f32.mxu0 %v372
      %1070 = vmatmul.mubr.f32.gmra.mrb[0].mxu0 %v371
      %v1071 = vpop.f32.mrb[0].mxu0
      %v1072 = vadd.f32 %v967, %v1071
      %v1073 = vpop.f32.mrb[0].mxu0
      %1074 = vmatprep.mubr.f32.mxu0 %v376
      %1075 = vmatmul.mubr.f32.gmra.mrb[0].mxu0 %v375
      %v1076 = vpop.f32.mrb[0].mxu0
      %v1077 = vadd.f32 %v972, %v1076
      %v1078 = vpop.f32.mrb[0].mxu0
      %1079 = vdwg.mxu0
      %1080 = vmatprep.subr.mxu0 0.0
      %1081 = vmatpush1.msra.mxu0 %v411
      %1082 = vmatprep.subr.mxu0 0.0
      %1083 = vmatpush1.msra.mxu0 %v412
      %1084 = vmatprep.subr.mxu0 0.0
      %1085 = vmatpush1.msra.mxu0 %v413
      %1086 = vmatprep.subr.mxu0 0.0
      %1087 = vmatpush1.msra.mxu0 %v414
      %1088 = vmatprep.subr.mxu0 0.0
      %1089 = vmatpush1.msra.mxu0 %v415
      %1090 = vmatprep.subr.mxu0 0.0
      %1091 = vmatpush1.msra.mxu0 %v416
      %1092 = vmatprep.subr.mxu0 0.0
      %1093 = vmatpush1.msra.mxu0 %v417
      %1094 = vmatprep.subr.mxu0 0.0
      %1095 = vmatpush1.msra.mxu0 %v418
      %1096 = vmatprep.subr.mxu0 0.0
      %1097 = vmatpush1.msra.mxu0 %v419
      %1098 = vmatprep.subr.mxu0 0.0
      %1099 = vmatpush1.msra.mxu0 %v420
      %1100 = vmatprep.subr.mxu0 0.0
      %1101 = vmatpush1.msra.mxu0 %v421
      %1102 = vmatprep.subr.mxu0 0.0
      %1103 = vmatpush1.msra.mxu0 %v422
      %1104 = vmatprep.subr.mxu0 0.0
      %1105 = vmatpush1.msra.mxu0 %v423
      %1106 = vmatprep.subr.mxu0 0.0
      %1107 = vmatpush1.msra.mxu0 %v424
      %1108 = vmatprep.subr.mxu0 0.0
      %1109 = vmatpush1.msra.mxu0 %v425
      %1110 = vmatprep.subr.mxu0 0.0
      %1111 = vmatpush1.msra.mxu0 %v426
      %1112 = vmatprep.subr.mxu0 0.0
      %1113 = vmatpush1.msra.mxu0 %v427
      %1114 = vmatprep.subr.mxu0 0.0
      %1115 = vmatpush1.msra.mxu0 %v428
      %1116 = vmatprep.subr.mxu0 0.0
      %1117 = vmatpush1.msra.mxu0 %v429
      %1118 = vmatprep.subr.mxu0 0.0
      %1119 = vmatpush1.msra.mxu0 %v430
      %1120 = vmatprep.subr.mxu0 0.0
      %1121 = vmatpush1.msra.mxu0 %v431
      %1122 = vmatprep.subr.mxu0 0.0
      %1123 = vmatpush1.msra.mxu0 %v432
      %1124 = vmatprep.subr.mxu0 0.0
      %1125 = vmatpush1.msra.mxu0 %v433
      %1126 = vmatprep.subr.mxu0 0.0
      %1127 = vmatpush1.msra.mxu0 %v434
      %1128 = vmatprep.subr.mxu0 0.0
      %1129 = vmatpush1.msra.mxu0 %v435
      %1130 = vmatprep.subr.mxu0 0.0
      %1131 = vmatpush1.msra.mxu0 %v436
      %1132 = vmatprep.subr.mxu0 0.0
      %1133 = vmatpush1.msra.mxu0 %v437
      %1134 = vmatprep.subr.mxu0 0.0
      %1135 = vmatpush1.msra.mxu0 %v438
      %1136 = vmatprep.subr.mxu0 0.0
      %1137 = vmatpush1.msra.mxu0 %v439
      %1138 = vmatprep.subr.mxu0 0.0
      %1139 = vmatpush1.msra.mxu0 %v440
      %1140 = vmatprep.subr.mxu0 0.0
      %1141 = vmatpush1.msra.mxu0 %v441
      %1142 = vmatprep.subr.mxu0 0.0
      %1143 = vmatpush1.msra.mxu0 %v442
      %1144 = vmatprep.mubr.f32.mxu0 %v350
      %1145 = vmatmul.mubr.f32.gmra.mrb[0].mxu0 %v349
      %v1146 = vpop.f32.mrb[0].mxu0
      %v1147 = vadd.f32 %v1042, %v1146
      %v1148 = vpop.f32.mrb[0].mxu0
      %1149 = vmatprep.mubr.f32.mxu0 %v354
      %1150 = vmatmul.mubr.f32.gmra.mrb[0].mxu0 %v353
      %v1151 = vpop.f32.mrb[0].mxu0
      %v1152 = vadd.f32 %v1047, %v1151
      %v1153 = vpop.f32.mrb[0].mxu0
      %1154 = vmatprep.mubr.f32.mxu0 %v358
      %1155 = vmatmul.mubr.f32.gmra.mrb[0].mxu0 %v357
      %v1156 = vpop.f32.mrb[0].mxu0
      %v1157 = vadd.f32 %v1052, %v1156
      %v1158 = vpop.f32.mrb[0].mxu0
      %1159 = vmatprep.mubr.f32.mxu0 %v362
      %1160 = vmatmul.mubr.f32.gmra.mrb[0].mxu0 %v361
      %v1161 = vpop.f32.mrb[0].mxu0
      %v1162 = vadd.f32 %v1057, %v1161
      %v1163 = vpop.f32.mrb[0].mxu0
      %1164 = vmatprep.mubr.f32.mxu0 %v366
      %1165 = vmatmul.mubr.f32.gmra.mrb[0].mxu0 %v365
      %v1166 = vpop.f32.mrb[0].mxu0
      %v1167 = vadd.f32 %v1062, %v1166
      %v1168 = vpop.f32.mrb[0].mxu0
      %1169 = vmatprep.mubr.f32.mxu0 %v370
      %1170 = vmatmul.mubr.f32.gmra.mrb[0].mxu0 %v369
      %v1171 = vpop.f32.mrb[0].mxu0
      %v1172 = vadd.f32 %v1067, %v1171
      %v1173 = vpop.f32.mrb[0].mxu0
      %1174 = vmatprep.mubr.f32.mxu0 %v374
      %1175 = vmatmul.mubr.f32.gmra.mrb[0].mxu0 %v373
      %v1176 = vpop.f32.mrb[0].mxu0
      %v1177 = vadd.f32 %v1072, %v1176
      %v1178 = vpop.f32.mrb[0].mxu0
      %1179 = vmatprep.mubr.f32.mxu0 %v378
      %1180 = vmatmul.mubr.f32.gmra.mrb[0].mxu0 %v377
      %v1181 = vpop.f32.mrb[0].mxu0
      %v1182 = vadd.f32 %v1077, %v1181
      %v1183 = vpop.f32.mrb[0].mxu0
      %1184 = vdwg.mxu0
      %s1185 = scalar_lea.vmem %s338, 64
      %v1186 = vld [vmem:[%s1185] sm:$0xff]
      %v1187 = vld [vmem:[%s1185 + $0x8] sm:$0xff]
      %v1188 = vld [vmem:[%s1185 + $0x10] sm:$0xff]
      %v1189 = vld [vmem:[%s1185 + $0x18] sm:$0xff]
      %v1190 = vld [vmem:[%s1185 + $0x40] sm:$0xff]
      %v1191 = vld [vmem:[%s1185 + $0x48] sm:$0xff]
      %v1192 = vld [vmem:[%s1185 + $0x50] sm:$0xff]
      %v1193 = vld [vmem:[%s1185 + $0x58] sm:$0xff]
      %v1194 = vld [vmem:[%s1185 + $0x80] sm:$0xff]
      %v1195 = vld [vmem:[%s1185 + $0x88] sm:$0xff]
      %v1196 = vld [vmem:[%s1185 + $0x90] sm:$0xff]
      %v1197 = vld [vmem:[%s1185 + $0x98] sm:$0xff]
      %v1198 = vld [vmem:[%s1185 + $0xc0] sm:$0xff]
      %v1199 = vld [vmem:[%s1185 + $0xc8] sm:$0xff]
      %v1200 = vld [vmem:[%s1185 + $0xd0] sm:$0xff]
      %v1201 = vld [vmem:[%s1185 + $0xd8] sm:$0xff]
      %v1202 = vld [vmem:[%s1185 + $0x100] sm:$0xff]
      %v1203 = vld [vmem:[%s1185 + $0x108] sm:$0xff]
      %v1204 = vld [vmem:[%s1185 + $0x110] sm:$0xff]
      %v1205 = vld [vmem:[%s1185 + $0x118] sm:$0xff]
      %v1206 = vld [vmem:[%s1185 + $0x140] sm:$0xff]
      %v1207 = vld [vmem:[%s1185 + $0x148] sm:$0xff]
      %v1208 = vld [vmem:[%s1185 + $0x150] sm:$0xff]
      %v1209 = vld [vmem:[%s1185 + $0x158] sm:$0xff]
      %v1210 = vld [vmem:[%s1185 + $0x180] sm:$0xff]
      %v1211 = vld [vmem:[%s1185 + $0x188] sm:$0xff]
      %v1212 = vld [vmem:[%s1185 + $0x190] sm:$0xff]
      %v1213 = vld [vmem:[%s1185 + $0x198] sm:$0xff]
      %v1214 = vld [vmem:[%s1185 + $0x1c0] sm:$0xff]
      %v1215 = vld [vmem:[%s1185 + $0x1c8] sm:$0xff]
      %v1216 = vld [vmem:[%s1185 + $0x1d0] sm:$0xff]
      %v1217 = vld [vmem:[%s1185 + $0x1d8] sm:$0xff]
      %s1218 = scalar_lea.vmem %s1, 1024
      %v1219 = vld [vmem:[%s1218] sm:$0xff]
      %v1220 = vld [vmem:[%s1218 + $0x8] sm:$0xff]
      %v1221 = vld [vmem:[%s1218 + $0x10] sm:$0xff]
      %v1222 = vld [vmem:[%s1218 + $0x18] sm:$0xff]
      %v1223 = vld [vmem:[%s1218 + $0x20] sm:$0xff]
      %v1224 = vld [vmem:[%s1218 + $0x28] sm:$0xff]
      %v1225 = vld [vmem:[%s1218 + $0x30] sm:$0xff]
      %v1226 = vld [vmem:[%s1218 + $0x38] sm:$0xff]
      %v1227 = vld [vmem:[%s1218 + $0x40] sm:$0xff]
      %v1228 = vld [vmem:[%s1218 + $0x48] sm:$0xff]
      %v1229 = vld [vmem:[%s1218 + $0x50] sm:$0xff]
      %v1230 = vld [vmem:[%s1218 + $0x58] sm:$0xff]
      %v1231 = vld [vmem:[%s1218 + $0x60] sm:$0xff]
      %v1232 = vld [vmem:[%s1218 + $0x68] sm:$0xff]
      %v1233 = vld [vmem:[%s1218 + $0x70] sm:$0xff]
      %v1234 = vld [vmem:[%s1218 + $0x78] sm:$0xff]
      %v1235 = vld [vmem:[%s1218 + $0x80] sm:$0xff]
      %v1236 = vld [vmem:[%s1218 + $0x88] sm:$0xff]
      %v1237 = vld [vmem:[%s1218 + $0x90] sm:$0xff]
      %v1238 = vld [vmem:[%s1218 + $0x98] sm:$0xff]
      %v1239 = vld [vmem:[%s1218 + $0xa0] sm:$0xff]
      %v1240 = vld [vmem:[%s1218 + $0xa8] sm:$0xff]
      %v1241 = vld [vmem:[%s1218 + $0xb0] sm:$0xff]
      %v1242 = vld [vmem:[%s1218 + $0xb8] sm:$0xff]
      %v1243 = vld [vmem:[%s1218 + $0xc0] sm:$0xff]
      %v1244 = vld [vmem:[%s1218 + $0xc8] sm:$0xff]
      %v1245 = vld [vmem:[%s1218 + $0xd0] sm:$0xff]
      %v1246 = vld [vmem:[%s1218 + $0xd8] sm:$0xff]
      %v1247 = vld [vmem:[%s1218 + $0xe0] sm:$0xff]
      %v1248 = vld [vmem:[%s1218 + $0xe8] sm:$0xff]
      %v1249 = vld [vmem:[%s1218 + $0xf0] sm:$0xff]
      %v1250 = vld [vmem:[%s1218 + $0xf8] sm:$0xff]
      %v1251 = vld [vmem:[%s1218 + $0x100] sm:$0xff]
      %v1252 = vld [vmem:[%s1218 + $0x108] sm:$0xff]
      %v1253 = vld [vmem:[%s1218 + $0x110] sm:$0xff]
      %v1254 = vld [vmem:[%s1218 + $0x118] sm:$0xff]
      %v1255 = vld [vmem:[%s1218 + $0x120] sm:$0xff]
      %v1256 = vld [vmem:[%s1218 + $0x128] sm:$0xff]
      %v1257 = vld [vmem:[%s1218 + $0x130] sm:$0xff]
      %v1258 = vld [vmem:[%s1218 + $0x138] sm:$0xff]
      %v1259 = vld [vmem:[%s1218 + $0x140] sm:$0xff]
      %v1260 = vld [vmem:[%s1218 + $0x148] sm:$0xff]
      %v1261 = vld [vmem:[%s1218 + $0x150] sm:$0xff]
      %v1262 = vld [vmem:[%s1218 + $0x158] sm:$0xff]
      %v1263 = vld [vmem:[%s1218 + $0x160] sm:$0xff]
      %v1264 = vld [vmem:[%s1218 + $0x168] sm:$0xff]
      %v1265 = vld [vmem:[%s1218 + $0x170] sm:$0xff]
      %v1266 = vld [vmem:[%s1218 + $0x178] sm:$0xff]
      %v1267 = vld [vmem:[%s1218 + $0x180] sm:$0xff]
      %v1268 = vld [vmem:[%s1218 + $0x188] sm:$0xff]
      %v1269 = vld [vmem:[%s1218 + $0x190] sm:$0xff]
      %v1270 = vld [vmem:[%s1218 + $0x198] sm:$0xff]
      %v1271 = vld [vmem:[%s1218 + $0x1a0] sm:$0xff]
      %v1272 = vld [vmem:[%s1218 + $0x1a8] sm:$0xff]
      %v1273 = vld [vmem:[%s1218 + $0x1b0] sm:$0xff]
      %v1274 = vld [vmem:[%s1218 + $0x1b8] sm:$0xff]
      %v1275 = vld [vmem:[%s1218 + $0x1c0] sm:$0xff]
      %v1276 = vld [vmem:[%s1218 + $0x1c8] sm:$0xff]
      %v1277 = vld [vmem:[%s1218 + $0x1d0] sm:$0xff]
      %v1278 = vld [vmem:[%s1218 + $0x1d8] sm:$0xff]
      %v1279 = vld [vmem:[%s1218 + $0x1e0] sm:$0xff]
      %v1280 = vld [vmem:[%s1218 + $0x1e8] sm:$0xff]
      %v1281 = vld [vmem:[%s1218 + $0x1f0] sm:$0xff]
      %v1282 = vld [vmem:[%s1218 + $0x1f8] sm:$0xff]
      %1283 = vmatprep.subr.mxu0 0.0
      %1284 = vmatpush1.msra.mxu0 %v1219
      %1285 = vmatprep.subr.mxu0 0.0
      %1286 = vmatpush1.msra.mxu0 %v1220
      %1287 = vmatprep.subr.mxu0 0.0
      %1288 = vmatpush1.msra.mxu0 %v1221
      %1289 = vmatprep.subr.mxu0 0.0
      %1290 = vmatpush1.msra.mxu0 %v1222
      %1291 = vmatprep.subr.mxu0 0.0
      %1292 = vmatpush1.msra.mxu0 %v1223
      %1293 = vmatprep.subr.mxu0 0.0
      %1294 = vmatpush1.msra.mxu0 %v1224
      %1295 = vmatprep.subr.mxu0 0.0
      %1296 = vmatpush1.msra.mxu0 %v1225
      %1297 = vmatprep.subr.mxu0 0.0
      %1298 = vmatpush1.msra.mxu0 %v1226
      %1299 = vmatprep.subr.mxu0 0.0
      %1300 = vmatpush1.msra.mxu0 %v1227
      %1301 = vmatprep.subr.mxu0 0.0
      %1302 = vmatpush1.msra.mxu0 %v1228
      %1303 = vmatprep.subr.mxu0 0.0
      %1304 = vmatpush1.msra.mxu0 %v1229
      %1305 = vmatprep.subr.mxu0 0.0
      %1306 = vmatpush1.msra.mxu0 %v1230
      %1307 = vmatprep.subr.mxu0 0.0
      %1308 = vmatpush1.msra.mxu0 %v1231
      %1309 = vmatprep.subr.mxu0 0.0
      %1310 = vmatpush1.msra.mxu0 %v1232
      %1311 = vmatprep.subr.mxu0 0.0
      %1312 = vmatpush1.msra.mxu0 %v1233
      %1313 = vmatprep.subr.mxu0 0.0
      %1314 = vmatpush1.msra.mxu0 %v1234
      %1315 = vmatprep.subr.mxu0 0.0
      %1316 = vmatpush1.msra.mxu0 %v1235
      %1317 = vmatprep.subr.mxu0 0.0
      %1318 = vmatpush1.msra.mxu0 %v1236
      %1319 = vmatprep.subr.mxu0 0.0
      %1320 = vmatpush1.msra.mxu0 %v1237
      %1321 = vmatprep.subr.mxu0 0.0
      %1322 = vmatpush1.msra.mxu0 %v1238
      %1323 = vmatprep.subr.mxu0 0.0
      %1324 = vmatpush1.msra.mxu0 %v1239
      %1325 = vmatprep.subr.mxu0 0.0
      %1326 = vmatpush1.msra.mxu0 %v1240
      %1327 = vmatprep.subr.mxu0 0.0
      %1328 = vmatpush1.msra.mxu0 %v1241
      %1329 = vmatprep.subr.mxu0 0.0
      %1330 = vmatpush1.msra.mxu0 %v1242
      %1331 = vmatprep.subr.mxu0 0.0
      %1332 = vmatpush1.msra.mxu0 %v1243
      %1333 = vmatprep.subr.mxu0 0.0
      %1334 = vmatpush1.msra.mxu0 %v1244
      %1335 = vmatprep.subr.mxu0 0.0
      %1336 = vmatpush1.msra.mxu0 %v1245
      %1337 = vmatprep.subr.mxu0 0.0
      %1338 = vmatpush1.msra.mxu0 %v1246
      %1339 = vmatprep.subr.mxu0 0.0
      %1340 = vmatpush1.msra.mxu0 %v1247
      %1341 = vmatprep.subr.mxu0 0.0
      %1342 = vmatpush1.msra.mxu0 %v1248
      %1343 = vmatprep.subr.mxu0 0.0
      %1344 = vmatpush1.msra.mxu0 %v1249
      %1345 = vmatprep.subr.mxu0 0.0
      %1346 = vmatpush1.msra.mxu0 %v1250
      %1347 = vmatprep.mubr.f32.mxu0 %v1187
      %1348 = vmatmul.mubr.f32.gmra.mrb[0].mxu0 %v1186
      %v1349 = vpop.f32.mrb[0].mxu0
      %v1350 = vadd.f32 0.0, %v1349
      %v1351 = vpop.f32.mrb[0].mxu0
      %1352 = vmatprep.mubr.f32.mxu0 %v1191
      %1353 = vmatmul.mubr.f32.gmra.mrb[0].mxu0 %v1190
      %v1354 = vpop.f32.mrb[0].mxu0
      %v1355 = vadd.f32 0.0, %v1354
      %v1356 = vpop.f32.mrb[0].mxu0
      %1357 = vmatprep.mubr.f32.mxu0 %v1195
      %1358 = vmatmul.mubr.f32.gmra.mrb[0].mxu0 %v1194
      %v1359 = vpop.f32.mrb[0].mxu0
      %v1360 = vadd.f32 0.0, %v1359
      %v1361 = vpop.f32.mrb[0].mxu0
      %1362 = vmatprep.mubr.f32.mxu0 %v1199
      %1363 = vmatmul.mubr.f32.gmra.mrb[0].mxu0 %v1198
      %v1364 = vpop.f32.mrb[0].mxu0
      %v1365 = vadd.f32 0.0, %v1364
      %v1366 = vpop.f32.mrb[0].mxu0
      %1367 = vmatprep.mubr.f32.mxu0 %v1203
      %1368 = vmatmul.mubr.f32.gmra.mrb[0].mxu0 %v1202
      %v1369 = vpop.f32.mrb[0].mxu0
      %v1370 = vadd.f32 0.0, %v1369
      %v1371 = vpop.f32.mrb[0].mxu0
      %1372 = vmatprep.mubr.f32.mxu0 %v1207
      %1373 = vmatmul.mubr.f32.gmra.mrb[0].mxu0 %v1206
      %v1374 = vpop.f32.mrb[0].mxu0
      %v1375 = vadd.f32 0.0, %v1374
      %v1376 = vpop.f32.mrb[0].mxu0
      %1377 = vmatprep.mubr.f32.mxu0 %v1211
      %1378 = vmatmul.mubr.f32.gmra.mrb[0].mxu0 %v1210
      %v1379 = vpop.f32.mrb[0].mxu0
      %v1380 = vadd.f32 0.0, %v1379
      %v1381 = vpop.f32.mrb[0].mxu0
      %1382 = vmatprep.mubr.f32.mxu0 %v1215
      %1383 = vmatmul.mubr.f32.gmra.mrb[0].mxu0 %v1214
      %v1384 = vpop.f32.mrb[0].mxu0
      %v1385 = vadd.f32 0.0, %v1384
      %v1386 = vpop.f32.mrb[0].mxu0
      %1387 = vdwg.mxu0
      %1388 = vmatprep.subr.mxu0 0.0
      %1389 = vmatpush1.msra.mxu0 %v1251
      %1390 = vmatprep.subr.mxu0 0.0
      %1391 = vmatpush1.msra.mxu0 %v1252
      %1392 = vmatprep.subr.mxu0 0.0
      %1393 = vmatpush1.msra.mxu0 %v1253
      %1394 = vmatprep.subr.mxu0 0.0
      %1395 = vmatpush1.msra.mxu0 %v1254
      %1396 = vmatprep.subr.mxu0 0.0
      %1397 = vmatpush1.msra.mxu0 %v1255
      %1398 = vmatprep.subr.mxu0 0.0
      %1399 = vmatpush1.msra.mxu0 %v1256
      %1400 = vmatprep.subr.mxu0 0.0
      %1401 = vmatpush1.msra.mxu0 %v1257
      %1402 = vmatprep.subr.mxu0 0.0
      %1403 = vmatpush1.msra.mxu0 %v1258
      %1404 = vmatprep.subr.mxu0 0.0
      %1405 = vmatpush1.msra.mxu0 %v1259
      %1406 = vmatprep.subr.mxu0 0.0
      %1407 = vmatpush1.msra.mxu0 %v1260
      %1408 = vmatprep.subr.mxu0 0.0
      %1409 = vmatpush1.msra.mxu0 %v1261
      %1410 = vmatprep.subr.mxu0 0.0
      %1411 = vmatpush1.msra.mxu0 %v1262
      %1412 = vmatprep.subr.mxu0 0.0
      %1413 = vmatpush1.msra.mxu0 %v1263
      %1414 = vmatprep.subr.mxu0 0.0
      %1415 = vmatpush1.msra.mxu0 %v1264
      %1416 = vmatprep.subr.mxu0 0.0
      %1417 = vmatpush1.msra.mxu0 %v1265
      %1418 = vmatprep.subr.mxu0 0.0
      %1419 = vmatpush1.msra.mxu0 %v1266
      %1420 = vmatprep.subr.mxu0 0.0
      %1421 = vmatpush1.msra.mxu0 %v1267
      %1422 = vmatprep.subr.mxu0 0.0
      %1423 = vmatpush1.msra.mxu0 %v1268
      %1424 = vmatprep.subr.mxu0 0.0
      %1425 = vmatpush1.msra.mxu0 %v1269
      %1426 = vmatprep.subr.mxu0 0.0
      %1427 = vmatpush1.msra.mxu0 %v1270
      %1428 = vmatprep.subr.mxu0 0.0
      %1429 = vmatpush1.msra.mxu0 %v1271
      %1430 = vmatprep.subr.mxu0 0.0
      %1431 = vmatpush1.msra.mxu0 %v1272
      %1432 = vmatprep.subr.mxu0 0.0
      %1433 = vmatpush1.msra.mxu0 %v1273
      %1434 = vmatprep.subr.mxu0 0.0
      %1435 = vmatpush1.msra.mxu0 %v1274
      %1436 = vmatprep.subr.mxu0 0.0
      %1437 = vmatpush1.msra.mxu0 %v1275
      %1438 = vmatprep.subr.mxu0 0.0
      %1439 = vmatpush1.msra.mxu0 %v1276
      %1440 = vmatprep.subr.mxu0 0.0
      %1441 = vmatpush1.msra.mxu0 %v1277
      %1442 = vmatprep.subr.mxu0 0.0
      %1443 = vmatpush1.msra.mxu0 %v1278
      %1444 = vmatprep.subr.mxu0 0.0
      %1445 = vmatpush1.msra.mxu0 %v1279
      %1446 = vmatprep.subr.mxu0 0.0
      %1447 = vmatpush1.msra.mxu0 %v1280
      %1448 = vmatprep.subr.mxu0 0.0
      %1449 = vmatpush1.msra.mxu0 %v1281
      %1450 = vmatprep.subr.mxu0 0.0
      %1451 = vmatpush1.msra.mxu0 %v1282
      %1452 = vmatprep.mubr.f32.mxu0 %v1189
      %1453 = vmatmul.mubr.f32.gmra.mrb[0].mxu0 %v1188
      %v1454 = vpop.f32.mrb[0].mxu0
      %v1455 = vadd.f32 %v1350, %v1454
      %v1456 = vpop.f32.mrb[0].mxu0
      %1457 = vmatprep.mubr.f32.mxu0 %v1193
      %1458 = vmatmul.mubr.f32.gmra.mrb[0].mxu0 %v1192
      %v1459 = vpop.f32.mrb[0].mxu0
      %v1460 = vadd.f32 %v1355, %v1459
      %v1461 = vpop.f32.mrb[0].mxu0
      %1462 = vmatprep.mubr.f32.mxu0 %v1197
      %1463 = vmatmul.mubr.f32.gmra.mrb[0].mxu0 %v1196
      %v1464 = vpop.f32.mrb[0].mxu0
      %v1465 = vadd.f32 %v1360, %v1464
      %v1466 = vpop.f32.mrb[0].mxu0
      %1467 = vmatprep.mubr.f32.mxu0 %v1201
      %1468 = vmatmul.mubr.f32.gmra.mrb[0].mxu0 %v1200
      %v1469 = vpop.f32.mrb[0].mxu0
      %v1470 = vadd.f32 %v1365, %v1469
      %v1471 = vpop.f32.mrb[0].mxu0
      %1472 = vmatprep.mubr.f32.mxu0 %v1205
      %1473 = vmatmul.mubr.f32.gmra.mrb[0].mxu0 %v1204
      %v1474 = vpop.f32.mrb[0].mxu0
      %v1475 = vadd.f32 %v1370, %v1474
      %v1476 = vpop.f32.mrb[0].mxu0
      %1477 = vmatprep.mubr.f32.mxu0 %v1209
      %1478 = vmatmul.mubr.f32.gmra.mrb[0].mxu0 %v1208
      %v1479 = vpop.f32.mrb[0].mxu0
      %v1480 = vadd.f32 %v1375, %v1479
      %v1481 = vpop.f32.mrb[0].mxu0
      %1482 = vmatprep.mubr.f32.mxu0 %v1213
      %1483 = vmatmul.mubr.f32.gmra.mrb[0].mxu0 %v1212
      %v1484 = vpop.f32.mrb[0].mxu0
      %v1485 = vadd.f32 %v1380, %v1484
      %v1486 = vpop.f32.mrb[0].mxu0
      %1487 = vmatprep.mubr.f32.mxu0 %v1217
      %1488 = vmatmul.mubr.f32.gmra.mrb[0].mxu0 %v1216
      %v1489 = vpop.f32.mrb[0].mxu0
      %v1490 = vadd.f32 %v1385, %v1489
      %v1491 = vpop.f32.mrb[0].mxu0
      %1492 = vdwg.mxu0
      %v1493 = vadd.f32 %v1147, %v1455
      %v1494 = vadd.f32 %v1152, %v1460
      %v1495 = vadd.f32 %v1157, %v1465
      %v1496 = vadd.f32 %v1162, %v1470
      %v1497 = vadd.f32 %v1167, %v1475
      %v1498 = vadd.f32 %v1172, %v1480
      %v1499 = vadd.f32 %v1177, %v1485
      %v1500 = vadd.f32 %v1182, %v1490
      %v1501 = vld [vmem:[%s1185] sm:$0xfe]
      %v1502 = vld [vmem:[%s1185 + $0x8] sm:$0xfe]
      %v1503 = vld [vmem:[%s1185 + $0x10] sm:$0xfe]
      %v1504 = vld [vmem:[%s1185 + $0x18] sm:$0xfe]
      %v1505 = vld [vmem:[%s1185 + $0x20] sm:$0x1]
      %v1506 = vld [vmem:[%s1185 + $0x28] sm:$0x1]
      %v1507 = vld [vmem:[%s1185 + $0x30] sm:$0x1]
      %v1508 = vld [vmem:[%s1185 + $0x38] sm:$0x1]
      %v1509 = vld [vmem:[%s1185 + $0x40] sm:$0xfe]
      %v1510 = vld [vmem:[%s1185 + $0x48] sm:$0xfe]
      %v1511 = vld [vmem:[%s1185 + $0x50] sm:$0xfe]
      %v1512 = vld [vmem:[%s1185 + $0x58] sm:$0xfe]
      %v1513 = vld [vmem:[%s1185 + $0x60] sm:$0x1]
      %v1514 = vld [vmem:[%s1185 + $0x68] sm:$0x1]
      %v1515 = vld [vmem:[%s1185 + $0x70] sm:$0x1]
      %v1516 = vld [vmem:[%s1185 + $0x78] sm:$0x1]
      %v1517 = vld [vmem:[%s1185 + $0x80] sm:$0xfe]
      %v1518 = vld [vmem:[%s1185 + $0x88] sm:$0xfe]
      %v1519 = vld [vmem:[%s1185 + $0x90] sm:$0xfe]
      %v1520 = vld [vmem:[%s1185 + $0x98] sm:$0xfe]
      %v1521 = vld [vmem:[%s1185 + $0xa0] sm:$0x1]
      %v1522 = vld [vmem:[%s1185 + $0xa8] sm:$0x1]
      %v1523 = vld [vmem:[%s1185 + $0xb0] sm:$0x1]
      %v1524 = vld [vmem:[%s1185 + $0xb8] sm:$0x1]
      %v1525 = vld [vmem:[%s1185 + $0xc0] sm:$0xfe]
      %v1526 = vld [vmem:[%s1185 + $0xc8] sm:$0xfe]
      %v1527 = vld [vmem:[%s1185 + $0xd0] sm:$0xfe]
      %v1528 = vld [vmem:[%s1185 + $0xd8] sm:$0xfe]
      %v1529 = vld [vmem:[%s1185 + $0xe0] sm:$0x1]
      %v1530 = vld [vmem:[%s1185 + $0xe8] sm:$0x1]
      %v1531 = vld [vmem:[%s1185 + $0xf0] sm:$0x1]
      %v1532 = vld [vmem:[%s1185 + $0xf8] sm:$0x1]
      %v1533 = vld [vmem:[%s1185 + $0x100] sm:$0xfe]
      %v1534 = vld [vmem:[%s1185 + $0x108] sm:$0xfe]
      %v1535 = vld [vmem:[%s1185 + $0x110] sm:$0xfe]
      %v1536 = vld [vmem:[%s1185 + $0x118] sm:$0xfe]
      %v1537 = vld [vmem:[%s1185 + $0x120] sm:$0x1]
      %v1538 = vld [vmem:[%s1185 + $0x128] sm:$0x1]
      %v1539 = vld [vmem:[%s1185 + $0x130] sm:$0x1]
      %v1540 = vld [vmem:[%s1185 + $0x138] sm:$0x1]
      %v1541 = vld [vmem:[%s1185 + $0x140] sm:$0xfe]
      %v1542 = vld [vmem:[%s1185 + $0x148] sm:$0xfe]
      %v1543 = vld [vmem:[%s1185 + $0x150] sm:$0xfe]
      %v1544 = vld [vmem:[%s1185 + $0x158] sm:$0xfe]
      %v1545 = vld [vmem:[%s1185 + $0x160] sm:$0x1]
      %v1546 = vld [vmem:[%s1185 + $0x168] sm:$0x1]
      %v1547 = vld [vmem:[%s1185 + $0x170] sm:$0x1]
      %v1548 = vld [vmem:[%s1185 + $0x178] sm:$0x1]
      %v1549 = vld [vmem:[%s1185 + $0x180] sm:$0xfe]
      %v1550 = vld [vmem:[%s1185 + $0x188] sm:$0xfe]
      %v1551 = vld [vmem:[%s1185 + $0x190] sm:$0xfe]
      %v1552 = vld [vmem:[%s1185 + $0x198] sm:$0xfe]
      %v1553 = vld [vmem:[%s1185 + $0x1a0] sm:$0x1]
      %v1554 = vld [vmem:[%s1185 + $0x1a8] sm:$0x1]
      %v1555 = vld [vmem:[%s1185 + $0x1b0] sm:$0x1]
      %v1556 = vld [vmem:[%s1185 + $0x1b8] sm:$0x1]
      %v1557 = vld [vmem:[%s1185 + $0x1c0] sm:$0xfe]
      %v1558 = vld [vmem:[%s1185 + $0x1c8] sm:$0xfe]
      %v1559 = vld [vmem:[%s1185 + $0x1d0] sm:$0xfe]
      %v1560 = vld [vmem:[%s1185 + $0x1d8] sm:$0xfe]
      %v1561 = vld [vmem:[%s1185 + $0x1e0] sm:$0x1]
      %v1562 = vld [vmem:[%s1185 + $0x1e8] sm:$0x1]
      %v1563 = vld [vmem:[%s1185 + $0x1f0] sm:$0x1]
      %v1564 = vld [vmem:[%s1185 + $0x1f8] sm:$0x1]
      %v1629 = vrot.slane %v1501, 1
      %v1630 = vrot.slane %v1505, 1
      %v1631 = vsel %vm571, %v1629, %v1630
      %v1632 = vrot.slane %v1502, 1
      %v1633 = vrot.slane %v1506, 1
      %v1634 = vsel %vm571, %v1632, %v1633
      %v1635 = vrot.slane %v1503, 1
      %v1636 = vrot.slane %v1507, 1
      %v1637 = vsel %vm571, %v1635, %v1636
      %v1638 = vrot.slane %v1504, 1
      %v1639 = vrot.slane %v1508, 1
      %v1640 = vsel %vm571, %v1638, %v1639
      %v1641 = vrot.slane %v1509, 1
      %v1642 = vrot.slane %v1513, 1
      %v1643 = vsel %vm571, %v1641, %v1642
      %v1644 = vrot.slane %v1510, 1
      %v1645 = vrot.slane %v1514, 1
      %v1646 = vsel %vm571, %v1644, %v1645
      %v1647 = vrot.slane %v1511, 1
      %v1648 = vrot.slane %v1515, 1
      %v1649 = vsel %vm571, %v1647, %v1648
      %v1650 = vrot.slane %v1512, 1
      %v1651 = vrot.slane %v1516, 1
      %v1652 = vsel %vm571, %v1650, %v1651
      %v1653 = vrot.slane %v1517, 1
      %v1654 = vrot.slane %v1521, 1
      %v1655 = vsel %vm571, %v1653, %v1654
      %v1656 = vrot.slane %v1518, 1
      %v1657 = vrot.slane %v1522, 1
      %v1658 = vsel %vm571, %v1656, %v1657
      %v1659 = vrot.slane %v1519, 1
      %v1660 = vrot.slane %v1523, 1
      %v1661 = vsel %vm571, %v1659, %v1660
      %v1662 = vrot.slane %v1520, 1
      %v1663 = vrot.slane %v1524, 1
      %v1664 = vsel %vm571, %v1662, %v1663
      %v1665 = vrot.slane %v1525, 1
      %v1666 = vrot.slane %v1529, 1
      %v1667 = vsel %vm571, %v1665, %v1666
      %v1668 = vrot.slane %v1526, 1
      %v1669 = vrot.slane %v1530, 1
      %v1670 = vsel %vm571, %v1668, %v1669
      %v1671 = vrot.slane %v1527, 1
      %v1672 = vrot.slane %v1531, 1
      %v1673 = vsel %vm571, %v1671, %v1672
      %v1674 = vrot.slane %v1528, 1
      %v1675 = vrot.slane %v1532, 1
      %v1676 = vsel %vm571, %v1674, %v1675
      %v1677 = vrot.slane %v1533, 1
      %v1678 = vrot.slane %v1537, 1
      %v1679 = vsel %vm571, %v1677, %v1678
      %v1680 = vrot.slane %v1534, 1
      %v1681 = vrot.slane %v1538, 1
      %v1682 = vsel %vm571, %v1680, %v1681
      %v1683 = vrot.slane %v1535, 1
      %v1684 = vrot.slane %v1539, 1
      %v1685 = vsel %vm571, %v1683, %v1684
      %v1686 = vrot.slane %v1536, 1
      %v1687 = vrot.slane %v1540, 1
      %v1688 = vsel %vm571, %v1686, %v1687
      %v1689 = vrot.slane %v1541, 1
      %v1690 = vrot.slane %v1545, 1
      %v1691 = vsel %vm571, %v1689, %v1690
      %v1692 = vrot.slane %v1542, 1
      %v1693 = vrot.slane %v1546, 1
      %v1694 = vsel %vm571, %v1692, %v1693
      %v1695 = vrot.slane %v1543, 1
      %v1696 = vrot.slane %v1547, 1
      %v1697 = vsel %vm571, %v1695, %v1696
      %v1698 = vrot.slane %v1544, 1
      %v1699 = vrot.slane %v1548, 1
      %v1700 = vsel %vm571, %v1698, %v1699
      %v1701 = vrot.slane %v1549, 1
      %v1702 = vrot.slane %v1553, 1
      %v1703 = vsel %vm571, %v1701, %v1702
      %v1704 = vrot.slane %v1550, 1
      %v1705 = vrot.slane %v1554, 1
      %v1706 = vsel %vm571, %v1704, %v1705
      %v1707 = vrot.slane %v1551, 1
      %v1708 = vrot.slane %v1555, 1
      %v1709 = vsel %vm571, %v1707, %v1708
      %v1710 = vrot.slane %v1552, 1
      %v1711 = vrot.slane %v1556, 1
      %v1712 = vsel %vm571, %v1710, %v1711
      %v1713 = vrot.slane %v1557, 1
      %v1714 = vrot.slane %v1561, 1
      %v1715 = vsel %vm571, %v1713, %v1714
      %v1716 = vrot.slane %v1558, 1
      %v1717 = vrot.slane %v1562, 1
      %v1718 = vsel %vm571, %v1716, %v1717
      %v1719 = vrot.slane %v1559, 1
      %v1720 = vrot.slane %v1563, 1
      %v1721 = vsel %vm571, %v1719, %v1720
      %v1722 = vrot.slane %v1560, 1
      %v1723 = vrot.slane %v1564, 1
      %v1724 = vsel %vm571, %v1722, %v1723
      %s1757 = scalar_lea.vmem %s1, 1536
      %v1758 = vld [vmem:[%s1757] sm:$0xff]
      %v1759 = vld [vmem:[%s1757 + $0x8] sm:$0xff]
      %v1760 = vld [vmem:[%s1757 + $0x10] sm:$0xff]
      %v1761 = vld [vmem:[%s1757 + $0x18] sm:$0xff]
      %v1762 = vld [vmem:[%s1757 + $0x20] sm:$0xff]
      %v1763 = vld [vmem:[%s1757 + $0x28] sm:$0xff]
      %v1764 = vld [vmem:[%s1757 + $0x30] sm:$0xff]
      %v1765 = vld [vmem:[%s1757 + $0x38] sm:$0xff]
      %v1766 = vld [vmem:[%s1757 + $0x40] sm:$0xff]
      %v1767 = vld [vmem:[%s1757 + $0x48] sm:$0xff]
      %v1768 = vld [vmem:[%s1757 + $0x50] sm:$0xff]
      %v1769 = vld [vmem:[%s1757 + $0x58] sm:$0xff]
      %v1770 = vld [vmem:[%s1757 + $0x60] sm:$0xff]
      %v1771 = vld [vmem:[%s1757 + $0x68] sm:$0xff]
      %v1772 = vld [vmem:[%s1757 + $0x70] sm:$0xff]
      %v1773 = vld [vmem:[%s1757 + $0x78] sm:$0xff]
      %v1774 = vld [vmem:[%s1757 + $0x80] sm:$0xff]
      %v1775 = vld [vmem:[%s1757 + $0x88] sm:$0xff]
      %v1776 = vld [vmem:[%s1757 + $0x90] sm:$0xff]
      %v1777 = vld [vmem:[%s1757 + $0x98] sm:$0xff]
      %v1778 = vld [vmem:[%s1757 + $0xa0] sm:$0xff]
      %v1779 = vld [vmem:[%s1757 + $0xa8] sm:$0xff]
      %v1780 = vld [vmem:[%s1757 + $0xb0] sm:$0xff]
      %v1781 = vld [vmem:[%s1757 + $0xb8] sm:$0xff]
      %v1782 = vld [vmem:[%s1757 + $0xc0] sm:$0xff]
      %v1783 = vld [vmem:[%s1757 + $0xc8] sm:$0xff]
      %v1784 = vld [vmem:[%s1757 + $0xd0] sm:$0xff]
      %v1785 = vld [vmem:[%s1757 + $0xd8] sm:$0xff]
      %v1786 = vld [vmem:[%s1757 + $0xe0] sm:$0xff]
      %v1787 = vld [vmem:[%s1757 + $0xe8] sm:$0xff]
      %v1788 = vld [vmem:[%s1757 + $0xf0] sm:$0xff]
      %v1789 = vld [vmem:[%s1757 + $0xf8] sm:$0xff]
      %v1790 = vld [vmem:[%s1757 + $0x100] sm:$0xff]
      %v1791 = vld [vmem:[%s1757 + $0x108] sm:$0xff]
      %v1792 = vld [vmem:[%s1757 + $0x110] sm:$0xff]
      %v1793 = vld [vmem:[%s1757 + $0x118] sm:$0xff]
      %v1794 = vld [vmem:[%s1757 + $0x120] sm:$0xff]
      %v1795 = vld [vmem:[%s1757 + $0x128] sm:$0xff]
      %v1796 = vld [vmem:[%s1757 + $0x130] sm:$0xff]
      %v1797 = vld [vmem:[%s1757 + $0x138] sm:$0xff]
      %v1798 = vld [vmem:[%s1757 + $0x140] sm:$0xff]
      %v1799 = vld [vmem:[%s1757 + $0x148] sm:$0xff]
      %v1800 = vld [vmem:[%s1757 + $0x150] sm:$0xff]
      %v1801 = vld [vmem:[%s1757 + $0x158] sm:$0xff]
      %v1802 = vld [vmem:[%s1757 + $0x160] sm:$0xff]
      %v1803 = vld [vmem:[%s1757 + $0x168] sm:$0xff]
      %v1804 = vld [vmem:[%s1757 + $0x170] sm:$0xff]
      %v1805 = vld [vmem:[%s1757 + $0x178] sm:$0xff]
      %v1806 = vld [vmem:[%s1757 + $0x180] sm:$0xff]
      %v1807 = vld [vmem:[%s1757 + $0x188] sm:$0xff]
      %v1808 = vld [vmem:[%s1757 + $0x190] sm:$0xff]
      %v1809 = vld [vmem:[%s1757 + $0x198] sm:$0xff]
      %v1810 = vld [vmem:[%s1757 + $0x1a0] sm:$0xff]
      %v1811 = vld [vmem:[%s1757 + $0x1a8] sm:$0xff]
      %v1812 = vld [vmem:[%s1757 + $0x1b0] sm:$0xff]
      %v1813 = vld [vmem:[%s1757 + $0x1b8] sm:$0xff]
      %v1814 = vld [vmem:[%s1757 + $0x1c0] sm:$0xff]
      %v1815 = vld [vmem:[%s1757 + $0x1c8] sm:$0xff]
      %v1816 = vld [vmem:[%s1757 + $0x1d0] sm:$0xff]
      %v1817 = vld [vmem:[%s1757 + $0x1d8] sm:$0xff]
      %v1818 = vld [vmem:[%s1757 + $0x1e0] sm:$0xff]
      %v1819 = vld [vmem:[%s1757 + $0x1e8] sm:$0xff]
      %v1820 = vld [vmem:[%s1757 + $0x1f0] sm:$0xff]
      %v1821 = vld [vmem:[%s1757 + $0x1f8] sm:$0xff]
      %1822 = vmatprep.subr.mxu0 0.0
      %1823 = vmatpush1.msra.mxu0 %v1758
      %1824 = vmatprep.subr.mxu0 0.0
      %1825 = vmatpush1.msra.mxu0 %v1759
      %1826 = vmatprep.subr.mxu0 0.0
      %1827 = vmatpush1.msra.mxu0 %v1760
      %1828 = vmatprep.subr.mxu0 0.0
      %1829 = vmatpush1.msra.mxu0 %v1761
      %1830 = vmatprep.subr.mxu0 0.0
      %1831 = vmatpush1.msra.mxu0 %v1762
      %1832 = vmatprep.subr.mxu0 0.0
      %1833 = vmatpush1.msra.mxu0 %v1763
      %1834 = vmatprep.subr.mxu0 0.0
      %1835 = vmatpush1.msra.mxu0 %v1764
      %1836 = vmatprep.subr.mxu0 0.0
      %1837 = vmatpush1.msra.mxu0 %v1765
      %1838 = vmatprep.subr.mxu0 0.0
      %1839 = vmatpush1.msra.mxu0 %v1766
      %1840 = vmatprep.subr.mxu0 0.0
      %1841 = vmatpush1.msra.mxu0 %v1767
      %1842 = vmatprep.subr.mxu0 0.0
      %1843 = vmatpush1.msra.mxu0 %v1768
      %1844 = vmatprep.subr.mxu0 0.0
      %1845 = vmatpush1.msra.mxu0 %v1769
      %1846 = vmatprep.subr.mxu0 0.0
      %1847 = vmatpush1.msra.mxu0 %v1770
      %1848 = vmatprep.subr.mxu0 0.0
      %1849 = vmatpush1.msra.mxu0 %v1771
      %1850 = vmatprep.subr.mxu0 0.0
      %1851 = vmatpush1.msra.mxu0 %v1772
      %1852 = vmatprep.subr.mxu0 0.0
      %1853 = vmatpush1.msra.mxu0 %v1773
      %1854 = vmatprep.subr.mxu0 0.0
      %1855 = vmatpush1.msra.mxu0 %v1774
      %1856 = vmatprep.subr.mxu0 0.0
      %1857 = vmatpush1.msra.mxu0 %v1775
      %1858 = vmatprep.subr.mxu0 0.0
      %1859 = vmatpush1.msra.mxu0 %v1776
      %1860 = vmatprep.subr.mxu0 0.0
      %1861 = vmatpush1.msra.mxu0 %v1777
      %1862 = vmatprep.subr.mxu0 0.0
      %1863 = vmatpush1.msra.mxu0 %v1778
      %1864 = vmatprep.subr.mxu0 0.0
      %1865 = vmatpush1.msra.mxu0 %v1779
      %1866 = vmatprep.subr.mxu0 0.0
      %1867 = vmatpush1.msra.mxu0 %v1780
      %1868 = vmatprep.subr.mxu0 0.0
      %1869 = vmatpush1.msra.mxu0 %v1781
      %1870 = vmatprep.subr.mxu0 0.0
      %1871 = vmatpush1.msra.mxu0 %v1782
      %1872 = vmatprep.subr.mxu0 0.0
      %1873 = vmatpush1.msra.mxu0 %v1783
      %1874 = vmatprep.subr.mxu0 0.0
      %1875 = vmatpush1.msra.mxu0 %v1784
      %1876 = vmatprep.subr.mxu0 0.0
      %1877 = vmatpush1.msra.mxu0 %v1785
      %1878 = vmatprep.subr.mxu0 0.0
      %1879 = vmatpush1.msra.mxu0 %v1786
      %1880 = vmatprep.subr.mxu0 0.0
      %1881 = vmatpush1.msra.mxu0 %v1787
      %1882 = vmatprep.subr.mxu0 0.0
      %1883 = vmatpush1.msra.mxu0 %v1788
      %1884 = vmatprep.subr.mxu0 0.0
      %1885 = vmatpush1.msra.mxu0 %v1789
      %1886 = vmatprep.mubr.f32.mxu0 %v1634
      %1887 = vmatmul.mubr.f32.gmra.mrb[0].mxu0 %v1631
      %v1888 = vpop.f32.mrb[0].mxu0
      %v1889 = vadd.f32 0.0, %v1888
      %v1890 = vpop.f32.mrb[0].mxu0
      %1891 = vmatprep.mubr.f32.mxu0 %v1646
      %1892 = vmatmul.mubr.f32.gmra.mrb[0].mxu0 %v1643
      %v1893 = vpop.f32.mrb[0].mxu0
      %v1894 = vadd.f32 0.0, %v1893
      %v1895 = vpop.f32.mrb[0].mxu0
      %1896 = vmatprep.mubr.f32.mxu0 %v1658
      %1897 = vmatmul.mubr.f32.gmra.mrb[0].mxu0 %v1655
      %v1898 = vpop.f32.mrb[0].mxu0
      %v1899 = vadd.f32 0.0, %v1898
      %v1900 = vpop.f32.mrb[0].mxu0
      %1901 = vmatprep.mubr.f32.mxu0 %v1670
      %1902 = vmatmul.mubr.f32.gmra.mrb[0].mxu0 %v1667
      %v1903 = vpop.f32.mrb[0].mxu0
      %v1904 = vadd.f32 0.0, %v1903
      %v1905 = vpop.f32.mrb[0].mxu0
      %1906 = vmatprep.mubr.f32.mxu0 %v1682
      %1907 = vmatmul.mubr.f32.gmra.mrb[0].mxu0 %v1679
      %v1908 = vpop.f32.mrb[0].mxu0
      %v1909 = vadd.f32 0.0, %v1908
      %v1910 = vpop.f32.mrb[0].mxu0
      %1911 = vmatprep.mubr.f32.mxu0 %v1694
      %1912 = vmatmul.mubr.f32.gmra.mrb[0].mxu0 %v1691
      %v1913 = vpop.f32.mrb[0].mxu0
      %v1914 = vadd.f32 0.0, %v1913
      %v1915 = vpop.f32.mrb[0].mxu0
      %1916 = vmatprep.mubr.f32.mxu0 %v1706
      %1917 = vmatmul.mubr.f32.gmra.mrb[0].mxu0 %v1703
      %v1918 = vpop.f32.mrb[0].mxu0
      %v1919 = vadd.f32 0.0, %v1918
      %v1920 = vpop.f32.mrb[0].mxu0
      %1921 = vmatprep.mubr.f32.mxu0 %v1718
      %1922 = vmatmul.mubr.f32.gmra.mrb[0].mxu0 %v1715
      %v1923 = vpop.f32.mrb[0].mxu0
      %v1924 = vadd.f32 0.0, %v1923
      %v1925 = vpop.f32.mrb[0].mxu0
      %1926 = vdwg.mxu0
      %1927 = vmatprep.subr.mxu0 0.0
      %1928 = vmatpush1.msra.mxu0 %v1790
      %1929 = vmatprep.subr.mxu0 0.0
      %1930 = vmatpush1.msra.mxu0 %v1791
      %1931 = vmatprep.subr.mxu0 0.0
      %1932 = vmatpush1.msra.mxu0 %v1792
      %1933 = vmatprep.subr.mxu0 0.0
      %1934 = vmatpush1.msra.mxu0 %v1793
      %1935 = vmatprep.subr.mxu0 0.0
      %1936 = vmatpush1.msra.mxu0 %v1794
      %1937 = vmatprep.subr.mxu0 0.0
      %1938 = vmatpush1.msra.mxu0 %v1795
      %1939 = vmatprep.subr.mxu0 0.0
      %1940 = vmatpush1.msra.mxu0 %v1796
      %1941 = vmatprep.subr.mxu0 0.0
      %1942 = vmatpush1.msra.mxu0 %v1797
      %1943 = vmatprep.subr.mxu0 0.0
      %1944 = vmatpush1.msra.mxu0 %v1798
      %1945 = vmatprep.subr.mxu0 0.0
      %1946 = vmatpush1.msra.mxu0 %v1799
      %1947 = vmatprep.subr.mxu0 0.0
      %1948 = vmatpush1.msra.mxu0 %v1800
      %1949 = vmatprep.subr.mxu0 0.0
      %1950 = vmatpush1.msra.mxu0 %v1801
      %1951 = vmatprep.subr.mxu0 0.0
      %1952 = vmatpush1.msra.mxu0 %v1802
      %1953 = vmatprep.subr.mxu0 0.0
      %1954 = vmatpush1.msra.mxu0 %v1803
      %1955 = vmatprep.subr.mxu0 0.0
      %1956 = vmatpush1.msra.mxu0 %v1804
      %1957 = vmatprep.subr.mxu0 0.0
      %1958 = vmatpush1.msra.mxu0 %v1805
      %1959 = vmatprep.subr.mxu0 0.0
      %1960 = vmatpush1.msra.mxu0 %v1806
      %1961 = vmatprep.subr.mxu0 0.0
      %1962 = vmatpush1.msra.mxu0 %v1807
      %1963 = vmatprep.subr.mxu0 0.0
      %1964 = vmatpush1.msra.mxu0 %v1808
      %1965 = vmatprep.subr.mxu0 0.0
      %1966 = vmatpush1.msra.mxu0 %v1809
      %1967 = vmatprep.subr.mxu0 0.0
      %1968 = vmatpush1.msra.mxu0 %v1810
      %1969 = vmatprep.subr.mxu0 0.0
      %1970 = vmatpush1.msra.mxu0 %v1811
      %1971 = vmatprep.subr.mxu0 0.0
      %1972 = vmatpush1.msra.mxu0 %v1812
      %1973 = vmatprep.subr.mxu0 0.0
      %1974 = vmatpush1.msra.mxu0 %v1813
      %1975 = vmatprep.subr.mxu0 0.0
      %1976 = vmatpush1.msra.mxu0 %v1814
      %1977 = vmatprep.subr.mxu0 0.0
      %1978 = vmatpush1.msra.mxu0 %v1815
      %1979 = vmatprep.subr.mxu0 0.0
      %1980 = vmatpush1.msra.mxu0 %v1816
      %1981 = vmatprep.subr.mxu0 0.0
      %1982 = vmatpush1.msra.mxu0 %v1817
      %1983 = vmatprep.subr.mxu0 0.0
      %1984 = vmatpush1.msra.mxu0 %v1818
      %1985 = vmatprep.subr.mxu0 0.0
      %1986 = vmatpush1.msra.mxu0 %v1819
      %1987 = vmatprep.subr.mxu0 0.0
      %1988 = vmatpush1.msra.mxu0 %v1820
      %1989 = vmatprep.subr.mxu0 0.0
      %1990 = vmatpush1.msra.mxu0 %v1821
      %1991 = vmatprep.mubr.f32.mxu0 %v1640
      %1992 = vmatmul.mubr.f32.gmra.mrb[0].mxu0 %v1637
      %v1993 = vpop.f32.mrb[0].mxu0
      %v1994 = vadd.f32 %v1889, %v1993
      %v1995 = vpop.f32.mrb[0].mxu0
      %1996 = vmatprep.mubr.f32.mxu0 %v1652
      %1997 = vmatmul.mubr.f32.gmra.mrb[0].mxu0 %v1649
      %v1998 = vpop.f32.mrb[0].mxu0
      %v1999 = vadd.f32 %v1894, %v1998
      %v2000 = vpop.f32.mrb[0].mxu0
      %2001 = vmatprep.mubr.f32.mxu0 %v1664
      %2002 = vmatmul.mubr.f32.gmra.mrb[0].mxu0 %v1661
      %v2003 = vpop.f32.mrb[0].mxu0
      %v2004 = vadd.f32 %v1899, %v2003
      %v2005 = vpop.f32.mrb[0].mxu0
      %2006 = vmatprep.mubr.f32.mxu0 %v1676
      %2007 = vmatmul.mubr.f32.gmra.mrb[0].mxu0 %v1673
      %v2008 = vpop.f32.mrb[0].mxu0
      %v2009 = vadd.f32 %v1904, %v2008
      %v2010 = vpop.f32.mrb[0].mxu0
      %2011 = vmatprep.mubr.f32.mxu0 %v1688
      %2012 = vmatmul.mubr.f32.gmra.mrb[0].mxu0 %v1685
      %v2013 = vpop.f32.mrb[0].mxu0
      %v2014 = vadd.f32 %v1909, %v2013
      %v2015 = vpop.f32.mrb[0].mxu0
      %2016 = vmatprep.mubr.f32.mxu0 %v1700
      %2017 = vmatmul.mubr.f32.gmra.mrb[0].mxu0 %v1697
      %v2018 = vpop.f32.mrb[0].mxu0
      %v2019 = vadd.f32 %v1914, %v2018
      %v2020 = vpop.f32.mrb[0].mxu0
      %2021 = vmatprep.mubr.f32.mxu0 %v1712
      %2022 = vmatmul.mubr.f32.gmra.mrb[0].mxu0 %v1709
      %v2023 = vpop.f32.mrb[0].mxu0
      %v2024 = vadd.f32 %v1919, %v2023
      %v2025 = vpop.f32.mrb[0].mxu0
      %2026 = vmatprep.mubr.f32.mxu0 %v1724
      %2027 = vmatmul.mubr.f32.gmra.mrb[0].mxu0 %v1721
      %v2028 = vpop.f32.mrb[0].mxu0
      %v2029 = vadd.f32 %v1924, %v2028
      %v2030 = vpop.f32.mrb[0].mxu0
      %2031 = vdwg.mxu0
      %v2032 = vadd.f32 %v1493, %v1994
      %v2033 = vadd.f32 %v1494, %v1999
      %v2034 = vadd.f32 %v1495, %v2004
      %v2035 = vadd.f32 %v1496, %v2009
      %v2036 = vadd.f32 %v1497, %v2014
      %v2037 = vadd.f32 %v1498, %v2019
      %v2038 = vadd.f32 %v1499, %v2024
      %v2039 = vadd.f32 %v1500, %v2029
      %v2040 = vld [vmem:[%s5] sm:$0x1]
      %v2042 = vlaneseq
      %v2043 = vshrl.u32 %v2042, 7
      %v2044 = vsub.s32 0, %v2043
      %v2045 = vrot.slane %v2040, %v2044
      %v2047 = vadd.f32 %v2032, %v2045
      %v2048 = vadd.f32 %v2033, %v2045
      %v2049 = vadd.f32 %v2034, %v2045
      %v2050 = vadd.f32 %v2035, %v2045
      %v2051 = vadd.f32 %v2036, %v2045
      %v2052 = vadd.f32 %v2037, %v2045
      %v2053 = vadd.f32 %v2038, %v2045
      %v2054 = vadd.f32 %v2039, %v2045
      %v2055 = vmax.f32 %v2047, 0.0
      %v2056 = vmax.f32 %v2048, 0.0
      %v2057 = vmax.f32 %v2049, 0.0
      %v2058 = vmax.f32 %v2050, 0.0
      %v2059 = vmax.f32 %v2051, 0.0
      %v2060 = vmax.f32 %v2052, 0.0
      %v2061 = vmax.f32 %v2053, 0.0
      %v2062 = vmax.f32 %v2054, 0.0
      %v2063 = vld [vmem:[%s2] sm:$0xff]
      %v2064 = vld [vmem:[%s2 + $0x8] sm:$0xff]
      %vm2065 = vcmask 523264
      %v2067 = vsel %vm2065, %v2063, 0
      %v2070 = vsel %vm2065, %v2064, 0
      %2072 = vmatprep.subr.mxu0 0.0
      %2073 = vmatpush1.msra.mxu0 %v2055
      %2074 = vmatprep.subr.mxu0 0.0
      %2075 = vmatpush1.msra.mxu0 %v2056
      %2076 = vmatprep.subr.mxu0 0.0
      %2077 = vmatpush1.msra.mxu0 %v2057
      %2078 = vmatprep.subr.mxu0 0.0
      %2079 = vmatpush1.msra.mxu0 %v2058
      %2080 = vmatprep.subr.mxu0 0.0
      %2081 = vmatpush1.msra.mxu0 %v2059
      %2082 = vmatprep.subr.mxu0 0.0
      %2083 = vmatpush1.msra.mxu0 %v2060
      %2084 = vmatprep.subr.mxu0 0.0
      %2085 = vmatpush1.msra.mxu0 %v2061
      %2086 = vmatprep.subr.mxu0 0.0
      %2087 = vmatpush1.msra.mxu0 %v2062
      %2088 = vmatprep.subr.mxu0 0.0
      %2089 = vmatpush1.msra.mxu0 0.0
      %2090 = vmatprep.subr.mxu0 0.0
      %2091 = vmatpush1.msra.mxu0 0.0
      %2092 = vmatprep.subr.mxu0 0.0
      %2093 = vmatpush1.msra.mxu0 0.0
      %2094 = vmatprep.subr.mxu0 0.0
      %2095 = vmatpush1.msra.mxu0 0.0
      %2096 = vmatprep.subr.mxu0 0.0
      %2097 = vmatpush1.msra.mxu0 0.0
      %2098 = vmatprep.subr.mxu0 0.0
      %2099 = vmatpush1.msra.mxu0 0.0
      %2100 = vmatprep.subr.mxu0 0.0
      %2101 = vmatpush1.msra.mxu0 0.0
      %2102 = vmatprep.subr.mxu0 0.0
      %2103 = vmatpush1.msra.mxu0 0.0
      %2104 = vmatprep.subr.mxu0 0.0
      %2105 = vmatpush1.msra.mxu0 0.0
      %2106 = vmatprep.subr.mxu0 0.0
      %2107 = vmatpush1.msra.mxu0 0.0
      %2108 = vmatprep.subr.mxu0 0.0
      %2109 = vmatpush1.msra.mxu0 0.0
      %2110 = vmatprep.subr.mxu0 0.0
      %2111 = vmatpush1.msra.mxu0 0.0
      %2112 = vmatprep.subr.mxu0 0.0
      %2113 = vmatpush1.msra.mxu0 0.0
      %2114 = vmatprep.subr.mxu0 0.0
      %2115 = vmatpush1.msra.mxu0 0.0
      %2116 = vmatprep.subr.mxu0 0.0
      %2117 = vmatpush1.msra.mxu0 0.0
      %2118 = vmatprep.subr.mxu0 0.0
      %2119 = vmatpush1.msra.mxu0 0.0
      %2120 = vmatprep.subr.mxu0 0.0
      %2121 = vmatpush1.msra.mxu0 0.0
      %2122 = vmatprep.subr.mxu0 0.0
      %2123 = vmatpush1.msra.mxu0 0.0
      %2124 = vmatprep.subr.mxu0 0.0
      %2125 = vmatpush1.msra.mxu0 0.0
      %2126 = vmatprep.subr.mxu0 0.0
      %2127 = vmatpush1.msra.mxu0 0.0
      %2128 = vmatprep.subr.mxu0 0.0
      %2129 = vmatpush1.msra.mxu0 0.0
      %2130 = vmatprep.subr.mxu0 0.0
      %2131 = vmatpush1.msra.mxu0 0.0
      %2132 = vmatprep.subr.mxu0 0.0
      %2133 = vmatpush1.msra.mxu0 0.0
      %2134 = vmatprep.subr.mxu0 0.0
      %2135 = vmatpush1.msra.mxu0 0.0
      %2136 = vmatprep.mubr.f32.mxu0 0.0
      %2137 = vmatmul.mubr.f32.gmra.mrb[0].mxu0 %v2067
      %v2138 = vpop.f32.mrb[0].mxu0
      %v2139 = vadd.f32 0.0, %v2138
      %v2140 = vpop.f32.mrb[0].mxu0
      %2141 = vmatprep.mubr.f32.mxu0 0.0
      %2142 = vmatmul.mubr.f32.gmra.mrb[0].mxu0 %v2070
      %v2143 = vpop.f32.mrb[0].mxu0
      %v2144 = vadd.f32 0.0, %v2143
      %v2145 = vpop.f32.mrb[0].mxu0
      %2146 = vdwg.mxu0
      %v2147 = vld [vmem:[%s3] sm:$0xff]
      %v2148 = vld [vmem:[%s3 + $0x8] sm:$0xff]
      %v2149 = vld [vmem:[%s3 + $0x10] sm:$0xff]
      %v2150 = vld [vmem:[%s3 + $0x18] sm:$0xff]
      %v2151 = vld [vmem:[%s3 + $0x20] sm:$0xff]
      %v2152 = vld [vmem:[%s3 + $0x28] sm:$0xff]
      %v2153 = vld [vmem:[%s3 + $0x30] sm:$0xff]
      %v2154 = vld [vmem:[%s3 + $0x38] sm:$0xff]
      %s2155 = scalar_lea.vmem %s2, 16
      %v2156 = vld [vmem:[%s2155] sm:$0xff]
      %v2157 = vld [vmem:[%s2155 + $0x8] sm:$0xff]
      %v2159 = vsel %vm2065, %v2156, 0
      %v2162 = vsel %vm2065, %v2157, 0
      %2164 = vmatprep.subr.mxu0 0.0
      %2165 = vmatpush1.msra.mxu0 %v2055
      %2166 = vmatprep.subr.mxu0 0.0
      %2167 = vmatpush1.msra.mxu0 %v2056
      %2168 = vmatprep.subr.mxu0 0.0
      %2169 = vmatpush1.msra.mxu0 %v2057
      %2170 = vmatprep.subr.mxu0 0.0
      %2171 = vmatpush1.msra.mxu0 %v2058
      %2172 = vmatprep.subr.mxu0 0.0
      %2173 = vmatpush1.msra.mxu0 %v2059
      %2174 = vmatprep.subr.mxu0 0.0
      %2175 = vmatpush1.msra.mxu0 %v2060
      %2176 = vmatprep.subr.mxu0 0.0
      %2177 = vmatpush1.msra.mxu0 %v2061
      %2178 = vmatprep.subr.mxu0 0.0
      %2179 = vmatpush1.msra.mxu0 %v2062
      %2180 = vmatprep.subr.mxu0 0.0
      %2181 = vmatpush1.msra.mxu0 0.0
      %2182 = vmatprep.subr.mxu0 0.0
      %2183 = vmatpush1.msra.mxu0 0.0
      %2184 = vmatprep.subr.mxu0 0.0
      %2185 = vmatpush1.msra.mxu0 0.0
      %2186 = vmatprep.subr.mxu0 0.0
      %2187 = vmatpush1.msra.mxu0 0.0
      %2188 = vmatprep.subr.mxu0 0.0
      %2189 = vmatpush1.msra.mxu0 0.0
      %2190 = vmatprep.subr.mxu0 0.0
      %2191 = vmatpush1.msra.mxu0 0.0
      %2192 = vmatprep.subr.mxu0 0.0
      %2193 = vmatpush1.msra.mxu0 0.0
      %2194 = vmatprep.subr.mxu0 0.0
      %2195 = vmatpush1.msra.mxu0 0.0
      %2196 = vmatprep.subr.mxu0 0.0
      %2197 = vmatpush1.msra.mxu0 0.0
      %2198 = vmatprep.subr.mxu0 0.0
      %2199 = vmatpush1.msra.mxu0 0.0
      %2200 = vmatprep.subr.mxu0 0.0
      %2201 = vmatpush1.msra.mxu0 0.0
      %2202 = vmatprep.subr.mxu0 0.0
      %2203 = vmatpush1.msra.mxu0 0.0
      %2204 = vmatprep.subr.mxu0 0.0
      %2205 = vmatpush1.msra.mxu0 0.0
      %2206 = vmatprep.subr.mxu0 0.0
      %2207 = vmatpush1.msra.mxu0 0.0
      %2208 = vmatprep.subr.mxu0 0.0
      %2209 = vmatpush1.msra.mxu0 0.0
      %2210 = vmatprep.subr.mxu0 0.0
      %2211 = vmatpush1.msra.mxu0 0.0
      %2212 = vmatprep.subr.mxu0 0.0
      %2213 = vmatpush1.msra.mxu0 0.0
      %2214 = vmatprep.subr.mxu0 0.0
      %2215 = vmatpush1.msra.mxu0 0.0
      %2216 = vmatprep.subr.mxu0 0.0
      %2217 = vmatpush1.msra.mxu0 0.0
      %2218 = vmatprep.subr.mxu0 0.0
      %2219 = vmatpush1.msra.mxu0 0.0
      %2220 = vmatprep.subr.mxu0 0.0
      %2221 = vmatpush1.msra.mxu0 0.0
      %2222 = vmatprep.subr.mxu0 0.0
      %2223 = vmatpush1.msra.mxu0 0.0
      %2224 = vmatprep.subr.mxu0 0.0
      %2225 = vmatpush1.msra.mxu0 0.0
      %2226 = vmatprep.subr.mxu0 0.0
      %2227 = vmatpush1.msra.mxu0 0.0
      %2228 = vmatprep.mubr.f32.mxu0 0.0
      %2229 = vmatmul.mubr.f32.gmra.mrb[0].mxu0 %v2159
      %v2230 = vpop.f32.mrb[0].mxu0
      %v2231 = vadd.f32 0.0, %v2230
      %v2232 = vpop.f32.mrb[0].mxu0
      %2233 = vmatprep.mubr.f32.mxu0 0.0
      %2234 = vmatmul.mubr.f32.gmra.mrb[0].mxu0 %v2162
      %v2235 = vpop.f32.mrb[0].mxu0
      %v2236 = vadd.f32 0.0, %v2235
      %v2237 = vpop.f32.mrb[0].mxu0
      %2238 = vdwg.mxu0
      %s2239 = scalar_lea.vmem %s3, 64
      %v2240 = vld [vmem:[%s2239] sm:$0xff]
      %v2241 = vld [vmem:[%s2239 + $0x8] sm:$0xff]
      %v2242 = vld [vmem:[%s2239 + $0x10] sm:$0xff]
      %v2243 = vld [vmem:[%s2239 + $0x18] sm:$0xff]
      %v2244 = vld [vmem:[%s2239 + $0x20] sm:$0xff]
      %v2245 = vld [vmem:[%s2239 + $0x28] sm:$0xff]
      %v2246 = vld [vmem:[%s2239 + $0x30] sm:$0xff]
      %v2247 = vld [vmem:[%s2239 + $0x38] sm:$0xff]
      %v2249 = vsel %vm2065, %v2231, 0
      %v2252 = vsel %vm2065, %v2236, 0
      %2254 = vmatprep.subr.mxu0 0.0
      %2255 = vmatpush1.msra.mxu0 %v2240
      %2256 = vmatprep.subr.mxu0 0.0
      %2257 = vmatpush1.msra.mxu0 %v2241
      %2258 = vmatprep.subr.mxu0 0.0
      %2259 = vmatpush1.msra.mxu0 %v2242
      %2260 = vmatprep.subr.mxu0 0.0
      %2261 = vmatpush1.msra.mxu0 %v2243
      %2262 = vmatprep.subr.mxu0 0.0
      %2263 = vmatpush1.msra.mxu0 %v2244
      %2264 = vmatprep.subr.mxu0 0.0
      %2265 = vmatpush1.msra.mxu0 %v2245
      %2266 = vmatprep.subr.mxu0 0.0
      %2267 = vmatpush1.msra.mxu0 %v2246
      %2268 = vmatprep.subr.mxu0 0.0
      %2269 = vmatpush1.msra.mxu0 %v2247
      %2270 = vmatprep.subr.mxu0 0.0
      %2271 = vmatpush1.msra.mxu0 0.0
      %2272 = vmatprep.subr.mxu0 0.0
      %2273 = vmatpush1.msra.mxu0 0.0
      %2274 = vmatprep.subr.mxu0 0.0
      %2275 = vmatpush1.msra.mxu0 0.0
      %2276 = vmatprep.subr.mxu0 0.0
      %2277 = vmatpush1.msra.mxu0 0.0
      %2278 = vmatprep.subr.mxu0 0.0
      %2279 = vmatpush1.msra.mxu0 0.0
      %2280 = vmatprep.subr.mxu0 0.0
      %2281 = vmatpush1.msra.mxu0 0.0
      %2282 = vmatprep.subr.mxu0 0.0
      %2283 = vmatpush1.msra.mxu0 0.0
      %2284 = vmatprep.subr.mxu0 0.0
      %2285 = vmatpush1.msra.mxu0 0.0
      %2286 = vmatprep.subr.mxu0 0.0
      %2287 = vmatpush1.msra.mxu0 0.0
      %2288 = vmatprep.subr.mxu0 0.0
      %2289 = vmatpush1.msra.mxu0 0.0
      %2290 = vmatprep.subr.mxu0 0.0
      %2291 = vmatpush1.msra.mxu0 0.0
      %2292 = vmatprep.subr.mxu0 0.0
      %2293 = vmatpush1.msra.mxu0 0.0
      %2294 = vmatprep.subr.mxu0 0.0
      %2295 = vmatpush1.msra.mxu0 0.0
      %2296 = vmatprep.subr.mxu0 0.0
      %2297 = vmatpush1.msra.mxu0 0.0
      %2298 = vmatprep.subr.mxu0 0.0
      %2299 = vmatpush1.msra.mxu0 0.0
      %2300 = vmatprep.subr.mxu0 0.0
      %2301 = vmatpush1.msra.mxu0 0.0
      %2302 = vmatprep.subr.mxu0 0.0
      %2303 = vmatpush1.msra.mxu0 0.0
      %2304 = vmatprep.subr.mxu0 0.0
      %2305 = vmatpush1.msra.mxu0 0.0
      %2306 = vmatprep.subr.mxu0 0.0
      %2307 = vmatpush1.msra.mxu0 0.0
      %2308 = vmatprep.subr.mxu0 0.0
      %2309 = vmatpush1.msra.mxu0 0.0
      %2310 = vmatprep.subr.mxu0 0.0
      %2311 = vmatpush1.msra.mxu0 0.0
      %2312 = vmatprep.subr.mxu0 0.0
      %2313 = vmatpush1.msra.mxu0 0.0
      %2314 = vmatprep.subr.mxu0 0.0
      %2315 = vmatpush1.msra.mxu0 0.0
      %2316 = vmatprep.subr.mxu0 0.0
      %2317 = vmatpush1.msra.mxu0 0.0
      %2318 = vmatprep.mubr.f32.mxu0 0.0
      %2319 = vmatmul.mubr.f32.gmra.mrb[0].mxu0 %v2249
      %v2320 = vpop.f32.mrb[0].mxu0
      %v2321 = vadd.f32 0.0, %v2320
      %v2322 = vpop.f32.mrb[0].mxu0
      %2323 = vmatprep.mubr.f32.mxu0 0.0
      %2324 = vmatmul.mubr.f32.gmra.mrb[0].mxu0 %v2252
      %v2325 = vpop.f32.mrb[0].mxu0
      %v2326 = vadd.f32 0.0, %v2325
      %v2327 = vpop.f32.mrb[0].mxu0
      %2328 = vdwg.mxu0
      %v2330 = vsel %vm2065, %v2139, 0
      %v2333 = vsel %vm2065, %v2144, 0
      %2335 = vmatprep.subr.mxu0 0.0
      %2336 = vmatpush1.msra.mxu0 %v2147
      %2337 = vmatprep.subr.mxu0 0.0
      %2338 = vmatpush1.msra.mxu0 %v2148
      %2339 = vmatprep.subr.mxu0 0.0
      %2340 = vmatpush1.msra.mxu0 %v2149
      %2341 = vmatprep.subr.mxu0 0.0
      %2342 = vmatpush1.msra.mxu0 %v2150
      %2343 = vmatprep.subr.mxu0 0.0
      %2344 = vmatpush1.msra.mxu0 %v2151
      %2345 = vmatprep.subr.mxu0 0.0
      %2346 = vmatpush1.msra.mxu0 %v2152
      %2347 = vmatprep.subr.mxu0 0.0
      %2348 = vmatpush1.msra.mxu0 %v2153
      %2349 = vmatprep.subr.mxu0 0.0
      %2350 = vmatpush1.msra.mxu0 %v2154
      %2351 = vmatprep.subr.mxu0 0.0
      %2352 = vmatpush1.msra.mxu0 0.0
      %2353 = vmatprep.subr.mxu0 0.0
      %2354 = vmatpush1.msra.mxu0 0.0
      %2355 = vmatprep.subr.mxu0 0.0
      %2356 = vmatpush1.msra.mxu0 0.0
      %2357 = vmatprep.subr.mxu0 0.0
      %2358 = vmatpush1.msra.mxu0 0.0
      %2359 = vmatprep.subr.mxu0 0.0
      %2360 = vmatpush1.msra.mxu0 0.0
      %2361 = vmatprep.subr.mxu0 0.0
      %2362 = vmatpush1.msra.mxu0 0.0
      %2363 = vmatprep.subr.mxu0 0.0
      %2364 = vmatpush1.msra.mxu0 0.0
      %2365 = vmatprep.subr.mxu0 0.0
      %2366 = vmatpush1.msra.mxu0 0.0
      %2367 = vmatprep.subr.mxu0 0.0
      %2368 = vmatpush1.msra.mxu0 0.0
      %2369 = vmatprep.subr.mxu0 0.0
      %2370 = vmatpush1.msra.mxu0 0.0
      %2371 = vmatprep.subr.mxu0 0.0
      %2372 = vmatpush1.msra.mxu0 0.0
      %2373 = vmatprep.subr.mxu0 0.0
      %2374 = vmatpush1.msra.mxu0 0.0
      %2375 = vmatprep.subr.mxu0 0.0
      %2376 = vmatpush1.msra.mxu0 0.0
      %2377 = vmatprep.subr.mxu0 0.0
      %2378 = vmatpush1.msra.mxu0 0.0
      %2379 = vmatprep.subr.mxu0 0.0
      %2380 = vmatpush1.msra.mxu0 0.0
      %2381 = vmatprep.subr.mxu0 0.0
      %2382 = vmatpush1.msra.mxu0 0.0
      %2383 = vmatprep.subr.mxu0 0.0
      %2384 = vmatpush1.msra.mxu0 0.0
      %2385 = vmatprep.subr.mxu0 0.0
      %2386 = vmatpush1.msra.mxu0 0.0
      %2387 = vmatprep.subr.mxu0 0.0
      %2388 = vmatpush1.msra.mxu0 0.0
      %2389 = vmatprep.subr.mxu0 0.0
      %2390 = vmatpush1.msra.mxu0 0.0
      %2391 = vmatprep.subr.mxu0 0.0
      %2392 = vmatpush1.msra.mxu0 0.0
      %2393 = vmatprep.subr.mxu0 0.0
      %2394 = vmatpush1.msra.mxu0 0.0
      %2395 = vmatprep.subr.mxu0 0.0
      %2396 = vmatpush1.msra.mxu0 0.0
      %2397 = vmatprep.subr.mxu0 0.0
      %2398 = vmatpush1.msra.mxu0 0.0
      %2399 = vmatprep.mubr.f32.mxu0 0.0
      %2400 = vmatmul.mubr.f32.gmra.mrb[0].mxu0 %v2330
      %v2401 = vpop.f32.mrb[0].mxu0
      %v2402 = vadd.f32 %v2321, %v2401
      %v2403 = vpop.f32.mrb[0].mxu0
      %2404 = vmatprep.mubr.f32.mxu0 0.0
      %2405 = vmatmul.mubr.f32.gmra.mrb[0].mxu0 %v2333
      %v2406 = vpop.f32.mrb[0].mxu0
      %v2407 = vadd.f32 %v2326, %v2406
      %v2408 = vpop.f32.mrb[0].mxu0
      %2409 = vdwg.mxu0
      %s2410 = scalar_lea.vmem %s2, 32
      %v2411 = vld [vmem:[%s2410] sm:$0xff]
      %v2412 = vld [vmem:[%s2410 + $0x8] sm:$0xff]
      %v2414 = vsel %vm2065, %v2411, 0
      %v2417 = vsel %vm2065, %v2412, 0
      %2419 = vmatprep.subr.mxu0 0.0
      %2420 = vmatpush1.msra.mxu0 %v2055
      %2421 = vmatprep.subr.mxu0 0.0
      %2422 = vmatpush1.msra.mxu0 %v2056
      %2423 = vmatprep.subr.mxu0 0.0
      %2424 = vmatpush1.msra.mxu0 %v2057
      %2425 = vmatprep.subr.mxu0 0.0
      %2426 = vmatpush1.msra.mxu0 %v2058
      %2427 = vmatprep.subr.mxu0 0.0
      %2428 = vmatpush1.msra.mxu0 %v2059
      %2429 = vmatprep.subr.mxu0 0.0
      %2430 = vmatpush1.msra.mxu0 %v2060
      %2431 = vmatprep.subr.mxu0 0.0
      %2432 = vmatpush1.msra.mxu0 %v2061
      %2433 = vmatprep.subr.mxu0 0.0
      %2434 = vmatpush1.msra.mxu0 %v2062
      %2435 = vmatprep.subr.mxu0 0.0
      %2436 = vmatpush1.msra.mxu0 0.0
      %2437 = vmatprep.subr.mxu0 0.0
      %2438 = vmatpush1.msra.mxu0 0.0
      %2439 = vmatprep.subr.mxu0 0.0
      %2440 = vmatpush1.msra.mxu0 0.0
      %2441 = vmatprep.subr.mxu0 0.0
      %2442 = vmatpush1.msra.mxu0 0.0
      %2443 = vmatprep.subr.mxu0 0.0
      %2444 = vmatpush1.msra.mxu0 0.0
      %2445 = vmatprep.subr.mxu0 0.0
      %2446 = vmatpush1.msra.mxu0 0.0
      %2447 = vmatprep.subr.mxu0 0.0
      %2448 = vmatpush1.msra.mxu0 0.0
      %2449 = vmatprep.subr.mxu0 0.0
      %2450 = vmatpush1.msra.mxu0 0.0
      %2451 = vmatprep.subr.mxu0 0.0
      %2452 = vmatpush1.msra.mxu0 0.0
      %2453 = vmatprep.subr.mxu0 0.0
      %2454 = vmatpush1.msra.mxu0 0.0
      %2455 = vmatprep.subr.mxu0 0.0
      %2456 = vmatpush1.msra.mxu0 0.0
      %2457 = vmatprep.subr.mxu0 0.0
      %2458 = vmatpush1.msra.mxu0 0.0
      %2459 = vmatprep.subr.mxu0 0.0
      %2460 = vmatpush1.msra.mxu0 0.0
      %2461 = vmatprep.subr.mxu0 0.0
      %2462 = vmatpush1.msra.mxu0 0.0
      %2463 = vmatprep.subr.mxu0 0.0
      %2464 = vmatpush1.msra.mxu0 0.0
      %2465 = vmatprep.subr.mxu0 0.0
      %2466 = vmatpush1.msra.mxu0 0.0
      %2467 = vmatprep.subr.mxu0 0.0
      %2468 = vmatpush1.msra.mxu0 0.0
      %2469 = vmatprep.subr.mxu0 0.0
      %2470 = vmatpush1.msra.mxu0 0.0
      %2471 = vmatprep.subr.mxu0 0.0
      %2472 = vmatpush1.msra.mxu0 0.0
      %2473 = vmatprep.subr.mxu0 0.0
      %2474 = vmatpush1.msra.mxu0 0.0
      %2475 = vmatprep.subr.mxu0 0.0
      %2476 = vmatpush1.msra.mxu0 0.0
      %2477 = vmatprep.subr.mxu0 0.0
      %2478 = vmatpush1.msra.mxu0 0.0
      %2479 = vmatprep.subr.mxu0 0.0
      %2480 = vmatpush1.msra.mxu0 0.0
      %2481 = vmatprep.subr.mxu0 0.0
      %2482 = vmatpush1.msra.mxu0 0.0
      %2483 = vmatprep.mubr.f32.mxu0 0.0
      %2484 = vmatmul.mubr.f32.gmra.mrb[0].mxu0 %v2414
      %v2485 = vpop.f32.mrb[0].mxu0
      %v2486 = vadd.f32 0.0, %v2485
      %v2487 = vpop.f32.mrb[0].mxu0
      %2488 = vmatprep.mubr.f32.mxu0 0.0
      %2489 = vmatmul.mubr.f32.gmra.mrb[0].mxu0 %v2417
      %v2490 = vpop.f32.mrb[0].mxu0
      %v2491 = vadd.f32 0.0, %v2490
      %v2492 = vpop.f32.mrb[0].mxu0
      %2493 = vdwg.mxu0
      %s2494 = scalar_lea.vmem %s3, 128
      %v2495 = vld [vmem:[%s2494] sm:$0xff]
      %v2496 = vld [vmem:[%s2494 + $0x8] sm:$0xff]
      %v2497 = vld [vmem:[%s2494 + $0x10] sm:$0xff]
      %v2498 = vld [vmem:[%s2494 + $0x18] sm:$0xff]
      %v2499 = vld [vmem:[%s2494 + $0x20] sm:$0xff]
      %v2500 = vld [vmem:[%s2494 + $0x28] sm:$0xff]
      %v2501 = vld [vmem:[%s2494 + $0x30] sm:$0xff]
      %v2502 = vld [vmem:[%s2494 + $0x38] sm:$0xff]
      %v2504 = vsel %vm2065, %v2486, 0
      %v2507 = vsel %vm2065, %v2491, 0
      %2509 = vmatprep.subr.mxu0 0.0
      %2510 = vmatpush1.msra.mxu0 %v2495
      %2511 = vmatprep.subr.mxu0 0.0
      %2512 = vmatpush1.msra.mxu0 %v2496
      %2513 = vmatprep.subr.mxu0 0.0
      %2514 = vmatpush1.msra.mxu0 %v2497
      %2515 = vmatprep.subr.mxu0 0.0
      %2516 = vmatpush1.msra.mxu0 %v2498
      %2517 = vmatprep.subr.mxu0 0.0
      %2518 = vmatpush1.msra.mxu0 %v2499
      %2519 = vmatprep.subr.mxu0 0.0
      %2520 = vmatpush1.msra.mxu0 %v2500
      %2521 = vmatprep.subr.mxu0 0.0
      %2522 = vmatpush1.msra.mxu0 %v2501
      %2523 = vmatprep.subr.mxu0 0.0
      %2524 = vmatpush1.msra.mxu0 %v2502
      %2525 = vmatprep.subr.mxu0 0.0
      %2526 = vmatpush1.msra.mxu0 0.0
      %2527 = vmatprep.subr.mxu0 0.0
      %2528 = vmatpush1.msra.mxu0 0.0
      %2529 = vmatprep.subr.mxu0 0.0
      %2530 = vmatpush1.msra.mxu0 0.0
      %2531 = vmatprep.subr.mxu0 0.0
      %2532 = vmatpush1.msra.mxu0 0.0
      %2533 = vmatprep.subr.mxu0 0.0
      %2534 = vmatpush1.msra.mxu0 0.0
      %2535 = vmatprep.subr.mxu0 0.0
      %2536 = vmatpush1.msra.mxu0 0.0
      %2537 = vmatprep.subr.mxu0 0.0
      %2538 = vmatpush1.msra.mxu0 0.0
      %2539 = vmatprep.subr.mxu0 0.0
      %2540 = vmatpush1.msra.mxu0 0.0
      %2541 = vmatprep.subr.mxu0 0.0
      %2542 = vmatpush1.msra.mxu0 0.0
      %2543 = vmatprep.subr.mxu0 0.0
      %2544 = vmatpush1.msra.mxu0 0.0
      %2545 = vmatprep.subr.mxu0 0.0
      %2546 = vmatpush1.msra.mxu0 0.0
      %2547 = vmatprep.subr.mxu0 0.0
      %2548 = vmatpush1.msra.mxu0 0.0
      %2549 = vmatprep.subr.mxu0 0.0
      %2550 = vmatpush1.msra.mxu0 0.0
      %2551 = vmatprep.subr.mxu0 0.0
      %2552 = vmatpush1.msra.mxu0 0.0
      %2553 = vmatprep.subr.mxu0 0.0
      %2554 = vmatpush1.msra.mxu0 0.0
      %2555 = vmatprep.subr.mxu0 0.0
      %2556 = vmatpush1.msra.mxu0 0.0
      %2557 = vmatprep.subr.mxu0 0.0
      %2558 = vmatpush1.msra.mxu0 0.0
      %2559 = vmatprep.subr.mxu0 0.0
      %2560 = vmatpush1.msra.mxu0 0.0
      %2561 = vmatprep.subr.mxu0 0.0
      %2562 = vmatpush1.msra.mxu0 0.0
      %2563 = vmatprep.subr.mxu0 0.0
      %2564 = vmatpush1.msra.mxu0 0.0
      %2565 = vmatprep.subr.mxu0 0.0
      %2566 = vmatpush1.msra.mxu0 0.0
      %2567 = vmatprep.subr.mxu0 0.0
      %2568 = vmatpush1.msra.mxu0 0.0
      %2569 = vmatprep.subr.mxu0 0.0
      %2570 = vmatpush1.msra.mxu0 0.0
      %2571 = vmatprep.subr.mxu0 0.0
      %2572 = vmatpush1.msra.mxu0 0.0
      %2573 = vmatprep.mubr.f32.mxu0 0.0
      %2574 = vmatmul.mubr.f32.gmra.mrb[0].mxu0 %v2504
      %v2575 = vpop.f32.mrb[0].mxu0
      %v2576 = vadd.f32 0.0, %v2575
      %v2577 = vpop.f32.mrb[0].mxu0
      %2578 = vmatprep.mubr.f32.mxu0 0.0
      %2579 = vmatmul.mubr.f32.gmra.mrb[0].mxu0 %v2507
      %v2580 = vpop.f32.mrb[0].mxu0
      %v2581 = vadd.f32 0.0, %v2580
      %v2582 = vpop.f32.mrb[0].mxu0
      %2583 = vdwg.mxu0
      %v2584 = vadd.f32 %v2402, %v2576
      %v2585 = vadd.f32 %v2407, %v2581
      %s2586 = scalar_lea.vmem %s2, 48
      %v2587 = vld [vmem:[%s2586] sm:$0xff]
      %v2588 = vld [vmem:[%s2586 + $0x8] sm:$0xff]
      %v2590 = vsel %vm2065, %v2587, 0
      %v2593 = vsel %vm2065, %v2588, 0
      %2595 = vmatprep.subr.mxu0 0.0
      %2596 = vmatpush1.msra.mxu0 %v2055
      %2597 = vmatprep.subr.mxu0 0.0
      %2598 = vmatpush1.msra.mxu0 %v2056
      %2599 = vmatprep.subr.mxu0 0.0
      %2600 = vmatpush1.msra.mxu0 %v2057
      %2601 = vmatprep.subr.mxu0 0.0
      %2602 = vmatpush1.msra.mxu0 %v2058
      %2603 = vmatprep.subr.mxu0 0.0
      %2604 = vmatpush1.msra.mxu0 %v2059
      %2605 = vmatprep.subr.mxu0 0.0
      %2606 = vmatpush1.msra.mxu0 %v2060
      %2607 = vmatprep.subr.mxu0 0.0
      %2608 = vmatpush1.msra.mxu0 %v2061
      %2609 = vmatprep.subr.mxu0 0.0
      %2610 = vmatpush1.msra.mxu0 %v2062
      %2611 = vmatprep.subr.mxu0 0.0
      %2612 = vmatpush1.msra.mxu0 0.0
      %2613 = vmatprep.subr.mxu0 0.0
      %2614 = vmatpush1.msra.mxu0 0.0
      %2615 = vmatprep.subr.mxu0 0.0
      %2616 = vmatpush1.msra.mxu0 0.0
      %2617 = vmatprep.subr.mxu0 0.0
      %2618 = vmatpush1.msra.mxu0 0.0
      %2619 = vmatprep.subr.mxu0 0.0
      %2620 = vmatpush1.msra.mxu0 0.0
      %2621 = vmatprep.subr.mxu0 0.0
      %2622 = vmatpush1.msra.mxu0 0.0
      %2623 = vmatprep.subr.mxu0 0.0
      %2624 = vmatpush1.msra.mxu0 0.0
      %2625 = vmatprep.subr.mxu0 0.0
      %2626 = vmatpush1.msra.mxu0 0.0
      %2627 = vmatprep.subr.mxu0 0.0
      %2628 = vmatpush1.msra.mxu0 0.0
      %2629 = vmatprep.subr.mxu0 0.0
      %2630 = vmatpush1.msra.mxu0 0.0
      %2631 = vmatprep.subr.mxu0 0.0
      %2632 = vmatpush1.msra.mxu0 0.0
      %2633 = vmatprep.subr.mxu0 0.0
      %2634 = vmatpush1.msra.mxu0 0.0
      %2635 = vmatprep.subr.mxu0 0.0
      %2636 = vmatpush1.msra.mxu0 0.0
      %2637 = vmatprep.subr.mxu0 0.0
      %2638 = vmatpush1.msra.mxu0 0.0
      %2639 = vmatprep.subr.mxu0 0.0
      %2640 = vmatpush1.msra.mxu0 0.0
      %2641 = vmatprep.subr.mxu0 0.0
      %2642 = vmatpush1.msra.mxu0 0.0
      %2643 = vmatprep.subr.mxu0 0.0
      %2644 = vmatpush1.msra.mxu0 0.0
      %2645 = vmatprep.subr.mxu0 0.0
      %2646 = vmatpush1.msra.mxu0 0.0
      %2647 = vmatprep.subr.mxu0 0.0
      %2648 = vmatpush1.msra.mxu0 0.0
      %2649 = vmatprep.subr.mxu0 0.0
      %2650 = vmatpush1.msra.mxu0 0.0
      %2651 = vmatprep.subr.mxu0 0.0
      %2652 = vmatpush1.msra.mxu0 0.0
      %2653 = vmatprep.subr.mxu0 0.0
      %2654 = vmatpush1.msra.mxu0 0.0
      %2655 = vmatprep.subr.mxu0 0.0
      %2656 = vmatpush1.msra.mxu0 0.0
      %2657 = vmatprep.subr.mxu0 0.0
      %2658 = vmatpush1.msra.mxu0 0.0
      %2659 = vmatprep.mubr.f32.mxu0 0.0
      %2660 = vmatmul.mubr.f32.gmra.mrb[0].mxu0 %v2590
      %v2661 = vpop.f32.mrb[0].mxu0
      %v2662 = vadd.f32 0.0, %v2661
      %v2663 = vpop.f32.mrb[0].mxu0
      %2664 = vmatprep.mubr.f32.mxu0 0.0
      %2665 = vmatmul.mubr.f32.gmra.mrb[0].mxu0 %v2593
      %v2666 = vpop.f32.mrb[0].mxu0
      %v2667 = vadd.f32 0.0, %v2666
      %v2668 = vpop.f32.mrb[0].mxu0
      %2669 = vdwg.mxu0
      %s2670 = scalar_lea.vmem %s3, 192
      %v2671 = vld [vmem:[%s2670] sm:$0xff]
      %v2672 = vld [vmem:[%s2670 + $0x8] sm:$0xff]
      %v2673 = vld [vmem:[%s2670 + $0x10] sm:$0xff]
      %v2674 = vld [vmem:[%s2670 + $0x18] sm:$0xff]
      %v2675 = vld [vmem:[%s2670 + $0x20] sm:$0xff]
      %v2676 = vld [vmem:[%s2670 + $0x28] sm:$0xff]
      %v2677 = vld [vmem:[%s2670 + $0x30] sm:$0xff]
      %v2678 = vld [vmem:[%s2670 + $0x38] sm:$0xff]
      %v2680 = vsel %vm2065, %v2662, 0
      %v2683 = vsel %vm2065, %v2667, 0
      %2685 = vmatprep.subr.mxu0 0.0
      %2686 = vmatpush1.msra.mxu0 %v2671
      %2687 = vmatprep.subr.mxu0 0.0
      %2688 = vmatpush1.msra.mxu0 %v2672
      %2689 = vmatprep.subr.mxu0 0.0
      %2690 = vmatpush1.msra.mxu0 %v2673
      %2691 = vmatprep.subr.mxu0 0.0
      %2692 = vmatpush1.msra.mxu0 %v2674
      %2693 = vmatprep.subr.mxu0 0.0
      %2694 = vmatpush1.msra.mxu0 %v2675
      %2695 = vmatprep.subr.mxu0 0.0
      %2696 = vmatpush1.msra.mxu0 %v2676
      %2697 = vmatprep.subr.mxu0 0.0
      %2698 = vmatpush1.msra.mxu0 %v2677
      %2699 = vmatprep.subr.mxu0 0.0
      %2700 = vmatpush1.msra.mxu0 %v2678
      %2701 = vmatprep.subr.mxu0 0.0
      %2702 = vmatpush1.msra.mxu0 0.0
      %2703 = vmatprep.subr.mxu0 0.0
      %2704 = vmatpush1.msra.mxu0 0.0
      %2705 = vmatprep.subr.mxu0 0.0
      %2706 = vmatpush1.msra.mxu0 0.0
      %2707 = vmatprep.subr.mxu0 0.0
      %2708 = vmatpush1.msra.mxu0 0.0
      %2709 = vmatprep.subr.mxu0 0.0
      %2710 = vmatpush1.msra.mxu0 0.0
      %2711 = vmatprep.subr.mxu0 0.0
      %2712 = vmatpush1.msra.mxu0 0.0
      %2713 = vmatprep.subr.mxu0 0.0
      %2714 = vmatpush1.msra.mxu0 0.0
      %2715 = vmatprep.subr.mxu0 0.0
      %2716 = vmatpush1.msra.mxu0 0.0
      %2717 = vmatprep.subr.mxu0 0.0
      %2718 = vmatpush1.msra.mxu0 0.0
      %2719 = vmatprep.subr.mxu0 0.0
      %2720 = vmatpush1.msra.mxu0 0.0
      %2721 = vmatprep.subr.mxu0 0.0
      %2722 = vmatpush1.msra.mxu0 0.0
      %2723 = vmatprep.subr.mxu0 0.0
      %2724 = vmatpush1.msra.mxu0 0.0
      %2725 = vmatprep.subr.mxu0 0.0
      %2726 = vmatpush1.msra.mxu0 0.0
      %2727 = vmatprep.subr.mxu0 0.0
      %2728 = vmatpush1.msra.mxu0 0.0
      %2729 = vmatprep.subr.mxu0 0.0
      %2730 = vmatpush1.msra.mxu0 0.0
      %2731 = vmatprep.subr.mxu0 0.0
      %2732 = vmatpush1.msra.mxu0 0.0
      %2733 = vmatprep.subr.mxu0 0.0
      %2734 = vmatpush1.msra.mxu0 0.0
      %2735 = vmatprep.subr.mxu0 0.0
      %2736 = vmatpush1.msra.mxu0 0.0
      %2737 = vmatprep.subr.mxu0 0.0
      %2738 = vmatpush1.msra.mxu0 0.0
      %2739 = vmatprep.subr.mxu0 0.0
      %2740 = vmatpush1.msra.mxu0 0.0
      %2741 = vmatprep.subr.mxu0 0.0
      %2742 = vmatpush1.msra.mxu0 0.0
      %2743 = vmatprep.subr.mxu0 0.0
      %2744 = vmatpush1.msra.mxu0 0.0
      %2745 = vmatprep.subr.mxu0 0.0
      %2746 = vmatpush1.msra.mxu0 0.0
      %2747 = vmatprep.subr.mxu0 0.0
      %2748 = vmatpush1.msra.mxu0 0.0
      %2749 = vmatprep.mubr.f32.mxu0 0.0
      %2750 = vmatmul.mubr.f32.gmra.mrb[0].mxu0 %v2680
      %v2751 = vpop.f32.mrb[0].mxu0
      %v2752 = vadd.f32 0.0, %v2751
      %v2753 = vpop.f32.mrb[0].mxu0
      %2754 = vmatprep.mubr.f32.mxu0 0.0
      %2755 = vmatmul.mubr.f32.gmra.mrb[0].mxu0 %v2683
      %v2756 = vpop.f32.mrb[0].mxu0
      %v2757 = vadd.f32 0.0, %v2756
      %v2758 = vpop.f32.mrb[0].mxu0
      %2759 = vdwg.mxu0
      %v2760 = vadd.f32 %v2584, %v2752
      %v2761 = vadd.f32 %v2585, %v2757
      %s2762 = scalar_lea.vmem %s2, 64
      %v2763 = vld [vmem:[%s2762] sm:$0xff]
      %v2764 = vld [vmem:[%s2762 + $0x8] sm:$0xff]
      %v2766 = vsel %vm2065, %v2763, 0
      %v2769 = vsel %vm2065, %v2764, 0
      %2771 = vmatprep.subr.mxu0 0.0
      %2772 = vmatpush1.msra.mxu0 %v2055
      %2773 = vmatprep.subr.mxu0 0.0
      %2774 = vmatpush1.msra.mxu0 %v2056
      %2775 = vmatprep.subr.mxu0 0.0
      %2776 = vmatpush1.msra.mxu0 %v2057
      %2777 = vmatprep.subr.mxu0 0.0
      %2778 = vmatpush1.msra.mxu0 %v2058
      %2779 = vmatprep.subr.mxu0 0.0
      %2780 = vmatpush1.msra.mxu0 %v2059
      %2781 = vmatprep.subr.mxu0 0.0
      %2782 = vmatpush1.msra.mxu0 %v2060
      %2783 = vmatprep.subr.mxu0 0.0
      %2784 = vmatpush1.msra.mxu0 %v2061
      %2785 = vmatprep.subr.mxu0 0.0
      %2786 = vmatpush1.msra.mxu0 %v2062
      %2787 = vmatprep.subr.mxu0 0.0
      %2788 = vmatpush1.msra.mxu0 0.0
      %2789 = vmatprep.subr.mxu0 0.0
      %2790 = vmatpush1.msra.mxu0 0.0
      %2791 = vmatprep.subr.mxu0 0.0
      %2792 = vmatpush1.msra.mxu0 0.0
      %2793 = vmatprep.subr.mxu0 0.0
      %2794 = vmatpush1.msra.mxu0 0.0
      %2795 = vmatprep.subr.mxu0 0.0
      %2796 = vmatpush1.msra.mxu0 0.0
      %2797 = vmatprep.subr.mxu0 0.0
      %2798 = vmatpush1.msra.mxu0 0.0
      %2799 = vmatprep.subr.mxu0 0.0
      %2800 = vmatpush1.msra.mxu0 0.0
      %2801 = vmatprep.subr.mxu0 0.0
      %2802 = vmatpush1.msra.mxu0 0.0
      %2803 = vmatprep.subr.mxu0 0.0
      %2804 = vmatpush1.msra.mxu0 0.0
      %2805 = vmatprep.subr.mxu0 0.0
      %2806 = vmatpush1.msra.mxu0 0.0
      %2807 = vmatprep.subr.mxu0 0.0
      %2808 = vmatpush1.msra.mxu0 0.0
      %2809 = vmatprep.subr.mxu0 0.0
      %2810 = vmatpush1.msra.mxu0 0.0
      %2811 = vmatprep.subr.mxu0 0.0
      %2812 = vmatpush1.msra.mxu0 0.0
      %2813 = vmatprep.subr.mxu0 0.0
      %2814 = vmatpush1.msra.mxu0 0.0
      %2815 = vmatprep.subr.mxu0 0.0
      %2816 = vmatpush1.msra.mxu0 0.0
      %2817 = vmatprep.subr.mxu0 0.0
      %2818 = vmatpush1.msra.mxu0 0.0
      %2819 = vmatprep.subr.mxu0 0.0
      %2820 = vmatpush1.msra.mxu0 0.0
      %2821 = vmatprep.subr.mxu0 0.0
      %2822 = vmatpush1.msra.mxu0 0.0
      %2823 = vmatprep.subr.mxu0 0.0
      %2824 = vmatpush1.msra.mxu0 0.0
      %2825 = vmatprep.subr.mxu0 0.0
      %2826 = vmatpush1.msra.mxu0 0.0
      %2827 = vmatprep.subr.mxu0 0.0
      %2828 = vmatpush1.msra.mxu0 0.0
      %2829 = vmatprep.subr.mxu0 0.0
      %2830 = vmatpush1.msra.mxu0 0.0
      %2831 = vmatprep.subr.mxu0 0.0
      %2832 = vmatpush1.msra.mxu0 0.0
      %2833 = vmatprep.subr.mxu0 0.0
      %2834 = vmatpush1.msra.mxu0 0.0
      %2835 = vmatprep.mubr.f32.mxu0 0.0
      %2836 = vmatmul.mubr.f32.gmra.mrb[0].mxu0 %v2766
      %v2837 = vpop.f32.mrb[0].mxu0
      %v2838 = vadd.f32 0.0, %v2837
      %v2839 = vpop.f32.mrb[0].mxu0
      %2840 = vmatprep.mubr.f32.mxu0 0.0
      %2841 = vmatmul.mubr.f32.gmra.mrb[0].mxu0 %v2769
      %v2842 = vpop.f32.mrb[0].mxu0
      %v2843 = vadd.f32 0.0, %v2842
      %v2844 = vpop.f32.mrb[0].mxu0
      %2845 = vdwg.mxu0
      %s2846 = scalar_lea.vmem %s3, 256
      %v2847 = vld [vmem:[%s2846] sm:$0xff]
      %v2848 = vld [vmem:[%s2846 + $0x8] sm:$0xff]
      %v2849 = vld [vmem:[%s2846 + $0x10] sm:$0xff]
      %v2850 = vld [vmem:[%s2846 + $0x18] sm:$0xff]
      %v2851 = vld [vmem:[%s2846 + $0x20] sm:$0xff]
      %v2852 = vld [vmem:[%s2846 + $0x28] sm:$0xff]
      %v2853 = vld [vmem:[%s2846 + $0x30] sm:$0xff]
      %v2854 = vld [vmem:[%s2846 + $0x38] sm:$0xff]
      %v2856 = vsel %vm2065, %v2838, 0
      %v2859 = vsel %vm2065, %v2843, 0
      %2861 = vmatprep.subr.mxu0 0.0
      %2862 = vmatpush1.msra.mxu0 %v2847
      %2863 = vmatprep.subr.mxu0 0.0
      %2864 = vmatpush1.msra.mxu0 %v2848
      %2865 = vmatprep.subr.mxu0 0.0
      %2866 = vmatpush1.msra.mxu0 %v2849
      %2867 = vmatprep.subr.mxu0 0.0
      %2868 = vmatpush1.msra.mxu0 %v2850
      %2869 = vmatprep.subr.mxu0 0.0
      %2870 = vmatpush1.msra.mxu0 %v2851
      %2871 = vmatprep.subr.mxu0 0.0
      %2872 = vmatpush1.msra.mxu0 %v2852
      %2873 = vmatprep.subr.mxu0 0.0
      %2874 = vmatpush1.msra.mxu0 %v2853
      %2875 = vmatprep.subr.mxu0 0.0
      %2876 = vmatpush1.msra.mxu0 %v2854
      %2877 = vmatprep.subr.mxu0 0.0
      %2878 = vmatpush1.msra.mxu0 0.0
      %2879 = vmatprep.subr.mxu0 0.0
      %2880 = vmatpush1.msra.mxu0 0.0
      %2881 = vmatprep.subr.mxu0 0.0
      %2882 = vmatpush1.msra.mxu0 0.0
      %2883 = vmatprep.subr.mxu0 0.0
      %2884 = vmatpush1.msra.mxu0 0.0
      %2885 = vmatprep.subr.mxu0 0.0
      %2886 = vmatpush1.msra.mxu0 0.0
      %2887 = vmatprep.subr.mxu0 0.0
      %2888 = vmatpush1.msra.mxu0 0.0
      %2889 = vmatprep.subr.mxu0 0.0
      %2890 = vmatpush1.msra.mxu0 0.0
      %2891 = vmatprep.subr.mxu0 0.0
      %2892 = vmatpush1.msra.mxu0 0.0
      %2893 = vmatprep.subr.mxu0 0.0
      %2894 = vmatpush1.msra.mxu0 0.0
      %2895 = vmatprep.subr.mxu0 0.0
      %2896 = vmatpush1.msra.mxu0 0.0
      %2897 = vmatprep.subr.mxu0 0.0
      %2898 = vmatpush1.msra.mxu0 0.0
      %2899 = vmatprep.subr.mxu0 0.0
      %2900 = vmatpush1.msra.mxu0 0.0
      %2901 = vmatprep.subr.mxu0 0.0
      %2902 = vmatpush1.msra.mxu0 0.0
      %2903 = vmatprep.subr.mxu0 0.0
      %2904 = vmatpush1.msra.mxu0 0.0
      %2905 = vmatprep.subr.mxu0 0.0
      %2906 = vmatpush1.msra.mxu0 0.0
      %2907 = vmatprep.subr.mxu0 0.0
      %2908 = vmatpush1.msra.mxu0 0.0
      %2909 = vmatprep.subr.mxu0 0.0
      %2910 = vmatpush1.msra.mxu0 0.0
      %2911 = vmatprep.subr.mxu0 0.0
      %2912 = vmatpush1.msra.mxu0 0.0
      %2913 = vmatprep.subr.mxu0 0.0
      %2914 = vmatpush1.msra.mxu0 0.0
      %2915 = vmatprep.subr.mxu0 0.0
      %2916 = vmatpush1.msra.mxu0 0.0
      %2917 = vmatprep.subr.mxu0 0.0
      %2918 = vmatpush1.msra.mxu0 0.0
      %2919 = vmatprep.subr.mxu0 0.0
      %2920 = vmatpush1.msra.mxu0 0.0
      %2921 = vmatprep.subr.mxu0 0.0
      %2922 = vmatpush1.msra.mxu0 0.0
      %2923 = vmatprep.subr.mxu0 0.0
      %2924 = vmatpush1.msra.mxu0 0.0
      %2925 = vmatprep.mubr.f32.mxu0 0.0
      %2926 = vmatmul.mubr.f32.gmra.mrb[0].mxu0 %v2856
      %v2927 = vpop.f32.mrb[0].mxu0
      %v2928 = vadd.f32 0.0, %v2927
      %v2929 = vpop.f32.mrb[0].mxu0
      %2930 = vmatprep.mubr.f32.mxu0 0.0
      %2931 = vmatmul.mubr.f32.gmra.mrb[0].mxu0 %v2859
      %v2932 = vpop.f32.mrb[0].mxu0
      %v2933 = vadd.f32 0.0, %v2932
      %v2934 = vpop.f32.mrb[0].mxu0
      %2935 = vdwg.mxu0
      %v2936 = vadd.f32 %v2760, %v2928
      %v2937 = vadd.f32 %v2761, %v2933
      %s2938 = scalar_lea.vmem %s2, 80
      %v2939 = vld [vmem:[%s2938] sm:$0xff]
      %v2940 = vld [vmem:[%s2938 + $0x8] sm:$0xff]
      %v2942 = vsel %vm2065, %v2939, 0
      %v2945 = vsel %vm2065, %v2940, 0
      %2947 = vmatprep.subr.mxu0 0.0
      %2948 = vmatpush1.msra.mxu0 %v2055
      %2949 = vmatprep.subr.mxu0 0.0
      %2950 = vmatpush1.msra.mxu0 %v2056
      %2951 = vmatprep.subr.mxu0 0.0
      %2952 = vmatpush1.msra.mxu0 %v2057
      %2953 = vmatprep.subr.mxu0 0.0
      %2954 = vmatpush1.msra.mxu0 %v2058
      %2955 = vmatprep.subr.mxu0 0.0
      %2956 = vmatpush1.msra.mxu0 %v2059
      %2957 = vmatprep.subr.mxu0 0.0
      %2958 = vmatpush1.msra.mxu0 %v2060
      %2959 = vmatprep.subr.mxu0 0.0
      %2960 = vmatpush1.msra.mxu0 %v2061
      %2961 = vmatprep.subr.mxu0 0.0
      %2962 = vmatpush1.msra.mxu0 %v2062
      %2963 = vmatprep.subr.mxu0 0.0
      %2964 = vmatpush1.msra.mxu0 0.0
      %2965 = vmatprep.subr.mxu0 0.0
      %2966 = vmatpush1.msra.mxu0 0.0
      %2967 = vmatprep.subr.mxu0 0.0
      %2968 = vmatpush1.msra.mxu0 0.0
      %2969 = vmatprep.subr.mxu0 0.0
      %2970 = vmatpush1.msra.mxu0 0.0
      %2971 = vmatprep.subr.mxu0 0.0
      %2972 = vmatpush1.msra.mxu0 0.0
      %2973 = vmatprep.subr.mxu0 0.0
      %2974 = vmatpush1.msra.mxu0 0.0
      %2975 = vmatprep.subr.mxu0 0.0
      %2976 = vmatpush1.msra.mxu0 0.0
      %2977 = vmatprep.subr.mxu0 0.0
      %2978 = vmatpush1.msra.mxu0 0.0
      %2979 = vmatprep.subr.mxu0 0.0
      %2980 = vmatpush1.msra.mxu0 0.0
      %2981 = vmatprep.subr.mxu0 0.0
      %2982 = vmatpush1.msra.mxu0 0.0
      %2983 = vmatprep.subr.mxu0 0.0
      %2984 = vmatpush1.msra.mxu0 0.0
      %2985 = vmatprep.subr.mxu0 0.0
      %2986 = vmatpush1.msra.mxu0 0.0
      %2987 = vmatprep.subr.mxu0 0.0
      %2988 = vmatpush1.msra.mxu0 0.0
      %2989 = vmatprep.subr.mxu0 0.0
      %2990 = vmatpush1.msra.mxu0 0.0
      %2991 = vmatprep.subr.mxu0 0.0
      %2992 = vmatpush1.msra.mxu0 0.0
      %2993 = vmatprep.subr.mxu0 0.0
      %2994 = vmatpush1.msra.mxu0 0.0
      %2995 = vmatprep.subr.mxu0 0.0
      %2996 = vmatpush1.msra.mxu0 0.0
      %2997 = vmatprep.subr.mxu0 0.0
      %2998 = vmatpush1.msra.mxu0 0.0
      %2999 = vmatprep.subr.mxu0 0.0
      %3000 = vmatpush1.msra.mxu0 0.0
      %3001 = vmatprep.subr.mxu0 0.0
      %3002 = vmatpush1.msra.mxu0 0.0
      %3003 = vmatprep.subr.mxu0 0.0
      %3004 = vmatpush1.msra.mxu0 0.0
      %3005 = vmatprep.subr.mxu0 0.0
      %3006 = vmatpush1.msra.mxu0 0.0
      %3007 = vmatprep.subr.mxu0 0.0
      %3008 = vmatpush1.msra.mxu0 0.0
      %3009 = vmatprep.subr.mxu0 0.0
      %3010 = vmatpush1.msra.mxu0 0.0
      %3011 = vmatprep.mubr.f32.mxu0 0.0
      %3012 = vmatmul.mubr.f32.gmra.mrb[0].mxu0 %v2942
      %v3013 = vpop.f32.mrb[0].mxu0
      %v3014 = vadd.f32 0.0, %v3013
      %v3015 = vpop.f32.mrb[0].mxu0
      %3016 = vmatprep.mubr.f32.mxu0 0.0
      %3017 = vmatmul.mubr.f32.gmra.mrb[0].mxu0 %v2945
      %v3018 = vpop.f32.mrb[0].mxu0
      %v3019 = vadd.f32 0.0, %v3018
      %v3020 = vpop.f32.mrb[0].mxu0
      %3021 = vdwg.mxu0
      %s3022 = scalar_lea.vmem %s3, 320
      %v3023 = vld [vmem:[%s3022] sm:$0xff]
      %v3024 = vld [vmem:[%s3022 + $0x8] sm:$0xff]
      %v3025 = vld [vmem:[%s3022 + $0x10] sm:$0xff]
      %v3026 = vld [vmem:[%s3022 + $0x18] sm:$0xff]
      %v3027 = vld [vmem:[%s3022 + $0x20] sm:$0xff]
      %v3028 = vld [vmem:[%s3022 + $0x28] sm:$0xff]
      %v3029 = vld [vmem:[%s3022 + $0x30] sm:$0xff]
      %v3030 = vld [vmem:[%s3022 + $0x38] sm:$0xff]
      %v3032 = vsel %vm2065, %v3014, 0
      %v3035 = vsel %vm2065, %v3019, 0
      %3037 = vmatprep.subr.mxu0 0.0
      %3038 = vmatpush1.msra.mxu0 %v3023
      %3039 = vmatprep.subr.mxu0 0.0
      %3040 = vmatpush1.msra.mxu0 %v3024
      %3041 = vmatprep.subr.mxu0 0.0
      %3042 = vmatpush1.msra.mxu0 %v3025
      %3043 = vmatprep.subr.mxu0 0.0
      %3044 = vmatpush1.msra.mxu0 %v3026
      %3045 = vmatprep.subr.mxu0 0.0
      %3046 = vmatpush1.msra.mxu0 %v3027
      %3047 = vmatprep.subr.mxu0 0.0
      %3048 = vmatpush1.msra.mxu0 %v3028
      %3049 = vmatprep.subr.mxu0 0.0
      %3050 = vmatpush1.msra.mxu0 %v3029
      %3051 = vmatprep.subr.mxu0 0.0
      %3052 = vmatpush1.msra.mxu0 %v3030
      %3053 = vmatprep.subr.mxu0 0.0
      %3054 = vmatpush1.msra.mxu0 0.0
      %3055 = vmatprep.subr.mxu0 0.0
      %3056 = vmatpush1.msra.mxu0 0.0
      %3057 = vmatprep.subr.mxu0 0.0
      %3058 = vmatpush1.msra.mxu0 0.0
      %3059 = vmatprep.subr.mxu0 0.0
      %3060 = vmatpush1.msra.mxu0 0.0
      %3061 = vmatprep.subr.mxu0 0.0
      %3062 = vmatpush1.msra.mxu0 0.0
      %3063 = vmatprep.subr.mxu0 0.0
      %3064 = vmatpush1.msra.mxu0 0.0
      %3065 = vmatprep.subr.mxu0 0.0
      %3066 = vmatpush1.msra.mxu0 0.0
      %3067 = vmatprep.subr.mxu0 0.0
      %3068 = vmatpush1.msra.mxu0 0.0
      %3069 = vmatprep.subr.mxu0 0.0
      %3070 = vmatpush1.msra.mxu0 0.0
      %3071 = vmatprep.subr.mxu0 0.0
      %3072 = vmatpush1.msra.mxu0 0.0
      %3073 = vmatprep.subr.mxu0 0.0
      %3074 = vmatpush1.msra.mxu0 0.0
      %3075 = vmatprep.subr.mxu0 0.0
      %3076 = vmatpush1.msra.mxu0 0.0
      %3077 = vmatprep.subr.mxu0 0.0
      %3078 = vmatpush1.msra.mxu0 0.0
      %3079 = vmatprep.subr.mxu0 0.0
      %3080 = vmatpush1.msra.mxu0 0.0
      %3081 = vmatprep.subr.mxu0 0.0
      %3082 = vmatpush1.msra.mxu0 0.0
      %3083 = vmatprep.subr.mxu0 0.0
      %3084 = vmatpush1.msra.mxu0 0.0
      %3085 = vmatprep.subr.mxu0 0.0
      %3086 = vmatpush1.msra.mxu0 0.0
      %3087 = vmatprep.subr.mxu0 0.0
      %3088 = vmatpush1.msra.mxu0 0.0
      %3089 = vmatprep.subr.mxu0 0.0
      %3090 = vmatpush1.msra.mxu0 0.0
      %3091 = vmatprep.subr.mxu0 0.0
      %3092 = vmatpush1.msra.mxu0 0.0
      %3093 = vmatprep.subr.mxu0 0.0
      %3094 = vmatpush1.msra.mxu0 0.0
      %3095 = vmatprep.subr.mxu0 0.0
      %3096 = vmatpush1.msra.mxu0 0.0
      %3097 = vmatprep.subr.mxu0 0.0
      %3098 = vmatpush1.msra.mxu0 0.0
      %3099 = vmatprep.subr.mxu0 0.0
      %3100 = vmatpush1.msra.mxu0 0.0
      %3101 = vmatprep.mubr.f32.mxu0 0.0
      %3102 = vmatmul.mubr.f32.gmra.mrb[0].mxu0 %v3032
      %v3103 = vpop.f32.mrb[0].mxu0
      %v3104 = vadd.f32 0.0, %v3103
      %v3105 = vpop.f32.mrb[0].mxu0
      %3106 = vmatprep.mubr.f32.mxu0 0.0
      %3107 = vmatmul.mubr.f32.gmra.mrb[0].mxu0 %v3035
      %v3108 = vpop.f32.mrb[0].mxu0
      %v3109 = vadd.f32 0.0, %v3108
      %v3110 = vpop.f32.mrb[0].mxu0
      %3111 = vdwg.mxu0
      %v3112 = vadd.f32 %v2936, %v3104
      %v3113 = vadd.f32 %v2937, %v3109
      %s3114 = scalar_lea.vmem %s2, 96
      %v3115 = vld [vmem:[%s3114] sm:$0xff]
      %v3116 = vld [vmem:[%s3114 + $0x8] sm:$0xff]
      %v3118 = vsel %vm2065, %v3115, 0
      %v3121 = vsel %vm2065, %v3116, 0
      %3123 = vmatprep.subr.mxu0 0.0
      %3124 = vmatpush1.msra.mxu0 %v2055
      %3125 = vmatprep.subr.mxu0 0.0
      %3126 = vmatpush1.msra.mxu0 %v2056
      %3127 = vmatprep.subr.mxu0 0.0
      %3128 = vmatpush1.msra.mxu0 %v2057
      %3129 = vmatprep.subr.mxu0 0.0
      %3130 = vmatpush1.msra.mxu0 %v2058
      %3131 = vmatprep.subr.mxu0 0.0
      %3132 = vmatpush1.msra.mxu0 %v2059
      %3133 = vmatprep.subr.mxu0 0.0
      %3134 = vmatpush1.msra.mxu0 %v2060
      %3135 = vmatprep.subr.mxu0 0.0
      %3136 = vmatpush1.msra.mxu0 %v2061
      %3137 = vmatprep.subr.mxu0 0.0
      %3138 = vmatpush1.msra.mxu0 %v2062
      %3139 = vmatprep.subr.mxu0 0.0
      %3140 = vmatpush1.msra.mxu0 0.0
      %3141 = vmatprep.subr.mxu0 0.0
      %3142 = vmatpush1.msra.mxu0 0.0
      %3143 = vmatprep.subr.mxu0 0.0
      %3144 = vmatpush1.msra.mxu0 0.0
      %3145 = vmatprep.subr.mxu0 0.0
      %3146 = vmatpush1.msra.mxu0 0.0
      %3147 = vmatprep.subr.mxu0 0.0
      %3148 = vmatpush1.msra.mxu0 0.0
      %3149 = vmatprep.subr.mxu0 0.0
      %3150 = vmatpush1.msra.mxu0 0.0
      %3151 = vmatprep.subr.mxu0 0.0
      %3152 = vmatpush1.msra.mxu0 0.0
      %3153 = vmatprep.subr.mxu0 0.0
      %3154 = vmatpush1.msra.mxu0 0.0
      %3155 = vmatprep.subr.mxu0 0.0
      %3156 = vmatpush1.msra.mxu0 0.0
      %3157 = vmatprep.subr.mxu0 0.0
      %3158 = vmatpush1.msra.mxu0 0.0
      %3159 = vmatprep.subr.mxu0 0.0
      %3160 = vmatpush1.msra.mxu0 0.0
      %3161 = vmatprep.subr.mxu0 0.0
      %3162 = vmatpush1.msra.mxu0 0.0
      %3163 = vmatprep.subr.mxu0 0.0
      %3164 = vmatpush1.msra.mxu0 0.0
      %3165 = vmatprep.subr.mxu0 0.0
      %3166 = vmatpush1.msra.mxu0 0.0
      %3167 = vmatprep.subr.mxu0 0.0
      %3168 = vmatpush1.msra.mxu0 0.0
      %3169 = vmatprep.subr.mxu0 0.0
      %3170 = vmatpush1.msra.mxu0 0.0
      %3171 = vmatprep.subr.mxu0 0.0
      %3172 = vmatpush1.msra.mxu0 0.0
      %3173 = vmatprep.subr.mxu0 0.0
      %3174 = vmatpush1.msra.mxu0 0.0
      %3175 = vmatprep.subr.mxu0 0.0
      %3176 = vmatpush1.msra.mxu0 0.0
      %3177 = vmatprep.subr.mxu0 0.0
      %3178 = vmatpush1.msra.mxu0 0.0
      %3179 = vmatprep.subr.mxu0 0.0
      %3180 = vmatpush1.msra.mxu0 0.0
      %3181 = vmatprep.subr.mxu0 0.0
      %3182 = vmatpush1.msra.mxu0 0.0
      %3183 = vmatprep.subr.mxu0 0.0
      %3184 = vmatpush1.msra.mxu0 0.0
      %3185 = vmatprep.subr.mxu0 0.0
      %3186 = vmatpush1.msra.mxu0 0.0
      %3187 = vmatprep.mubr.f32.mxu0 0.0
      %3188 = vmatmul.mubr.f32.gmra.mrb[0].mxu0 %v3118
      %v3189 = vpop.f32.mrb[0].mxu0
      %v3190 = vadd.f32 0.0, %v3189
      %v3191 = vpop.f32.mrb[0].mxu0
      %3192 = vmatprep.mubr.f32.mxu0 0.0
      %3193 = vmatmul.mubr.f32.gmra.mrb[0].mxu0 %v3121
      %v3194 = vpop.f32.mrb[0].mxu0
      %v3195 = vadd.f32 0.0, %v3194
      %v3196 = vpop.f32.mrb[0].mxu0
      %3197 = vdwg.mxu0
      %s3198 = scalar_lea.vmem %s3, 384
      %v3199 = vld [vmem:[%s3198] sm:$0xff]
      %v3200 = vld [vmem:[%s3198 + $0x8] sm:$0xff]
      %v3201 = vld [vmem:[%s3198 + $0x10] sm:$0xff]
      %v3202 = vld [vmem:[%s3198 + $0x18] sm:$0xff]
      %v3203 = vld [vmem:[%s3198 + $0x20] sm:$0xff]
      %v3204 = vld [vmem:[%s3198 + $0x28] sm:$0xff]
      %v3205 = vld [vmem:[%s3198 + $0x30] sm:$0xff]
      %v3206 = vld [vmem:[%s3198 + $0x38] sm:$0xff]
      %v3208 = vsel %vm2065, %v3190, 0
      %v3211 = vsel %vm2065, %v3195, 0
      %3213 = vmatprep.subr.mxu0 0.0
      %3214 = vmatpush1.msra.mxu0 %v3199
      %3215 = vmatprep.subr.mxu0 0.0
      %3216 = vmatpush1.msra.mxu0 %v3200
      %3217 = vmatprep.subr.mxu0 0.0
      %3218 = vmatpush1.msra.mxu0 %v3201
      %3219 = vmatprep.subr.mxu0 0.0
      %3220 = vmatpush1.msra.mxu0 %v3202
      %3221 = vmatprep.subr.mxu0 0.0
      %3222 = vmatpush1.msra.mxu0 %v3203
      %3223 = vmatprep.subr.mxu0 0.0
      %3224 = vmatpush1.msra.mxu0 %v3204
      %3225 = vmatprep.subr.mxu0 0.0
      %3226 = vmatpush1.msra.mxu0 %v3205
      %3227 = vmatprep.subr.mxu0 0.0
      %3228 = vmatpush1.msra.mxu0 %v3206
      %3229 = vmatprep.subr.mxu0 0.0
      %3230 = vmatpush1.msra.mxu0 0.0
      %3231 = vmatprep.subr.mxu0 0.0
      %3232 = vmatpush1.msra.mxu0 0.0
      %3233 = vmatprep.subr.mxu0 0.0
      %3234 = vmatpush1.msra.mxu0 0.0
      %3235 = vmatprep.subr.mxu0 0.0
      %3236 = vmatpush1.msra.mxu0 0.0
      %3237 = vmatprep.subr.mxu0 0.0
      %3238 = vmatpush1.msra.mxu0 0.0
      %3239 = vmatprep.subr.mxu0 0.0
      %3240 = vmatpush1.msra.mxu0 0.0
      %3241 = vmatprep.subr.mxu0 0.0
      %3242 = vmatpush1.msra.mxu0 0.0
      %3243 = vmatprep.subr.mxu0 0.0
      %3244 = vmatpush1.msra.mxu0 0.0
      %3245 = vmatprep.subr.mxu0 0.0
      %3246 = vmatpush1.msra.mxu0 0.0
      %3247 = vmatprep.subr.mxu0 0.0
      %3248 = vmatpush1.msra.mxu0 0.0
      %3249 = vmatprep.subr.mxu0 0.0
      %3250 = vmatpush1.msra.mxu0 0.0
      %3251 = vmatprep.subr.mxu0 0.0
      %3252 = vmatpush1.msra.mxu0 0.0
      %3253 = vmatprep.subr.mxu0 0.0
      %3254 = vmatpush1.msra.mxu0 0.0
      %3255 = vmatprep.subr.mxu0 0.0
      %3256 = vmatpush1.msra.mxu0 0.0
      %3257 = vmatprep.subr.mxu0 0.0
      %3258 = vmatpush1.msra.mxu0 0.0
      %3259 = vmatprep.subr.mxu0 0.0
      %3260 = vmatpush1.msra.mxu0 0.0
      %3261 = vmatprep.subr.mxu0 0.0
      %3262 = vmatpush1.msra.mxu0 0.0
      %3263 = vmatprep.subr.mxu0 0.0
      %3264 = vmatpush1.msra.mxu0 0.0
      %3265 = vmatprep.subr.mxu0 0.0
      %3266 = vmatpush1.msra.mxu0 0.0
      %3267 = vmatprep.subr.mxu0 0.0
      %3268 = vmatpush1.msra.mxu0 0.0
      %3269 = vmatprep.subr.mxu0 0.0
      %3270 = vmatpush1.msra.mxu0 0.0
      %3271 = vmatprep.subr.mxu0 0.0
      %3272 = vmatpush1.msra.mxu0 0.0
      %3273 = vmatprep.subr.mxu0 0.0
      %3274 = vmatpush1.msra.mxu0 0.0
      %3275 = vmatprep.subr.mxu0 0.0
      %3276 = vmatpush1.msra.mxu0 0.0
      %3277 = vmatprep.mubr.f32.mxu0 0.0
      %3278 = vmatmul.mubr.f32.gmra.mrb[0].mxu0 %v3208
      %v3279 = vpop.f32.mrb[0].mxu0
      %v3280 = vadd.f32 0.0, %v3279
      %v3281 = vpop.f32.mrb[0].mxu0
      %3282 = vmatprep.mubr.f32.mxu0 0.0
      %3283 = vmatmul.mubr.f32.gmra.mrb[0].mxu0 %v3211
      %v3284 = vpop.f32.mrb[0].mxu0
      %v3285 = vadd.f32 0.0, %v3284
      %v3286 = vpop.f32.mrb[0].mxu0
      %3287 = vdwg.mxu0
      %v3288 = vadd.f32 %v3112, %v3280
      %v3289 = vadd.f32 %v3113, %v3285
      %s3290 = scalar_lea.vmem %s2, 112
      %v3291 = vld [vmem:[%s3290] sm:$0xff]
      %v3292 = vld [vmem:[%s3290 + $0x8] sm:$0xff]
      %v3294 = vsel %vm2065, %v3291, 0
      %v3297 = vsel %vm2065, %v3292, 0
      %3299 = vmatprep.subr.mxu0 0.0
      %3300 = vmatpush1.msra.mxu0 %v2055
      %3301 = vmatprep.subr.mxu0 0.0
      %3302 = vmatpush1.msra.mxu0 %v2056
      %3303 = vmatprep.subr.mxu0 0.0
      %3304 = vmatpush1.msra.mxu0 %v2057
      %3305 = vmatprep.subr.mxu0 0.0
      %3306 = vmatpush1.msra.mxu0 %v2058
      %3307 = vmatprep.subr.mxu0 0.0
      %3308 = vmatpush1.msra.mxu0 %v2059
      %3309 = vmatprep.subr.mxu0 0.0
      %3310 = vmatpush1.msra.mxu0 %v2060
      %3311 = vmatprep.subr.mxu0 0.0
      %3312 = vmatpush1.msra.mxu0 %v2061
      %3313 = vmatprep.subr.mxu0 0.0
      %3314 = vmatpush1.msra.mxu0 %v2062
      %3315 = vmatprep.subr.mxu0 0.0
      %3316 = vmatpush1.msra.mxu0 0.0
      %3317 = vmatprep.subr.mxu0 0.0
      %3318 = vmatpush1.msra.mxu0 0.0
      %3319 = vmatprep.subr.mxu0 0.0
      %3320 = vmatpush1.msra.mxu0 0.0
      %3321 = vmatprep.subr.mxu0 0.0
      %3322 = vmatpush1.msra.mxu0 0.0
      %3323 = vmatprep.subr.mxu0 0.0
      %3324 = vmatpush1.msra.mxu0 0.0
      %3325 = vmatprep.subr.mxu0 0.0
      %3326 = vmatpush1.msra.mxu0 0.0
      %3327 = vmatprep.subr.mxu0 0.0
      %3328 = vmatpush1.msra.mxu0 0.0
      %3329 = vmatprep.subr.mxu0 0.0
      %3330 = vmatpush1.msra.mxu0 0.0
      %3331 = vmatprep.subr.mxu0 0.0
      %3332 = vmatpush1.msra.mxu0 0.0
      %3333 = vmatprep.subr.mxu0 0.0
      %3334 = vmatpush1.msra.mxu0 0.0
      %3335 = vmatprep.subr.mxu0 0.0
      %3336 = vmatpush1.msra.mxu0 0.0
      %3337 = vmatprep.subr.mxu0 0.0
      %3338 = vmatpush1.msra.mxu0 0.0
      %3339 = vmatprep.subr.mxu0 0.0
      %3340 = vmatpush1.msra.mxu0 0.0
      %3341 = vmatprep.subr.mxu0 0.0
      %3342 = vmatpush1.msra.mxu0 0.0
      %3343 = vmatprep.subr.mxu0 0.0
      %3344 = vmatpush1.msra.mxu0 0.0
      %3345 = vmatprep.subr.mxu0 0.0
      %3346 = vmatpush1.msra.mxu0 0.0
      %3347 = vmatprep.subr.mxu0 0.0
      %3348 = vmatpush1.msra.mxu0 0.0
      %3349 = vmatprep.subr.mxu0 0.0
      %3350 = vmatpush1.msra.mxu0 0.0
      %3351 = vmatprep.subr.mxu0 0.0
      %3352 = vmatpush1.msra.mxu0 0.0
      %3353 = vmatprep.subr.mxu0 0.0
      %3354 = vmatpush1.msra.mxu0 0.0
      %3355 = vmatprep.subr.mxu0 0.0
      %3356 = vmatpush1.msra.mxu0 0.0
      %3357 = vmatprep.subr.mxu0 0.0
      %3358 = vmatpush1.msra.mxu0 0.0
      %3359 = vmatprep.subr.mxu0 0.0
      %3360 = vmatpush1.msra.mxu0 0.0
      %3361 = vmatprep.subr.mxu0 0.0
      %3362 = vmatpush1.msra.mxu0 0.0
      %3363 = vmatprep.mubr.f32.mxu0 0.0
      %3364 = vmatmul.mubr.f32.gmra.mrb[0].mxu0 %v3294
      %v3365 = vpop.f32.mrb[0].mxu0
      %v3366 = vadd.f32 0.0, %v3365
      %v3367 = vpop.f32.mrb[0].mxu0
      %3368 = vmatprep.mubr.f32.mxu0 0.0
      %3369 = vmatmul.mubr.f32.gmra.mrb[0].mxu0 %v3297
      %v3370 = vpop.f32.mrb[0].mxu0
      %v3371 = vadd.f32 0.0, %v3370
      %v3372 = vpop.f32.mrb[0].mxu0
      %3373 = vdwg.mxu0
      %s3374 = scalar_lea.vmem %s3, 448
      %v3375 = vld [vmem:[%s3374] sm:$0xff]
      %v3376 = vld [vmem:[%s3374 + $0x8] sm:$0xff]
      %v3377 = vld [vmem:[%s3374 + $0x10] sm:$0xff]
      %v3378 = vld [vmem:[%s3374 + $0x18] sm:$0xff]
      %v3379 = vld [vmem:[%s3374 + $0x20] sm:$0xff]
      %v3380 = vld [vmem:[%s3374 + $0x28] sm:$0xff]
      %v3381 = vld [vmem:[%s3374 + $0x30] sm:$0xff]
      %v3382 = vld [vmem:[%s3374 + $0x38] sm:$0xff]
      %v3384 = vsel %vm2065, %v3366, 0
      %v3387 = vsel %vm2065, %v3371, 0
      %3389 = vmatprep.subr.mxu0 0.0
      %3390 = vmatpush1.msra.mxu0 %v3375
      %3391 = vmatprep.subr.mxu0 0.0
      %3392 = vmatpush1.msra.mxu0 %v3376
      %3393 = vmatprep.subr.mxu0 0.0
      %3394 = vmatpush1.msra.mxu0 %v3377
      %3395 = vmatprep.subr.mxu0 0.0
      %3396 = vmatpush1.msra.mxu0 %v3378
      %3397 = vmatprep.subr.mxu0 0.0
      %3398 = vmatpush1.msra.mxu0 %v3379
      %3399 = vmatprep.subr.mxu0 0.0
      %3400 = vmatpush1.msra.mxu0 %v3380
      %3401 = vmatprep.subr.mxu0 0.0
      %3402 = vmatpush1.msra.mxu0 %v3381
      %3403 = vmatprep.subr.mxu0 0.0
      %3404 = vmatpush1.msra.mxu0 %v3382
      %3405 = vmatprep.subr.mxu0 0.0
      %3406 = vmatpush1.msra.mxu0 0.0
      %3407 = vmatprep.subr.mxu0 0.0
      %3408 = vmatpush1.msra.mxu0 0.0
      %3409 = vmatprep.subr.mxu0 0.0
      %3410 = vmatpush1.msra.mxu0 0.0
      %3411 = vmatprep.subr.mxu0 0.0
      %3412 = vmatpush1.msra.mxu0 0.0
      %3413 = vmatprep.subr.mxu0 0.0
      %3414 = vmatpush1.msra.mxu0 0.0
      %3415 = vmatprep.subr.mxu0 0.0
      %3416 = vmatpush1.msra.mxu0 0.0
      %3417 = vmatprep.subr.mxu0 0.0
      %3418 = vmatpush1.msra.mxu0 0.0
      %3419 = vmatprep.subr.mxu0 0.0
      %3420 = vmatpush1.msra.mxu0 0.0
      %3421 = vmatprep.subr.mxu0 0.0
      %3422 = vmatpush1.msra.mxu0 0.0
      %3423 = vmatprep.subr.mxu0 0.0
      %3424 = vmatpush1.msra.mxu0 0.0
      %3425 = vmatprep.subr.mxu0 0.0
      %3426 = vmatpush1.msra.mxu0 0.0
      %3427 = vmatprep.subr.mxu0 0.0
      %3428 = vmatpush1.msra.mxu0 0.0
      %3429 = vmatprep.subr.mxu0 0.0
      %3430 = vmatpush1.msra.mxu0 0.0
      %3431 = vmatprep.subr.mxu0 0.0
      %3432 = vmatpush1.msra.mxu0 0.0
      %3433 = vmatprep.subr.mxu0 0.0
      %3434 = vmatpush1.msra.mxu0 0.0
      %3435 = vmatprep.subr.mxu0 0.0
      %3436 = vmatpush1.msra.mxu0 0.0
      %3437 = vmatprep.subr.mxu0 0.0
      %3438 = vmatpush1.msra.mxu0 0.0
      %3439 = vmatprep.subr.mxu0 0.0
      %3440 = vmatpush1.msra.mxu0 0.0
      %3441 = vmatprep.subr.mxu0 0.0
      %3442 = vmatpush1.msra.mxu0 0.0
      %3443 = vmatprep.subr.mxu0 0.0
      %3444 = vmatpush1.msra.mxu0 0.0
      %3445 = vmatprep.subr.mxu0 0.0
      %3446 = vmatpush1.msra.mxu0 0.0
      %3447 = vmatprep.subr.mxu0 0.0
      %3448 = vmatpush1.msra.mxu0 0.0
      %3449 = vmatprep.subr.mxu0 0.0
      %3450 = vmatpush1.msra.mxu0 0.0
      %3451 = vmatprep.subr.mxu0 0.0
      %3452 = vmatpush1.msra.mxu0 0.0
      %3453 = vmatprep.mubr.f32.mxu0 0.0
      %3454 = vmatmul.mubr.f32.gmra.mrb[0].mxu0 %v3384
      %v3455 = vpop.f32.mrb[0].mxu0
      %v3456 = vadd.f32 0.0, %v3455
      %v3457 = vpop.f32.mrb[0].mxu0
      %3458 = vmatprep.mubr.f32.mxu0 0.0
      %3459 = vmatmul.mubr.f32.gmra.mrb[0].mxu0 %v3387
      %v3460 = vpop.f32.mrb[0].mxu0
      %v3461 = vadd.f32 0.0, %v3460
      %v3462 = vpop.f32.mrb[0].mxu0
      %3463 = vdwg.mxu0
      %v3464 = vadd.f32 %v3288, %v3456
      %v3465 = vadd.f32 %v3289, %v3461
      %s3466 = scalar_lea.vmem %s2, 128
      %v3467 = vld [vmem:[%s3466] sm:$0xff]
      %v3468 = vld [vmem:[%s3466 + $0x8] sm:$0xff]
      %v3470 = vsel %vm2065, %v3467, 0
      %v3473 = vsel %vm2065, %v3468, 0
      %3475 = vmatprep.subr.mxu0 0.0
      %3476 = vmatpush1.msra.mxu0 %v2055
      %3477 = vmatprep.subr.mxu0 0.0
      %3478 = vmatpush1.msra.mxu0 %v2056
      %3479 = vmatprep.subr.mxu0 0.0
      %3480 = vmatpush1.msra.mxu0 %v2057
      %3481 = vmatprep.subr.mxu0 0.0
      %3482 = vmatpush1.msra.mxu0 %v2058
      %3483 = vmatprep.subr.mxu0 0.0
      %3484 = vmatpush1.msra.mxu0 %v2059
      %3485 = vmatprep.subr.mxu0 0.0
      %3486 = vmatpush1.msra.mxu0 %v2060
      %3487 = vmatprep.subr.mxu0 0.0
      %3488 = vmatpush1.msra.mxu0 %v2061
      %3489 = vmatprep.subr.mxu0 0.0
      %3490 = vmatpush1.msra.mxu0 %v2062
      %3491 = vmatprep.subr.mxu0 0.0
      %3492 = vmatpush1.msra.mxu0 0.0
      %3493 = vmatprep.subr.mxu0 0.0
      %3494 = vmatpush1.msra.mxu0 0.0
      %3495 = vmatprep.subr.mxu0 0.0
      %3496 = vmatpush1.msra.mxu0 0.0
      %3497 = vmatprep.subr.mxu0 0.0
      %3498 = vmatpush1.msra.mxu0 0.0
      %3499 = vmatprep.subr.mxu0 0.0
      %3500 = vmatpush1.msra.mxu0 0.0
      %3501 = vmatprep.subr.mxu0 0.0
      %3502 = vmatpush1.msra.mxu0 0.0
      %3503 = vmatprep.subr.mxu0 0.0
      %3504 = vmatpush1.msra.mxu0 0.0
      %3505 = vmatprep.subr.mxu0 0.0
      %3506 = vmatpush1.msra.mxu0 0.0
      %3507 = vmatprep.subr.mxu0 0.0
      %3508 = vmatpush1.msra.mxu0 0.0
      %3509 = vmatprep.subr.mxu0 0.0
      %3510 = vmatpush1.msra.mxu0 0.0
      %3511 = vmatprep.subr.mxu0 0.0
      %3512 = vmatpush1.msra.mxu0 0.0
      %3513 = vmatprep.subr.mxu0 0.0
      %3514 = vmatpush1.msra.mxu0 0.0
      %3515 = vmatprep.subr.mxu0 0.0
      %3516 = vmatpush1.msra.mxu0 0.0
      %3517 = vmatprep.subr.mxu0 0.0
      %3518 = vmatpush1.msra.mxu0 0.0
      %3519 = vmatprep.subr.mxu0 0.0
      %3520 = vmatpush1.msra.mxu0 0.0
      %3521 = vmatprep.subr.mxu0 0.0
      %3522 = vmatpush1.msra.mxu0 0.0
      %3523 = vmatprep.subr.mxu0 0.0
      %3524 = vmatpush1.msra.mxu0 0.0
      %3525 = vmatprep.subr.mxu0 0.0
      %3526 = vmatpush1.msra.mxu0 0.0
      %3527 = vmatprep.subr.mxu0 0.0
      %3528 = vmatpush1.msra.mxu0 0.0
      %3529 = vmatprep.subr.mxu0 0.0
      %3530 = vmatpush1.msra.mxu0 0.0
      %3531 = vmatprep.subr.mxu0 0.0
      %3532 = vmatpush1.msra.mxu0 0.0
      %3533 = vmatprep.subr.mxu0 0.0
      %3534 = vmatpush1.msra.mxu0 0.0
      %3535 = vmatprep.subr.mxu0 0.0
      %3536 = vmatpush1.msra.mxu0 0.0
      %3537 = vmatprep.subr.mxu0 0.0
      %3538 = vmatpush1.msra.mxu0 0.0
      %3539 = vmatprep.mubr.f32.mxu0 0.0
      %3540 = vmatmul.mubr.f32.gmra.mrb[0].mxu0 %v3470
      %v3541 = vpop.f32.mrb[0].mxu0
      %v3542 = vadd.f32 0.0, %v3541
      %v3543 = vpop.f32.mrb[0].mxu0
      %3544 = vmatprep.mubr.f32.mxu0 0.0
      %3545 = vmatmul.mubr.f32.gmra.mrb[0].mxu0 %v3473
      %v3546 = vpop.f32.mrb[0].mxu0
      %v3547 = vadd.f32 0.0, %v3546
      %v3548 = vpop.f32.mrb[0].mxu0
      %3549 = vdwg.mxu0
      %s3550 = scalar_lea.vmem %s3, 512
      %v3551 = vld [vmem:[%s3550] sm:$0xff]
      %v3552 = vld [vmem:[%s3550 + $0x8] sm:$0xff]
      %v3553 = vld [vmem:[%s3550 + $0x10] sm:$0xff]
      %v3554 = vld [vmem:[%s3550 + $0x18] sm:$0xff]
      %v3555 = vld [vmem:[%s3550 + $0x20] sm:$0xff]
      %v3556 = vld [vmem:[%s3550 + $0x28] sm:$0xff]
      %v3557 = vld [vmem:[%s3550 + $0x30] sm:$0xff]
      %v3558 = vld [vmem:[%s3550 + $0x38] sm:$0xff]
      %v3560 = vsel %vm2065, %v3542, 0
      %v3563 = vsel %vm2065, %v3547, 0
      %3565 = vmatprep.subr.mxu0 0.0
      %3566 = vmatpush1.msra.mxu0 %v3551
      %3567 = vmatprep.subr.mxu0 0.0
      %3568 = vmatpush1.msra.mxu0 %v3552
      %3569 = vmatprep.subr.mxu0 0.0
      %3570 = vmatpush1.msra.mxu0 %v3553
      %3571 = vmatprep.subr.mxu0 0.0
      %3572 = vmatpush1.msra.mxu0 %v3554
      %3573 = vmatprep.subr.mxu0 0.0
      %3574 = vmatpush1.msra.mxu0 %v3555
      %3575 = vmatprep.subr.mxu0 0.0
      %3576 = vmatpush1.msra.mxu0 %v3556
      %3577 = vmatprep.subr.mxu0 0.0
      %3578 = vmatpush1.msra.mxu0 %v3557
      %3579 = vmatprep.subr.mxu0 0.0
      %3580 = vmatpush1.msra.mxu0 %v3558
      %3581 = vmatprep.subr.mxu0 0.0
      %3582 = vmatpush1.msra.mxu0 0.0
      %3583 = vmatprep.subr.mxu0 0.0
      %3584 = vmatpush1.msra.mxu0 0.0
      %3585 = vmatprep.subr.mxu0 0.0
      %3586 = vmatpush1.msra.mxu0 0.0
      %3587 = vmatprep.subr.mxu0 0.0
      %3588 = vmatpush1.msra.mxu0 0.0
      %3589 = vmatprep.subr.mxu0 0.0
      %3590 = vmatpush1.msra.mxu0 0.0
      %3591 = vmatprep.subr.mxu0 0.0
      %3592 = vmatpush1.msra.mxu0 0.0
      %3593 = vmatprep.subr.mxu0 0.0
      %3594 = vmatpush1.msra.mxu0 0.0
      %3595 = vmatprep.subr.mxu0 0.0
      %3596 = vmatpush1.msra.mxu0 0.0
      %3597 = vmatprep.subr.mxu0 0.0
      %3598 = vmatpush1.msra.mxu0 0.0
      %3599 = vmatprep.subr.mxu0 0.0
      %3600 = vmatpush1.msra.mxu0 0.0
      %3601 = vmatprep.subr.mxu0 0.0
      %3602 = vmatpush1.msra.mxu0 0.0
      %3603 = vmatprep.subr.mxu0 0.0
      %3604 = vmatpush1.msra.mxu0 0.0
      %3605 = vmatprep.subr.mxu0 0.0
      %3606 = vmatpush1.msra.mxu0 0.0
      %3607 = vmatprep.subr.mxu0 0.0
      %3608 = vmatpush1.msra.mxu0 0.0
      %3609 = vmatprep.subr.mxu0 0.0
      %3610 = vmatpush1.msra.mxu0 0.0
      %3611 = vmatprep.subr.mxu0 0.0
      %3612 = vmatpush1.msra.mxu0 0.0
      %3613 = vmatprep.subr.mxu0 0.0
      %3614 = vmatpush1.msra.mxu0 0.0
      %3615 = vmatprep.subr.mxu0 0.0
      %3616 = vmatpush1.msra.mxu0 0.0
      %3617 = vmatprep.subr.mxu0 0.0
      %3618 = vmatpush1.msra.mxu0 0.0
      %3619 = vmatprep.subr.mxu0 0.0
      %3620 = vmatpush1.msra.mxu0 0.0
      %3621 = vmatprep.subr.mxu0 0.0
      %3622 = vmatpush1.msra.mxu0 0.0
      %3623 = vmatprep.subr.mxu0 0.0
      %3624 = vmatpush1.msra.mxu0 0.0
      %3625 = vmatprep.subr.mxu0 0.0
      %3626 = vmatpush1.msra.mxu0 0.0
      %3627 = vmatprep.subr.mxu0 0.0
      %3628 = vmatpush1.msra.mxu0 0.0
      %3629 = vmatprep.mubr.f32.mxu0 0.0
      %3630 = vmatmul.mubr.f32.gmra.mrb[0].mxu0 %v3560
      %v3631 = vpop.f32.mrb[0].mxu0
      %v3632 = vadd.f32 0.0, %v3631
      %v3633 = vpop.f32.mrb[0].mxu0
      %3634 = vmatprep.mubr.f32.mxu0 0.0
      %3635 = vmatmul.mubr.f32.gmra.mrb[0].mxu0 %v3563
      %v3636 = vpop.f32.mrb[0].mxu0
      %v3637 = vadd.f32 0.0, %v3636
      %v3638 = vpop.f32.mrb[0].mxu0
      %3639 = vdwg.mxu0
      %v3640 = vadd.f32 %v3464, %v3632
      %v3641 = vadd.f32 %v3465, %v3637
      %v3642 = vld [vmem:[%s6] sm:$0x1]
      %v3644 = vlaneseq
      %v3645 = vshrl.u32 %v3644, 7
      %v3646 = vsub.s32 0, %v3645
      %v3647 = vrot.slane %v3642, %v3646
      %v3649 = vadd.f32 %v3640, %v3647
      %v3650 = vadd.f32 %v3641, %v3647
      %v3651 = vmax.f32 %v3649, 0.0
      %v3652 = vmax.f32 %v3650, 0.0
      %v3653 = vld [vmem:[%s4] sm:$0xff]
      %v3654 = vld [vmem:[%s4 + $0x8] sm:$0xff]
      %v3655 = vld [vmem:[%s7] sm:$0xff]
      %v3656 = vld [vmem:[%s7 + $0x8] sm:$0xff]
      %3658 = vset.pattern.permute.xlu0 0
      %3659 = vperm.xlu0 %3658, %v3655
      %v3660 = vpop.permute.xlu0 %3659
      %3663 = vset.pattern.permute.xlu0 0
      %3664 = vperm.xlu0 %3663, %v3656
      %v3665 = vpop.permute.xlu0 %3664
      %vm3667 = vcmask 261120
      %v3669 = vsel %vm3667, %v3653, 0
      %v3672 = vsel %vm3667, %v3654, 0
      %v3675 = vsel %vm3667, %v3651, 0
      %v3678 = vsel %vm3667, %v3652, 0
      %3680 = vmatprep.subr.mxu0 0.0
      %3681 = vmatpush1.xpose.msra.mxu0 %v3675
      %3682 = vmatprep.subr.mxu0 0.0
      %3683 = vmatpush1.xpose.msra.mxu0 %v3678
      %3684 = vmatprep.subr.mxu0 0.0
      %3685 = vmatpush1.xpose.msra.mxu0 0.0
      %3686 = vmatprep.subr.mxu0 0.0
      %3687 = vmatpush1.xpose.msra.mxu0 0.0
      %3688 = vmatprep.subr.mxu0 0.0
      %3689 = vmatpush1.xpose.msra.mxu0 0.0
      %3690 = vmatprep.subr.mxu0 0.0
      %3691 = vmatpush1.xpose.msra.mxu0 0.0
      %3692 = vmatprep.subr.mxu0 0.0
      %3693 = vmatpush1.xpose.msra.mxu0 0.0
      %3694 = vmatprep.subr.mxu0 0.0
      %3695 = vmatpush1.xpose.msra.mxu0 0.0
      %3696 = vmatprep.subr.mxu0 0.0
      %3697 = vmatpush1.xpose.msra.mxu0 0.0
      %3698 = vmatprep.subr.mxu0 0.0
      %3699 = vmatpush1.xpose.msra.mxu0 0.0
      %3700 = vmatprep.subr.mxu0 0.0
      %3701 = vmatpush1.xpose.msra.mxu0 0.0
      %3702 = vmatprep.subr.mxu0 0.0
      %3703 = vmatpush1.xpose.msra.mxu0 0.0
      %3704 = vmatprep.subr.mxu0 0.0
      %3705 = vmatpush1.xpose.msra.mxu0 0.0
      %3706 = vmatprep.subr.mxu0 0.0
      %3707 = vmatpush1.xpose.msra.mxu0 0.0
      %3708 = vmatprep.subr.mxu0 0.0
      %3709 = vmatpush1.xpose.msra.mxu0 0.0
      %3710 = vmatprep.subr.mxu0 0.0
      %3711 = vmatpush1.xpose.msra.mxu0 0.0
      %3712 = vmatprep.subr.mxu0 0.0
      %3713 = vmatpush1.xpose.msra.mxu0 0.0
      %3714 = vmatprep.subr.mxu0 0.0
      %3715 = vmatpush1.xpose.msra.mxu0 0.0
      %3716 = vmatprep.subr.mxu0 0.0
      %3717 = vmatpush1.xpose.msra.mxu0 0.0
      %3718 = vmatprep.subr.mxu0 0.0
      %3719 = vmatpush1.xpose.msra.mxu0 0.0
      %3720 = vmatprep.subr.mxu0 0.0
      %3721 = vmatpush1.xpose.msra.mxu0 0.0
      %3722 = vmatprep.subr.mxu0 0.0
      %3723 = vmatpush1.xpose.msra.mxu0 0.0
      %3724 = vmatprep.subr.mxu0 0.0
      %3725 = vmatpush1.xpose.msra.mxu0 0.0
      %3726 = vmatprep.subr.mxu0 0.0
      %3727 = vmatpush1.xpose.msra.mxu0 0.0
      %3728 = vmatprep.subr.mxu0 0.0
      %3729 = vmatpush1.xpose.msra.mxu0 0.0
      %3730 = vmatprep.subr.mxu0 0.0
      %3731 = vmatpush1.xpose.msra.mxu0 0.0
      %3732 = vmatprep.subr.mxu0 0.0
      %3733 = vmatpush1.xpose.msra.mxu0 0.0
      %3734 = vmatprep.subr.mxu0 0.0
      %3735 = vmatpush1.xpose.msra.mxu0 0.0
      %3736 = vmatprep.subr.mxu0 0.0
      %3737 = vmatpush1.xpose.msra.mxu0 0.0
      %3738 = vmatprep.subr.mxu0 0.0
      %3739 = vmatpush1.xpose.msra.mxu0 0.0
      %3740 = vmatprep.subr.mxu0 0.0
      %3741 = vmatpush1.xpose.msra.mxu0 0.0
      %3742 = vmatprep.subr.mxu0 0.0
      %3743 = vmatpush1.xpose.msra.mxu0 0.0
      %3744 = vmatprep.mubr.f32.mxu0 0.0
      %3745 = vmatmul.mubr.f32.gmra.mrb[0].mxu0 %v3669
      %v3746 = vpop.f32.mrb[0].mxu0
      %v3747 = vadd.f32 %v3660, %v3746
      %v3748 = vpop.f32.mrb[0].mxu0
      %3749 = vmatprep.mubr.f32.mxu0 0.0
      %3750 = vmatmul.mubr.f32.gmra.mrb[0].mxu0 %v3672
      %v3751 = vpop.f32.mrb[0].mxu0
      %v3752 = vadd.f32 %v3665, %v3751
      %v3753 = vpop.f32.mrb[0].mxu0
      %3754 = vdwg.mxu0
      %v3755 = vmax.f32 %v3747, 0.0
      %v3756 = vmax.f32 %v3752, 0.0
      %v3757 = vld [vmem:[%s341] sm:$0x1]
      %v3758 = vmul.f32 %v3757, 16.0
      %v3759 = vlaneseq
      %v3760 = vshrl.u32 %v3759, 7
      %v3761 = vadd.s32 %v3760, 8
      %v3762 = vcvt.s32.f32 %v3760
      %v3763 = vcvt.s32.f32 %v3761
      %v3764 = vlaneseq
      %v3765 = vand.u32 %v3764, 127
      %v3766 = vcvt.s32.f32 %v3765
      %v3768 = vlaneseq
      %v3769 = vshrl.u32 %v3768, 7
      %v3770 = vsub.s32 0, %v3769
      %v3771 = vrot.slane %v3758, %v3770
      %3772 = vset.pattern.permute.xlu0 0
      %3773 = vperm.xlu0 %3772, %v3771
      %v3774 = vpop.permute.xlu0 %3773
      %vm3776 = vcmp.ge.f32.partialorder %v3766, %v3774
      %3777 = vrot.lane.b32.xlu0 %v3758, 126
      %v3778 = vpop.permute.xlu0 %3777
      %v3780 = vadd.f32 %v3758, %v3778
      %v3782 = vlaneseq
      %v3783 = vshrl.u32 %v3782, 7
      %v3784 = vsub.s32 0, %v3783
      %v3785 = vrot.slane %v3780, %v3784
      %3786 = vset.pattern.permute.xlu0 0
      %3787 = vperm.xlu0 %3786, %v3785
      %v3788 = vpop.permute.xlu0 %3787
      %vm3790 = vcmp.lt.f32.partialorder %v3766, %v3788
      %vm3791 = vmand %vm3776, %vm3790
      %3792 = vset.pattern.permute.xlu0 1
      %3793 = vperm.xlu0 %3792, %v3771
      %v3794 = vpop.permute.xlu0 %3793
      %vm3796 = vcmp.ge.f32.partialorder %v3762, %v3794
      %vm3797 = vcmp.ge.f32.partialorder %v3763, %v3794
      %vm3798 = vmand %vm3791, %vm3796
      %vm3799 = vmand %vm3791, %vm3797
      %3800 = vset.pattern.permute.xlu0 1
      %3801 = vperm.xlu0 %3800, %v3785
      %v3802 = vpop.permute.xlu0 %3801
      %vm3804 = vcmp.lt.f32.partialorder %v3762, %v3802
      %vm3805 = vcmp.lt.f32.partialorder %v3763, %v3802
      %vm3806 = vmand %vm3798, %vm3804
      %vm3807 = vmand %vm3799, %vm3805
      %v3808 = vsel %vm3806, 1, 0
      %v3809 = vsel %vm3807, 1, 0
      %v3810 = vcvt.s32.f32 %v3808
      %v3811 = vcvt.s32.f32 %v3809
      %vm3812 = vcmask 130048
      %v3813 = vsel %vm3812, %v3810, 0.0
      %3814 = vadd.xlane.f32.xlu0 %v3813
      %v3815 = vpop.xlane.xlu0 %3814
      %v3816 = vsel %vm3812, %v3811, 0.0
      %3817 = vadd.xlane.f32.xlu0 %v3816
      %v3818 = vpop.xlane.xlu0 %3817
      %v3819 = vadd.f32 %v3815, %v3818
      %v3820 = vrot.slane %v3819, 4
      %v3821 = vadd.f32 %v3819, %v3820
      %v3822 = vrot.slane %v3821, 2
      %v3823 = vadd.f32 %v3821, %v3822
      %v3824 = vrot.slane %v3823, 1
      %v3825 = vadd.f32 %v3823, %v3824
      %v3826 = vmax.f32 %v3825, 1.0
      %v3827 = vrcp.pop %v3826
      %v3828 = vmul.f32 %v3810, %v3827
      %v3829 = vmul.f32 %v3811, %v3827
      %3830 = vst.msk [vmem:[%s346] sm:$0xff] %vm3812, %v3755
      %3831 = vst.msk [vmem:[%s346 + $0x8] sm:$0xff] %vm3812, %v3756
      %3832 = vst.msk [vmem:[%s346 + $0x10] sm:$0xff] %vm3812, %v3828
      %3833 = vst.msk [vmem:[%s346 + $0x18] sm:$0xff] %vm3812, %v3829
      %p3834 = scmp.lt.s32.totalorder %s20, 7
      %s3835 = scalar_select %p3834, %s20, 7
      %s3836 = smul.addr %s3835, 4
      %s3837 = smul.addr %s3836, 8
      %s3838 = scalar_lea.vmem %s9, %s3837
      // Predicated region
      $region57: #{yimgnet_pm_forward.1} parent=55 // pred_check
        %p3839 = pneg %p237
      $region58: #{yimgnet_pm_forward.1} parent=55 // pred_check_branch
        %3841 = sbr.rel (%p3839) target = $region60
      $region59: #{yimgnet_pm_forward.1} parent=55 // pred_region
        _
      $region60: #{yimgnet_pm_forward.1} parent=55 // pred_fallthru
        _
    $region56: #{yimgnet_pm_forward.1} parent=5 // pred_fallthru
      _
    %p3842 = scmp.le.s32.totalorder 2, %s15
    // Predicated region
    $region61: #{yimgnet_pm_forward.1} parent=5 // pred_check
      %p3843 = pneg %p3842
    $region62: #{yimgnet_pm_forward.1} parent=5 // pred_check_branch
      %3845 = sbr.rel (%p3843) target = $region64
    $region63: #{yimgnet_pm_forward.1} parent=5 // pred_region
      %s3846 = ssub.s32 %s15, 2
      // Predicated region
      $region65: #{yimgnet_pm_forward.1} parent=63 // pred_check
        %p3847 = pneg %p243
      $region66: #{yimgnet_pm_forward.1} parent=63 // pred_check_branch
        %3849 = sbr.rel (%p3847) target = $region68
      $region67: #{yimgnet_pm_forward.1} parent=63 // pred_region
        %p3850 = scmp.lt.s32.totalorder %s21, 7
        %s3851 = scalar_select %p3850, %s21, 7
        %s3852 = smul.addr %s3851, 4
        %s3853 = smul.addr %s3852, 8
        %s3854 = scalar_lea.vmem %s9, %s3853
      $region68: #{yimgnet_pm_forward.1} parent=63 // pred_fallthru
        _
    $region64: #{yimgnet_pm_forward.1} parent=5 // pred_fallthru
      _
  $region6: #{yimgnet_pm_forward.1} parent=0 // loop_footer
    %s19 = sadd.s32 1, %s15
  $region7: #{yimgnet_pm_forward.1} parent=0 // loop_footer_branch
    %14 = sbr.rel target = $region3
  $region8: #{yimgnet_pm_forward.1} parent=0 // loop_exit
    _

</llo_original>
